<compile_context>
chip_gen: v7x
topology: tpu7x:2x2x1
jax: 0.10.0
libtpu: 0.0.40
codegen_flags: <defaults>
</compile_context>

<pallas_src>
import functools

import jax
import jax.numpy as jnp
import numpy as np
from jax.experimental import pallas as pl
from jax.experimental.pallas import tpu as pltpu

EPS = 1e-5

_VMEM_LIMIT = None


def _vmem_limit_bytes():
    """Generation-aware scoped-VMEM budget (v7x: 64 MiB phys, v5e/v6e: 128)."""
    global _VMEM_LIMIT
    if _VMEM_LIMIT is None:
        try:
            cap = int(pltpu.get_tpu_info().vmem_capacity_bytes)
        except Exception:
            cap = 64 * 1024 * 1024
        _VMEM_LIMIT = int(min(cap * 3 // 4, 100 * 1024 * 1024))
    return _VMEM_LIMIT


def _round_up(x, m):
    return (x + m - 1) // m * m


def _largest_divisor_leq(n, cap):
    """Largest divisor of n that is <= cap (>= 1)."""
    cap = max(1, min(n, cap))
    for d in range(cap, 0, -1):
        if n % d == 0:
            return d
    return 1


def _pick_m_tile(m, cap=1024):
    """Row tile for the elementwise pass: divides m and is sublane-friendly."""
    if m <= cap:
        return m
    for d in range(cap, 7, -1):
        if m % d == 0 and d % 8 == 0:
            return d
    return m


# ---------------------------------------------------------------------------
# Pass 1: 3x3 conv from a halo'd row window (9 shifted MXU dots) + per-tile
#         partial per-channel sum / sum-of-squares (for BatchNorm training
#         statistics).  Every grid step writes distinct output blocks, so the
#         whole grid is "parallel" (v7x megacore-friendly).
# ---------------------------------------------------------------------------
def conv_stats_kernel(x_ref, w_ref, y_ref, s_ref, ss_ref, *, TH, W, Cpi, Cpo):
    # x_ref : (1, H+2, W+2, Cpi) bf16  -- whole padded image of this batch elem
    # w_ref : (9, Cpi, Cpo)      bf16  -- tap-major weights
    # y_ref : (1, TH, W, Cpo)    bf16  -- raw conv tile
    # s_ref / ss_ref : (1, 1, 8, Cpo) f32 -- per-tile partial stats (row 0 used)
    h = pl.program_id(1)
    box = x_ref[0, pl.ds(h * TH, TH + 2), :, :]          # (TH+2, W+2, Cpi)

    acc = jnp.zeros((TH * W, Cpo), jnp.float32)
    for t in range(9):
        i, j = divmod(t, 3)
        tap = box[i:i + TH, j:j + W, :].reshape(TH * W, Cpi)
        acc = acc + jnp.dot(tap, w_ref[t], preferred_element_type=jnp.float32)

    y_ref[...] = acc.reshape(1, TH, W, Cpo).astype(y_ref.dtype)
    s = jnp.sum(acc, axis=0)                              # (Cpo,)
    ss = jnp.sum(acc * acc, axis=0)
    s_ref[...] = jnp.broadcast_to(s, (1, 1, 8, Cpo))
    ss_ref[...] = jnp.broadcast_to(ss, (1, 1, 8, Cpo))


# ---------------------------------------------------------------------------
# Pass 2: apply precomputed BN scale/shift, optional ReLU / fused residual add.
# ---------------------------------------------------------------------------
def bn_apply_kernel(y_ref, scale_ref, shift_ref, o_ref, *, relu):
    z = y_ref[...].astype(jnp.float32) * scale_ref[...] + shift_ref[...]
    if relu:
        z = jnp.maximum(z, 0.0)
    o_ref[...] = z.astype(o_ref.dtype)


def bn_apply_residual_kernel(y_ref, scale_ref, shift_ref, res_ref, o_ref):
    z = y_ref[...].astype(jnp.float32) * scale_ref[...] + shift_ref[...]
    o_ref[...] = (res_ref[...] + z).astype(o_ref.dtype)


# ---------------------------------------------------------------------------
# One Conv3x3(reflect-padded input) + BatchNorm2d(train) [+ ReLU] [+ residual].
# ---------------------------------------------------------------------------
def conv_bn_layer(x_pad, weight, gamma, beta, *, relu, residual=None,
                  out_dtype=jnp.float32):
    """x_pad: (N, H+2, W+2, Cpi) bf16, channels already zero-padded to Cpi.

    Returns (N, H, W, Cpo) in `out_dtype` (Cpo = padded output channels).
    """
    N, Hp, Wp, Cpi = x_pad.shape
    H, W = Hp - 2, Wp - 2
    Cout, Cin = weight.shape[0], weight.shape[1]
    Cpo = _round_up(max(Cout, 128), 128)
    M = N * H * W
    vmem = _vmem_limit_bytes()

    # Tap-major weights: (Cout, Cin, 3, 3) -> (3, 3, Cin, Cout) -> (9, Cpi, Cpo)
    w = jnp.transpose(weight, (2, 3, 1, 0)).reshape(9, Cin, Cout)
    w = jnp.pad(w, ((0, 0), (0, Cpi - Cin), (0, Cpo - Cout))).astype(jnp.bfloat16)

    # Row tiling of the output: TH rows per step (TH divides H exactly, so BN
    # statistics only ever see real rows).
    TH = _largest_divisor_leq(H, max(1, 512 // W))
    HT = H // TH
    grid = (N, HT)

    kern = functools.partial(conv_stats_kernel, TH=TH, W=W, Cpi=Cpi, Cpo=Cpo)
    y, psum, pssq = pl.pallas_call(
        kern,
        grid=grid,
        in_specs=[
            # Whole padded image of batch element n: constant across the h axis,
            # so Pallas fetches it once per n and double-buffers across n.
            pl.BlockSpec((1, Hp, Wp, Cpi), lambda n, h: (n, 0, 0, 0)),
            pl.BlockSpec((9, Cpi, Cpo), lambda n, h: (0, 0, 0)),
        ],
        out_specs=[
            pl.BlockSpec((1, TH, W, Cpo), lambda n, h: (n, h, 0, 0)),
            pl.BlockSpec((1, 1, 8, Cpo), lambda n, h: (n, h, 0, 0)),
            pl.BlockSpec((1, 1, 8, Cpo), lambda n, h: (n, h, 0, 0)),
        ],
        out_shape=(
            jax.ShapeDtypeStruct((N, H, W, Cpo), jnp.bfloat16),
            jax.ShapeDtypeStruct((N, HT, 8, Cpo), jnp.float32),
            jax.ShapeDtypeStruct((N, HT, 8, Cpo), jnp.float32),
        ),
        compiler_params=pltpu.CompilerParams(
            dimension_semantics=("parallel", "parallel"),
            vmem_limit_bytes=vmem),
        cost_estimate=pl.CostEstimate(
            flops=2 * M * Cpi * Cpo * 9,
            transcendentals=0,
            bytes_accessed=2 * (N * Hp * Wp * Cpi + 9 * Cpi * Cpo + M * Cpo)
            + 4 * 2 * N * HT * 8 * Cpo),
    )(x_pad, w)

    # ---- finalize BN statistics (tiny per-channel math, plain JAX) ----------
    # NOTE: E[y^2]-E[y]^2 in f32 is cancellation-prone for huge M / large means;
    # fine at these scales (clamped at 0 for safety).
    ch_sum = psum[:, :, 0, :].sum(axis=(0, 1))
    ch_ssq = pssq[:, :, 0, :].sum(axis=(0, 1))
    mean = ch_sum / M                                    # divide by TRUE M
    var = jnp.maximum(ch_ssq / M - mean * mean, 0.0)     # biased variance
    gamma_p = jnp.pad(gamma, (0, Cpo - Cout))
    beta_p = jnp.pad(beta, (0, Cpo - Cout))
    scale = (gamma_p * jax.lax.rsqrt(var + EPS)).reshape(1, Cpo)
    shift = (beta_p - mean.reshape(-1) * scale.reshape(-1)).reshape(1, Cpo)

    # ---- pass 2: normalize (+ ReLU / residual), large lane-dense tiles ------
    y2d = y.reshape(M, Cpo)
    TM2 = _pick_m_tile(M, 1024)
    grid2 = (pl.cdiv(M, TM2),)
    tile = pl.BlockSpec((TM2, Cpo), lambda i: (i, 0))
    vec = pl.BlockSpec((1, Cpo), lambda i: (0, 0))

    if residual is None:
        alias = {0: 0} if jnp.dtype(out_dtype) == y2d.dtype else {}
        out = pl.pallas_call(
            functools.partial(bn_apply_kernel, relu=relu),
            grid=grid2,
            in_specs=[tile, vec, vec],
            out_specs=tile,
            out_shape=jax.ShapeDtypeStruct((M, Cpo), out_dtype),
            input_output_aliases=alias,
            compiler_params=pltpu.CompilerParams(
                dimension_semantics=("parallel",), vmem_limit_bytes=vmem),
        )(y2d, scale, shift)
    else:
        res2d = residual.reshape(M, Cpo).astype(out_dtype)
        out = pl.pallas_call(
            bn_apply_residual_kernel,
            grid=grid2,
            in_specs=[tile, vec, vec, tile],
            out_specs=tile,
            out_shape=jax.ShapeDtypeStruct((M, Cpo), out_dtype),
            input_output_aliases={3: 0},                 # residual updated in place
            compiler_params=pltpu.CompilerParams(
                dimension_semantics=("parallel",), vmem_limit_bytes=vmem),
        )(y2d, scale, shift, res2d)

    return out.reshape(N, H, W, Cpo)


def resnet_block_forward(x, w1, gamma1, beta1, w2, gamma2, beta2):
    """out = x + BN2(Conv2(pad(ReLU(BN1(Conv1(pad(x))))))), NCHW in / NCHW out."""
    N, C, H, W = x.shape
    Cp = _round_up(max(C, 128), 128)

    # Single layout conversion at the block boundary: NCHW -> NHWC, pad channels.
    x_nhwc = jnp.pad(jnp.transpose(x, (0, 2, 3, 1)),
                     ((0, 0), (0, 0), (0, 0), (0, Cp - C)))          # f32
    x_pad = jnp.pad(x_nhwc, ((0, 0), (1, 1), (1, 1), (0, 0)),
                    mode="reflect").astype(jnp.bfloat16)

    # layer 1: conv + BN + ReLU  (kept bf16/NHWC for the next layer's matmul)
    h = conv_bn_layer(x_pad, w1, gamma1, beta1, relu=True,
                      out_dtype=jnp.bfloat16)                        # (N,H,W,Cp)
    h_pad = jnp.pad(h, ((0, 0), (1, 1), (1, 1), (0, 0)), mode="reflect")

    # layer 2: conv + BN, residual add fused into the apply kernel (f32 output)
    out_nhwc = conv_bn_layer(h_pad, w2, gamma2, beta2, relu=False,
                             residual=x_nhwc, out_dtype=jnp.float32)

    return jnp.transpose(out_nhwc[..., :C], (0, 3, 1, 2))            # back to NCHW


# ---------------------------------------------------------------------------
# Pure-JAX reference (mirrors the PyTorch module semantics, f32 throughout)
# ---------------------------------------------------------------------------
def _bn_train(y, gamma, beta):
    mean = y.mean(axis=(0, 2, 3), keepdims=True)
    var = ((y - mean) ** 2).mean(axis=(0, 2, 3), keepdims=True)      # biased var
    yn = (y - mean) / jnp.sqrt(var + EPS)
    return yn * gamma[None, :, None, None] + beta[None, :, None, None]


def reference_forward(x, w1, g1, b1, w2, g2, b2):
    def conv(z, w):
        zp = jnp.pad(z, ((0, 0), (0, 0), (1, 1), (1, 1)), mode="reflect")
        return jax.lax.conv_general_dilated(
            zp, w, window_strides=(1, 1), padding="VALID",
            dimension_numbers=("NCHW", "OIHW", "NCHW"),
            precision=jax.lax.Precision.HIGHEST)

    h = jnp.maximum(_bn_train(conv(x, w1), g1, b1), 0.0)
    y = _bn_train(conv(h, w2), g2, b2)
    return x + y


if __name__ == "__main__":
    key = jax.random.PRNGKey(0)
    k1, k2, k3, k4, k5 = jax.random.split(key, 5)

    N, C, H, W = 2, 4, 16, 16          # dim = 4

    x = jax.random.normal(k1, (N, C, H, W), dtype=jnp.float32)
    w1 = jax.random.normal(k2, (C, C, 3, 3), dtype=jnp.float32) * 0.1
    w2 = jax.random.normal(k3, (C, C, 3, 3), dtype=jnp.float32) * 0.1
    # BatchNorm affine params (non-trivial for the first BN, defaults for 2nd)
    g1 = 1.0 + 0.1 * jax.random.normal(k4, (C,), dtype=jnp.float32)
    b1 = 0.1 * jax.random.normal(k5, (C,), dtype=jnp.float32)
    g2 = jnp.ones((C,), dtype=jnp.float32)
    b2 = jnp.zeros((C,), dtype=jnp.float32)

    fwd = jax.jit(resnet_block_forward)
    out = fwd(x, w1, g1, b1, w2, g2, b2)
    jax.block_until_ready(out)

    ref = reference_forward(x, w1, g1, b1, w2, g2, b2)
    # Tolerance accounts for bf16 matmul operands / bf16 activation storage
    # (f32 accumulation + f32 BN statistics keep the error ~1e-3).
    np.testing.assert_allclose(np.asarray(out), np.asarray(ref),
                               atol=2e-2, rtol=2e-2)

    print("KERNEL_OK")
</pallas_src>

<mosaic_0001>
module attributes {stable_mosaic.version = 11 : i64} {
  func.func @conv_stats_kernel(%arg0: i32, %arg1: i32, %arg2: memref<1x18x18x128xbf16, #tpu.memory_space<vmem>>, %arg3: memref<9x128x128xbf16, #tpu.memory_space<vmem>>, %arg4: memref<1x16x16x128xbf16, #tpu.memory_space<vmem>>, %arg5: memref<1x1x8x128xf32, #tpu.memory_space<vmem>>, %arg6: memref<1x1x8x128xf32, #tpu.memory_space<vmem>>) attributes {dimension_semantics = [#tpu.dimension_semantics<parallel>, #tpu.dimension_semantics<parallel>], iteration_bounds = array<i64: 2, 1>, scalar_prefetch = 0 : i64, scratch_operands = 0 : i64, tpu.core_type = #tpu.core_type<tc>, window_params = [{transform_indices = @transform_0, window_bounds = array<i64: 1, 18, 18, 128>}, {pipeline_mode = #tpu.pipeline_mode<synchronous>, transform_indices = @transform_1, window_bounds = array<i64: 9, 128, 128>}, {transform_indices = @transform_2, window_bounds = array<i64: 1, 16, 16, 128>}, {transform_indices = @transform_3, window_bounds = array<i64: 1, 1, 8, 128>}, {transform_indices = @transform_4, window_bounds = array<i64: 1, 1, 8, 128>}]} {
    %c16_i32 = arith.constant 16 : i32
    %0 = arith.muli %arg1, %c16_i32 : i32
    %c0 = arith.constant 0 : index
    %1 = arith.index_cast %0 : i32 to index
    %c0_0 = arith.constant 0 : index
    %c0_1 = arith.constant 0 : index
    %2 = vector.load %arg2[%c0, %1, %c0_0, %c0_1] : memref<1x18x18x128xbf16, #tpu.memory_space<vmem>>, vector<1x18x18x128xbf16>
    %3 = vector.shape_cast %2 : vector<1x18x18x128xbf16> to vector<18x18x128xbf16>
    %cst = arith.constant 0.000000e+00 : f32
    %4 = vector.broadcast %cst : f32 to vector<256x128xf32>
    %5 = vector.extract_strided_slice %3 {offsets = [0, 0, 0], sizes = [16, 16, 128], strides = [1, 1, 1]} : vector<18x18x128xbf16> to vector<16x16x128xbf16>
    %6 = vector.shape_cast %5 : vector<16x16x128xbf16> to vector<256x128xbf16>
    %c0_2 = arith.constant 0 : index
    %c0_3 = arith.constant 0 : index
    %c0_4 = arith.constant 0 : index
    %7 = vector.load %arg3[%c0_2, %c0_3, %c0_4] : memref<9x128x128xbf16, #tpu.memory_space<vmem>>, vector<1x128x128xbf16>
    %8 = vector.shape_cast %7 : vector<1x128x128xbf16> to vector<128x128xbf16>
    %cst_5 = arith.constant dense<0.000000e+00> : vector<256x128xf32>
    %9 = tpu.matmul %6, %8, %cst_5 {dimension_numbers = #tpu.dot_dimension_numbers<[1], [0], [0], [1], [0, 0, 1, 1], [], []>} : vector<256x128xbf16>, vector<128x128xbf16>, vector<256x128xf32> -> vector<256x128xf32>
    %10 = arith.addf %4, %9 : vector<256x128xf32>
    %11 = vector.extract_strided_slice %3 {offsets = [0, 1, 0], sizes = [16, 16, 128], strides = [1, 1, 1]} : vector<18x18x128xbf16> to vector<16x16x128xbf16>
    %12 = vector.shape_cast %11 : vector<16x16x128xbf16> to vector<256x128xbf16>
    %c1 = arith.constant 1 : index
    %c0_6 = arith.constant 0 : index
    %c0_7 = arith.constant 0 : index
    %13 = vector.load %arg3[%c1, %c0_6, %c0_7] : memref<9x128x128xbf16, #tpu.memory_space<vmem>>, vector<1x128x128xbf16>
    %14 = vector.shape_cast %13 : vector<1x128x128xbf16> to vector<128x128xbf16>
    %cst_8 = arith.constant dense<0.000000e+00> : vector<256x128xf32>
    %15 = tpu.matmul %12, %14, %cst_8 {dimension_numbers = #tpu.dot_dimension_numbers<[1], [0], [0], [1], [0, 0, 1, 1], [], []>} : vector<256x128xbf16>, vector<128x128xbf16>, vector<256x128xf32> -> vector<256x128xf32>
    %16 = arith.addf %10, %15 : vector<256x128xf32>
    %17 = vector.extract_strided_slice %3 {offsets = [0, 2, 0], sizes = [16, 16, 128], strides = [1, 1, 1]} : vector<18x18x128xbf16> to vector<16x16x128xbf16>
    %18 = vector.shape_cast %17 : vector<16x16x128xbf16> to vector<256x128xbf16>
    %c2 = arith.constant 2 : index
    %c0_9 = arith.constant 0 : index
    %c0_10 = arith.constant 0 : index
    %19 = vector.load %arg3[%c2, %c0_9, %c0_10] : memref<9x128x128xbf16, #tpu.memory_space<vmem>>, vector<1x128x128xbf16>
    %20 = vector.shape_cast %19 : vector<1x128x128xbf16> to vector<128x128xbf16>
    %cst_11 = arith.constant dense<0.000000e+00> : vector<256x128xf32>
    %21 = tpu.matmul %18, %20, %cst_11 {dimension_numbers = #tpu.dot_dimension_numbers<[1], [0], [0], [1], [0, 0, 1, 1], [], []>} : vector<256x128xbf16>, vector<128x128xbf16>, vector<256x128xf32> -> vector<256x128xf32>
    %22 = arith.addf %16, %21 : vector<256x128xf32>
    %23 = vector.extract_strided_slice %3 {offsets = [1, 0, 0], sizes = [16, 16, 128], strides = [1, 1, 1]} : vector<18x18x128xbf16> to vector<16x16x128xbf16>
    %24 = vector.shape_cast %23 : vector<16x16x128xbf16> to vector<256x128xbf16>
    %c3 = arith.constant 3 : index
    %c0_12 = arith.constant 0 : index
    %c0_13 = arith.constant 0 : index
    %25 = vector.load %arg3[%c3, %c0_12, %c0_13] : memref<9x128x128xbf16, #tpu.memory_space<vmem>>, vector<1x128x128xbf16>
    %26 = vector.shape_cast %25 : vector<1x128x128xbf16> to vector<128x128xbf16>
    %cst_14 = arith.constant dense<0.000000e+00> : vector<256x128xf32>
    %27 = tpu.matmul %24, %26, %cst_14 {dimension_numbers = #tpu.dot_dimension_numbers<[1], [0], [0], [1], [0, 0, 1, 1], [], []>} : vector<256x128xbf16>, vector<128x128xbf16>, vector<256x128xf32> -> vector<256x128xf32>
    %28 = arith.addf %22, %27 : vector<256x128xf32>
    %29 = vector.extract_strided_slice %3 {offsets = [1, 1, 0], sizes = [16, 16, 128], strides = [1, 1, 1]} : vector<18x18x128xbf16> to vector<16x16x128xbf16>
    %30 = vector.shape_cast %29 : vector<16x16x128xbf16> to vector<256x128xbf16>
    %c4 = arith.constant 4 : index
    %c0_15 = arith.constant 0 : index
    %c0_16 = arith.constant 0 : index
    %31 = vector.load %arg3[%c4, %c0_15, %c0_16] : memref<9x128x128xbf16, #tpu.memory_space<vmem>>, vector<1x128x128xbf16>
    %32 = vector.shape_cast %31 : vector<1x128x128xbf16> to vector<128x128xbf16>
    %cst_17 = arith.constant dense<0.000000e+00> : vector<256x128xf32>
    %33 = tpu.matmul %30, %32, %cst_17 {dimension_numbers = #tpu.dot_dimension_numbers<[1], [0], [0], [1], [0, 0, 1, 1], [], []>} : vector<256x128xbf16>, vector<128x128xbf16>, vector<256x128xf32> -> vector<256x128xf32>
    %34 = arith.addf %28, %33 : vector<256x128xf32>
    %35 = vector.extract_strided_slice %3 {offsets = [1, 2, 0], sizes = [16, 16, 128], strides = [1, 1, 1]} : vector<18x18x128xbf16> to vector<16x16x128xbf16>
    %36 = vector.shape_cast %35 : vector<16x16x128xbf16> to vector<256x128xbf16>
    %c5 = arith.constant 5 : index
    %c0_18 = arith.constant 0 : index
    %c0_19 = arith.constant 0 : index
    %37 = vector.load %arg3[%c5, %c0_18, %c0_19] : memref<9x128x128xbf16, #tpu.memory_space<vmem>>, vector<1x128x128xbf16>
    %38 = vector.shape_cast %37 : vector<1x128x128xbf16> to vector<128x128xbf16>
    %cst_20 = arith.constant dense<0.000000e+00> : vector<256x128xf32>
    %39 = tpu.matmul %36, %38, %cst_20 {dimension_numbers = #tpu.dot_dimension_numbers<[1], [0], [0], [1], [0, 0, 1, 1], [], []>} : vector<256x128xbf16>, vector<128x128xbf16>, vector<256x128xf32> -> vector<256x128xf32>
    %40 = arith.addf %34, %39 : vector<256x128xf32>
    %41 = vector.extract_strided_slice %3 {offsets = [2, 0, 0], sizes = [16, 16, 128], strides = [1, 1, 1]} : vector<18x18x128xbf16> to vector<16x16x128xbf16>
    %42 = vector.shape_cast %41 : vector<16x16x128xbf16> to vector<256x128xbf16>
    %c6 = arith.constant 6 : index
    %c0_21 = arith.constant 0 : index
    %c0_22 = arith.constant 0 : index
    %43 = vector.load %arg3[%c6, %c0_21, %c0_22] : memref<9x128x128xbf16, #tpu.memory_space<vmem>>, vector<1x128x128xbf16>
    %44 = vector.shape_cast %43 : vector<1x128x128xbf16> to vector<128x128xbf16>
    %cst_23 = arith.constant dense<0.000000e+00> : vector<256x128xf32>
    %45 = tpu.matmul %42, %44, %cst_23 {dimension_numbers = #tpu.dot_dimension_numbers<[1], [0], [0], [1], [0, 0, 1, 1], [], []>} : vector<256x128xbf16>, vector<128x128xbf16>, vector<256x128xf32> -> vector<256x128xf32>
    %46 = arith.addf %40, %45 : vector<256x128xf32>
    %47 = vector.extract_strided_slice %3 {offsets = [2, 1, 0], sizes = [16, 16, 128], strides = [1, 1, 1]} : vector<18x18x128xbf16> to vector<16x16x128xbf16>
    %48 = vector.shape_cast %47 : vector<16x16x128xbf16> to vector<256x128xbf16>
    %c7 = arith.constant 7 : index
    %c0_24 = arith.constant 0 : index
    %c0_25 = arith.constant 0 : index
    %49 = vector.load %arg3[%c7, %c0_24, %c0_25] : memref<9x128x128xbf16, #tpu.memory_space<vmem>>, vector<1x128x128xbf16>
    %50 = vector.shape_cast %49 : vector<1x128x128xbf16> to vector<128x128xbf16>
    %cst_26 = arith.constant dense<0.000000e+00> : vector<256x128xf32>
    %51 = tpu.matmul %48, %50, %cst_26 {dimension_numbers = #tpu.dot_dimension_numbers<[1], [0], [0], [1], [0, 0, 1, 1], [], []>} : vector<256x128xbf16>, vector<128x128xbf16>, vector<256x128xf32> -> vector<256x128xf32>
    %52 = arith.addf %46, %51 : vector<256x128xf32>
    %53 = vector.extract_strided_slice %3 {offsets = [2, 2, 0], sizes = [16, 16, 128], strides = [1, 1, 1]} : vector<18x18x128xbf16> to vector<16x16x128xbf16>
    %54 = vector.shape_cast %53 : vector<16x16x128xbf16> to vector<256x128xbf16>
    %c8 = arith.constant 8 : index
    %c0_27 = arith.constant 0 : index
    %c0_28 = arith.constant 0 : index
    %55 = vector.load %arg3[%c8, %c0_27, %c0_28] : memref<9x128x128xbf16, #tpu.memory_space<vmem>>, vector<1x128x128xbf16>
    %56 = vector.shape_cast %55 : vector<1x128x128xbf16> to vector<128x128xbf16>
    %cst_29 = arith.constant dense<0.000000e+00> : vector<256x128xf32>
    %57 = tpu.matmul %54, %56, %cst_29 {dimension_numbers = #tpu.dot_dimension_numbers<[1], [0], [0], [1], [0, 0, 1, 1], [], []>} : vector<256x128xbf16>, vector<128x128xbf16>, vector<256x128xf32> -> vector<256x128xf32>
    %58 = arith.addf %52, %57 : vector<256x128xf32>
    %59 = vector.shape_cast %58 : vector<256x128xf32> to vector<1x16x16x128xf32>
    %60 = arith.truncf %59 : vector<1x16x16x128xf32> to vector<1x16x16x128xbf16>
    %c0_30 = arith.constant 0 : index
    %c0_31 = arith.constant 0 : index
    %c0_32 = arith.constant 0 : index
    %c0_33 = arith.constant 0 : index
    %61 = vector.load %arg4[%c0_30, %c0_31, %c0_32, %c0_33] : memref<1x16x16x128xbf16, #tpu.memory_space<vmem>>, vector<1x16x16x128xbf16>
    tpu.vector_store %arg4[%c0_30, %c0_31, %c0_32, %c0_33], %60 {strides = array<i32>} : memref<1x16x16x128xbf16, #tpu.memory_space<vmem>>, vector<1x16x16x128xbf16>,
    %cst_34 = arith.constant dense<0.000000e+00> : vector<128xf32>
    %62 = vector.multi_reduction <add>, %58, %cst_34 [0] : vector<256x128xf32> to vector<128xf32>
    %63 = arith.mulf %58, %58 : vector<256x128xf32>
    %cst_35 = arith.constant dense<0.000000e+00> : vector<128xf32>
    %64 = vector.multi_reduction <add>, %63, %cst_35 [0] : vector<256x128xf32> to vector<128xf32>
    %65 = vector.shape_cast %62 : vector<128xf32> to vector<1x1x1x128xf32>
    %66 = vector.broadcast %65 : vector<1x1x1x128xf32> to vector<1x1x8x128xf32>
    %c0_36 = arith.constant 0 : index
    %c0_37 = arith.constant 0 : index
    %c0_38 = arith.constant 0 : index
    %c0_39 = arith.constant 0 : index
    %67 = vector.load %arg5[%c0_36, %c0_37, %c0_38, %c0_39] : memref<1x1x8x128xf32, #tpu.memory_space<vmem>>, vector<1x1x8x128xf32>
    tpu.vector_store %arg5[%c0_36, %c0_37, %c0_38, %c0_39], %66 {strides = array<i32>} : memref<1x1x8x128xf32, #tpu.memory_space<vmem>>, vector<1x1x8x128xf32>,
    %68 = vector.shape_cast %64 : vector<128xf32> to vector<1x1x1x128xf32>
    %69 = vector.broadcast %68 : vector<1x1x1x128xf32> to vector<1x1x8x128xf32>
    %c0_40 = arith.constant 0 : index
    %c0_41 = arith.constant 0 : index
    %c0_42 = arith.constant 0 : index
    %c0_43 = arith.constant 0 : index
    %70 = vector.load %arg6[%c0_40, %c0_41, %c0_42, %c0_43] : memref<1x1x8x128xf32, #tpu.memory_space<vmem>>, vector<1x1x8x128xf32>
    tpu.vector_store %arg6[%c0_40, %c0_41, %c0_42, %c0_43], %69 {strides = array<i32>} : memref<1x1x8x128xf32, #tpu.memory_space<vmem>>, vector<1x1x8x128xf32>,
    return
  }
  func.func @transform_0(%arg0: i32, %arg1: i32) -> (i32, i32, i32, i32) {
    %c0_i32 = arith.constant 0 : i32
    %c0_i32_0 = arith.constant 0 : i32
    %c0_i32_1 = arith.constant 0 : i32
    %c0_i32_2 = arith.constant 0 : i32
    return %arg0, %c0_i32, %c0_i32_0, %c0_i32_1 : i32, i32, i32, i32
  }
  func.func @transform_1(%arg0: i32, %arg1: i32) -> (i32, i32, i32) {
    %c0_i32 = arith.constant 0 : i32
    %c0_i32_0 = arith.constant 0 : i32
    %c0_i32_1 = arith.constant 0 : i32
    %c0_i32_2 = arith.constant 0 : i32
    return %c0_i32, %c0_i32_0, %c0_i32_1 : i32, i32, i32
  }
  func.func @transform_2(%arg0: i32, %arg1: i32) -> (i32, i32, i32, i32) {
    %c0_i32 = arith.constant 0 : i32
    %c0_i32_0 = arith.constant 0 : i32
    %c0_i32_1 = arith.constant 0 : i32
    return %arg0, %arg1, %c0_i32, %c0_i32_0 : i32, i32, i32, i32
  }
  func.func @transform_3(%arg0: i32, %arg1: i32) -> (i32, i32, i32, i32) {
    %c0_i32 = arith.constant 0 : i32
    %c0_i32_0 = arith.constant 0 : i32
    %c0_i32_1 = arith.constant 0 : i32
    return %arg0, %arg1, %c0_i32, %c0_i32_0 : i32, i32, i32, i32
  }
  func.func @transform_4(%arg0: i32, %arg1: i32) -> (i32, i32, i32, i32) {
    %c0_i32 = arith.constant 0 : i32
    %c0_i32_0 = arith.constant 0 : i32
    %c0_i32_1 = arith.constant 0 : i32
    return %arg0, %arg1, %c0_i32, %c0_i32_0 : i32, i32, i32, i32
  }
}

module attributes {stable_mosaic.version = 11 : i64} {
  func.func @bn_apply_kernel(%arg0: i32, %arg1: memref<512x128xbf16, #tpu.memory_space<vmem>>, %arg2: memref<1x128xf32, #tpu.memory_space<vmem>>, %arg3: memref<1x128xf32, #tpu.memory_space<vmem>>, %arg4: memref<512x128xbf16, #tpu.memory_space<vmem>>) attributes {dimension_semantics = [#tpu.dimension_semantics<parallel>], iteration_bounds = array<i64: 1>, scalar_prefetch = 0 : i64, scratch_operands = 0 : i64, tpu.core_type = #tpu.core_type<tc>, window_params = [{transform_indices = @transform_0, window_bounds = array<i64: 512, 128>}, {pipeline_mode = #tpu.pipeline_mode<synchronous>, transform_indices = @transform_1, window_bounds = array<i64: 1, 128>}, {pipeline_mode = #tpu.pipeline_mode<synchronous>, transform_indices = @transform_2, window_bounds = array<i64: 1, 128>}, {transform_indices = @transform_3, window_bounds = array<i64: 512, 128>}]} {
    %c0 = arith.constant 0 : index
    %c0_0 = arith.constant 0 : index
    %0 = vector.load %arg1[%c0, %c0_0] : memref<512x128xbf16, #tpu.memory_space<vmem>>, vector<512x128xbf16>
    %1 = arith.extf %0 : vector<512x128xbf16> to vector<512x128xf32>
    %c0_1 = arith.constant 0 : index
    %c0_2 = arith.constant 0 : index
    %2 = vector.load %arg2[%c0_1, %c0_2] : memref<1x128xf32, #tpu.memory_space<vmem>>, vector<1x128xf32>
    %3 = vector.broadcast %2 : vector<1x128xf32> to vector<512x128xf32>
    %4 = arith.mulf %1, %3 : vector<512x128xf32>
    %c0_3 = arith.constant 0 : index
    %c0_4 = arith.constant 0 : index
    %5 = vector.load %arg3[%c0_3, %c0_4] : memref<1x128xf32, #tpu.memory_space<vmem>>, vector<1x128xf32>
    %6 = vector.broadcast %5 : vector<1x128xf32> to vector<512x128xf32>
    %7 = arith.addf %4, %6 : vector<512x128xf32>
    %cst = arith.constant 0.000000e+00 : f32
    %8 = vector.broadcast %cst : f32 to vector<512x128xf32>
    %9 = arith.maximumf %7, %8 : vector<512x128xf32>
    %10 = arith.truncf %9 : vector<512x128xf32> to vector<512x128xbf16>
    %c0_5 = arith.constant 0 : index
    %c0_6 = arith.constant 0 : index
    %11 = vector.load %arg4[%c0_5, %c0_6] : memref<512x128xbf16, #tpu.memory_space<vmem>>, vector<512x128xbf16>
    tpu.vector_store %arg4[%c0_5, %c0_6], %10 {strides = array<i32>} : memref<512x128xbf16, #tpu.memory_space<vmem>>, vector<512x128xbf16>,
    return
  }
  func.func @transform_0(%arg0: i32) -> (i32, i32) {
    %c0_i32 = arith.constant 0 : i32
    %c0_i32_0 = arith.constant 0 : i32
    return %arg0, %c0_i32 : i32, i32
  }
  func.func @transform_1(%arg0: i32) -> (i32, i32) {
    %c0_i32 = arith.constant 0 : i32
    %c0_i32_0 = arith.constant 0 : i32
    %c0_i32_1 = arith.constant 0 : i32
    return %c0_i32, %c0_i32_0 : i32, i32
  }
  func.func @transform_2(%arg0: i32) -> (i32, i32) {
    %c0_i32 = arith.constant 0 : i32
    %c0_i32_0 = arith.constant 0 : i32
    %c0_i32_1 = arith.constant 0 : i32
    return %c0_i32, %c0_i32_0 : i32, i32
  }
  func.func @transform_3(%arg0: i32) -> (i32, i32) {
    %c0_i32 = arith.constant 0 : i32
    %c0_i32_0 = arith.constant 0 : i32
    return %arg0, %c0_i32 : i32, i32
  }
}

module attributes {stable_mosaic.version = 11 : i64} {
  func.func @bn_apply_residual_kernel(%arg0: i32, %arg1: memref<512x128xbf16, #tpu.memory_space<vmem>>, %arg2: memref<1x128xf32, #tpu.memory_space<vmem>>, %arg3: memref<1x128xf32, #tpu.memory_space<vmem>>, %arg4: memref<512x128xf32, #tpu.memory_space<vmem>>, %arg5: memref<512x128xf32, #tpu.memory_space<vmem>>) attributes {dimension_semantics = [#tpu.dimension_semantics<parallel>], iteration_bounds = array<i64: 1>, scalar_prefetch = 0 : i64, scratch_operands = 0 : i64, tpu.core_type = #tpu.core_type<tc>, window_params = [{transform_indices = @transform_0, window_bounds = array<i64: 512, 128>}, {pipeline_mode = #tpu.pipeline_mode<synchronous>, transform_indices = @transform_1, window_bounds = array<i64: 1, 128>}, {pipeline_mode = #tpu.pipeline_mode<synchronous>, transform_indices = @transform_2, window_bounds = array<i64: 1, 128>}, {transform_indices = @transform_3, window_bounds = array<i64: 512, 128>}, {transform_indices = @transform_4, window_bounds = array<i64: 512, 128>}]} {
    %c0 = arith.constant 0 : index
    %c0_0 = arith.constant 0 : index
    %0 = vector.load %arg1[%c0, %c0_0] : memref<512x128xbf16, #tpu.memory_space<vmem>>, vector<512x128xbf16>
    %1 = arith.extf %0 : vector<512x128xbf16> to vector<512x128xf32>
    %c0_1 = arith.constant 0 : index
    %c0_2 = arith.constant 0 : index
    %2 = vector.load %arg2[%c0_1, %c0_2] : memref<1x128xf32, #tpu.memory_space<vmem>>, vector<1x128xf32>
    %3 = vector.broadcast %2 : vector<1x128xf32> to vector<512x128xf32>
    %4 = arith.mulf %1, %3 : vector<512x128xf32>
    %c0_3 = arith.constant 0 : index
    %c0_4 = arith.constant 0 : index
    %5 = vector.load %arg3[%c0_3, %c0_4] : memref<1x128xf32, #tpu.memory_space<vmem>>, vector<1x128xf32>
    %6 = vector.broadcast %5 : vector<1x128xf32> to vector<512x128xf32>
    %7 = arith.addf %4, %6 : vector<512x128xf32>
    %c0_5 = arith.constant 0 : index
    %c0_6 = arith.constant 0 : index
    %8 = vector.load %arg4[%c0_5, %c0_6] : memref<512x128xf32, #tpu.memory_space<vmem>>, vector<512x128xf32>
    %9 = arith.addf %8, %7 : vector<512x128xf32>
    %c0_7 = arith.constant 0 : index
    %c0_8 = arith.constant 0 : index
    %10 = vector.load %arg5[%c0_7, %c0_8] : memref<512x128xf32, #tpu.memory_space<vmem>>, vector<512x128xf32>
    tpu.vector_store %arg5[%c0_7, %c0_8], %9 {strides = array<i32>} : memref<512x128xf32, #tpu.memory_space<vmem>>, vector<512x128xf32>,
    return
  }
  func.func @transform_0(%arg0: i32) -> (i32, i32) {
    %c0_i32 = arith.constant 0 : i32
    %c0_i32_0 = arith.constant 0 : i32
    return %arg0, %c0_i32 : i32, i32
  }
  func.func @transform_1(%arg0: i32) -> (i32, i32) {
    %c0_i32 = arith.constant 0 : i32
    %c0_i32_0 = arith.constant 0 : i32
    %c0_i32_1 = arith.constant 0 : i32
    return %c0_i32, %c0_i32_0 : i32, i32
  }
  func.func @transform_2(%arg0: i32) -> (i32, i32) {
    %c0_i32 = arith.constant 0 : i32
    %c0_i32_0 = arith.constant 0 : i32
    %c0_i32_1 = arith.constant 0 : i32
    return %c0_i32, %c0_i32_0 : i32, i32
  }
  func.func @transform_3(%arg0: i32) -> (i32, i32) {
    %c0_i32 = arith.constant 0 : i32
    %c0_i32_0 = arith.constant 0 : i32
    return %arg0, %c0_i32 : i32, i32
  }
  func.func @transform_4(%arg0: i32) -> (i32, i32) {
    %c0_i32 = arith.constant 0 : i32
    %c0_i32_0 = arith.constant 0 : i32
    return %arg0, %c0_i32 : i32, i32
  }
}

</mosaic_0001>

<llo_original>
// kernel: resnet_block_forward.5
$region0: #{resnet_block_forward.5}
  #allocation0 [shape = 'u32[]', space=smem, size = 0x4, offset = 0x4, fixed_abs, tag = 'smem constant byte address 0x4 - core index']
  #allocation1 [shape = 'u32[144,128]{1,0:T(1,128)}', space=vmem, size = 0x12000, scoped, tag = 'internal scratch']
  %s0 = inlined_call_operand.vmem [shape: bf16[512,128], index: 0, kind: input, shape index: {}, may-alias: {0,3}]
  %s1 = inlined_call_operand.vmem [shape: f32[1,128], index: 1, kind: input, shape index: {}]
  %s2 = inlined_call_operand.vmem [shape: f32[1,128], index: 2, kind: input, shape index: {}]
  %s3 = inlined_call_operand.vmem [shape: bf16[512,128], index: 3, kind: output, shape index: {}, may-alias: {0,3}]
  %s4 = sld [smem:[#allocation0]]
  $region22: #{resnet_block_forward.5} parent=0
    _
  %s6 = ssub.s32 1, %s4
  %s7 = scalar_select 0, %s6, %s4
  // Predicated region
  $region2: #{resnet_block_forward.5} parent=0 // pred_check
    _
  $region3: #{resnet_block_forward.5} parent=0 // pred_check_branch
    %9 = sbr.rel (0) target = $region5
  $region4: #{resnet_block_forward.5} parent=0 // pred_region
    _
  $region5: #{resnet_block_forward.5} parent=0 // pred_fallthru
    _
  // Predicated region
  $region6: #{resnet_block_forward.5} parent=0 // pred_check
    _
  $region7: #{resnet_block_forward.5} parent=0 // pred_check_branch
    %11 = sbr.rel (0) target = $region9
  $region8: #{resnet_block_forward.5} parent=0 // pred_region
    _
  $region9: #{resnet_block_forward.5} parent=0 // pred_fallthru
    _
  // Predicated region
  $region10: #{resnet_block_forward.5} parent=0 // pred_check
    _
  $region11: #{resnet_block_forward.5} parent=0 // pred_check_branch
    %13 = sbr.rel (0) target = $region13
  $region12: #{resnet_block_forward.5} parent=0 // pred_region
    _
  $region13: #{resnet_block_forward.5} parent=0 // pred_fallthru
    _
  %v14 = vld [vmem:[%s0] sm:$0xf]
  %v15 = vld [vmem:[%s0 + $0x4] sm:$0xf]
  %v16 = vld [vmem:[%s0 + $0x8] sm:$0xf]
  %v17 = vld [vmem:[%s0 + $0xc] sm:$0xf]
  %v18 = vld [vmem:[%s0 + $0x10] sm:$0xf]
  %v19 = vld [vmem:[%s0 + $0x14] sm:$0xf]
  %v20 = vld [vmem:[%s0 + $0x18] sm:$0xf]
  %v21 = vld [vmem:[%s0 + $0x1c] sm:$0xf]
  %v22 = vld [vmem:[%s0 + $0x20] sm:$0xf]
  %v23 = vld [vmem:[%s0 + $0x24] sm:$0xf]
  %v24 = vld [vmem:[%s0 + $0x28] sm:$0xf]
  %v25 = vld [vmem:[%s0 + $0x2c] sm:$0xf]
  %v26 = vld [vmem:[%s0 + $0x30] sm:$0xf]
  %v27 = vld [vmem:[%s0 + $0x34] sm:$0xf]
  %v28 = vld [vmem:[%s0 + $0x38] sm:$0xf]
  %v29 = vld [vmem:[%s0 + $0x3c] sm:$0xf]
  %v30 = vld [vmem:[%s0 + $0x40] sm:$0xf]
  %v31 = vld [vmem:[%s0 + $0x44] sm:$0xf]
  %v32 = vld [vmem:[%s0 + $0x48] sm:$0xf]
  %v33 = vld [vmem:[%s0 + $0x4c] sm:$0xf]
  %v34 = vld [vmem:[%s0 + $0x50] sm:$0xf]
  %v35 = vld [vmem:[%s0 + $0x54] sm:$0xf]
  %v36 = vld [vmem:[%s0 + $0x58] sm:$0xf]
  %v37 = vld [vmem:[%s0 + $0x5c] sm:$0xf]
  %v38 = vld [vmem:[%s0 + $0x60] sm:$0xf]
  %v39 = vld [vmem:[%s0 + $0x64] sm:$0xf]
  %v40 = vld [vmem:[%s0 + $0x68] sm:$0xf]
  %v41 = vld [vmem:[%s0 + $0x6c] sm:$0xf]
  %v42 = vld [vmem:[%s0 + $0x70] sm:$0xf]
  %v43 = vld [vmem:[%s0 + $0x74] sm:$0xf]
  %v44 = vld [vmem:[%s0 + $0x78] sm:$0xf]
  %v45 = vld [vmem:[%s0 + $0x7c] sm:$0xf]
  %v46 = vld [vmem:[%s0 + $0x80] sm:$0xf]
  %v47 = vld [vmem:[%s0 + $0x84] sm:$0xf]
  %v48 = vld [vmem:[%s0 + $0x88] sm:$0xf]
  %v49 = vld [vmem:[%s0 + $0x8c] sm:$0xf]
  %v50 = vld [vmem:[%s0 + $0x90] sm:$0xf]
  %v51 = vld [vmem:[%s0 + $0x94] sm:$0xf]
  %v52 = vld [vmem:[%s0 + $0x98] sm:$0xf]
  %v53 = vld [vmem:[%s0 + $0x9c] sm:$0xf]
  %v54 = vld [vmem:[%s0 + $0xa0] sm:$0xf]
  %v55 = vld [vmem:[%s0 + $0xa4] sm:$0xf]
  %v56 = vld [vmem:[%s0 + $0xa8] sm:$0xf]
  %v57 = vld [vmem:[%s0 + $0xac] sm:$0xf]
  %v58 = vld [vmem:[%s0 + $0xb0] sm:$0xf]
  %v59 = vld [vmem:[%s0 + $0xb4] sm:$0xf]
  %v60 = vld [vmem:[%s0 + $0xb8] sm:$0xf]
  %v61 = vld [vmem:[%s0 + $0xbc] sm:$0xf]
  %v62 = vld [vmem:[%s0 + $0xc0] sm:$0xf]
  %v63 = vld [vmem:[%s0 + $0xc4] sm:$0xf]
  %v64 = vld [vmem:[%s0 + $0xc8] sm:$0xf]
  %v65 = vld [vmem:[%s0 + $0xcc] sm:$0xf]
  %v66 = vld [vmem:[%s0 + $0xd0] sm:$0xf]
  %v67 = vld [vmem:[%s0 + $0xd4] sm:$0xf]
  %v68 = vld [vmem:[%s0 + $0xd8] sm:$0xf]
  %v69 = vld [vmem:[%s0 + $0xdc] sm:$0xf]
  %v70 = vld [vmem:[%s0 + $0xe0] sm:$0xf]
  %v71 = vld [vmem:[%s0 + $0xe4] sm:$0xf]
  %v72 = vld [vmem:[%s0 + $0xe8] sm:$0xf]
  %v73 = vld [vmem:[%s0 + $0xec] sm:$0xf]
  %v74 = vld [vmem:[%s0 + $0xf0] sm:$0xf]
  %v75 = vld [vmem:[%s0 + $0xf4] sm:$0xf]
  %v76 = vld [vmem:[%s0 + $0xf8] sm:$0xf]
  %v77 = vld [vmem:[%s0 + $0xfc] sm:$0xf]
  %v78 = vunpack.c.l.bf16 %v14
  %v79 = vunpack.c.l.bf16 %v15
  %v80 = vunpack.c.l.bf16 %v16
  %v81 = vunpack.c.l.bf16 %v17
  %v82 = vunpack.c.l.bf16 %v18
  %v83 = vunpack.c.l.bf16 %v19
  %v84 = vunpack.c.l.bf16 %v20
  %v85 = vunpack.c.l.bf16 %v21
  %v86 = vunpack.c.l.bf16 %v22
  %v87 = vunpack.c.l.bf16 %v23
  %v88 = vunpack.c.l.bf16 %v24
  %v89 = vunpack.c.l.bf16 %v25
  %v90 = vunpack.c.l.bf16 %v26
  %v91 = vunpack.c.l.bf16 %v27
  %v92 = vunpack.c.l.bf16 %v28
  %v93 = vunpack.c.l.bf16 %v29
  %v94 = vunpack.c.l.bf16 %v30
  %v95 = vunpack.c.l.bf16 %v31
  %v96 = vunpack.c.l.bf16 %v32
  %v97 = vunpack.c.l.bf16 %v33
  %v98 = vunpack.c.l.bf16 %v34
  %v99 = vunpack.c.l.bf16 %v35
  %v100 = vunpack.c.l.bf16 %v36
  %v101 = vunpack.c.l.bf16 %v37
  %v102 = vunpack.c.l.bf16 %v38
  %v103 = vunpack.c.l.bf16 %v39
  %v104 = vunpack.c.l.bf16 %v40
  %v105 = vunpack.c.l.bf16 %v41
  %v106 = vunpack.c.l.bf16 %v42
  %v107 = vunpack.c.l.bf16 %v43
  %v108 = vunpack.c.l.bf16 %v44
  %v109 = vunpack.c.l.bf16 %v45
  %v110 = vunpack.c.l.bf16 %v46
  %v111 = vunpack.c.l.bf16 %v47
  %v112 = vunpack.c.l.bf16 %v48
  %v113 = vunpack.c.l.bf16 %v49
  %v114 = vunpack.c.l.bf16 %v50
  %v115 = vunpack.c.l.bf16 %v51
  %v116 = vunpack.c.l.bf16 %v52
  %v117 = vunpack.c.l.bf16 %v53
  %v118 = vunpack.c.l.bf16 %v54
  %v119 = vunpack.c.l.bf16 %v55
  %v120 = vunpack.c.l.bf16 %v56
  %v121 = vunpack.c.l.bf16 %v57
  %v122 = vunpack.c.l.bf16 %v58
  %v123 = vunpack.c.l.bf16 %v59
  %v124 = vunpack.c.l.bf16 %v60
  %v125 = vunpack.c.l.bf16 %v61
  %v126 = vunpack.c.l.bf16 %v62
  %v127 = vunpack.c.l.bf16 %v63
  %v128 = vunpack.c.l.bf16 %v64
  %v129 = vunpack.c.l.bf16 %v65
  %v130 = vunpack.c.l.bf16 %v66
  %v131 = vunpack.c.l.bf16 %v67
  %v132 = vunpack.c.l.bf16 %v68
  %v133 = vunpack.c.l.bf16 %v69
  %v134 = vunpack.c.l.bf16 %v70
  %v135 = vunpack.c.l.bf16 %v71
  %v136 = vunpack.c.l.bf16 %v72
  %v137 = vunpack.c.l.bf16 %v73
  %v138 = vunpack.c.l.bf16 %v74
  %v139 = vunpack.c.l.bf16 %v75
  %v140 = vunpack.c.l.bf16 %v76
  %v141 = vunpack.c.l.bf16 %v77
  %v142 = vld [vmem:[%s1] sm:$0x1]
  %v144 = vlaneseq
  %v145 = vshrl.u32 %v144, 7
  %v146 = vsub.s32 0, %v145
  %v147 = vrot.slane %v142, %v146
  %v149 = vmul.f32 %v78, %v147
  %v150 = vmul.f32 %v79, %v147
  %v151 = vmul.f32 %v80, %v147
  %v152 = vmul.f32 %v81, %v147
  %v153 = vmul.f32 %v82, %v147
  %v154 = vmul.f32 %v83, %v147
  %v155 = vmul.f32 %v84, %v147
  %v156 = vmul.f32 %v85, %v147
  %v157 = vmul.f32 %v86, %v147
  %v158 = vmul.f32 %v87, %v147
  %v159 = vmul.f32 %v88, %v147
  %v160 = vmul.f32 %v89, %v147
  %v161 = vmul.f32 %v90, %v147
  %v162 = vmul.f32 %v91, %v147
  %v163 = vmul.f32 %v92, %v147
  %v164 = vmul.f32 %v93, %v147
  %v165 = vmul.f32 %v94, %v147
  %v166 = vmul.f32 %v95, %v147
  %v167 = vmul.f32 %v96, %v147
  %v168 = vmul.f32 %v97, %v147
  %v169 = vmul.f32 %v98, %v147
  %v170 = vmul.f32 %v99, %v147
  %v171 = vmul.f32 %v100, %v147
  %v172 = vmul.f32 %v101, %v147
  %v173 = vmul.f32 %v102, %v147
  %v174 = vmul.f32 %v103, %v147
  %v175 = vmul.f32 %v104, %v147
  %v176 = vmul.f32 %v105, %v147
  %v177 = vmul.f32 %v106, %v147
  %v178 = vmul.f32 %v107, %v147
  %v179 = vmul.f32 %v108, %v147
  %v180 = vmul.f32 %v109, %v147
  %v181 = vmul.f32 %v110, %v147
  %v182 = vmul.f32 %v111, %v147
  %v183 = vmul.f32 %v112, %v147
  %v184 = vmul.f32 %v113, %v147
  %v185 = vmul.f32 %v114, %v147
  %v186 = vmul.f32 %v115, %v147
  %v187 = vmul.f32 %v116, %v147
  %v188 = vmul.f32 %v117, %v147
  %v189 = vmul.f32 %v118, %v147
  %v190 = vmul.f32 %v119, %v147
  %v191 = vmul.f32 %v120, %v147
  %v192 = vmul.f32 %v121, %v147
  %v193 = vmul.f32 %v122, %v147
  %v194 = vmul.f32 %v123, %v147
  %v195 = vmul.f32 %v124, %v147
  %v196 = vmul.f32 %v125, %v147
  %v197 = vmul.f32 %v126, %v147
  %v198 = vmul.f32 %v127, %v147
  %v199 = vmul.f32 %v128, %v147
  %v200 = vmul.f32 %v129, %v147
  %v201 = vmul.f32 %v130, %v147
  %v202 = vmul.f32 %v131, %v147
  %v203 = vmul.f32 %v132, %v147
  %v204 = vmul.f32 %v133, %v147
  %v205 = vmul.f32 %v134, %v147
  %v206 = vmul.f32 %v135, %v147
  %v207 = vmul.f32 %v136, %v147
  %v208 = vmul.f32 %v137, %v147
  %v209 = vmul.f32 %v138, %v147
  %v210 = vmul.f32 %v139, %v147
  %v211 = vmul.f32 %v140, %v147
  %v212 = vmul.f32 %v141, %v147
  %v213 = vld [vmem:[%s2] sm:$0x1]
  %v215 = vlaneseq
  %v216 = vshrl.u32 %v215, 7
  %v217 = vsub.s32 0, %v216
  %v218 = vrot.slane %v213, %v217
  %v220 = vadd.f32 %v149, %v218
  %v221 = vadd.f32 %v150, %v218
  %v222 = vadd.f32 %v151, %v218
  %v223 = vadd.f32 %v152, %v218
  %v224 = vadd.f32 %v153, %v218
  %v225 = vadd.f32 %v154, %v218
  %v226 = vadd.f32 %v155, %v218
  %v227 = vadd.f32 %v156, %v218
  %v228 = vadd.f32 %v157, %v218
  %v229 = vadd.f32 %v158, %v218
  %v230 = vadd.f32 %v159, %v218
  %v231 = vadd.f32 %v160, %v218
  %v232 = vadd.f32 %v161, %v218
  %v233 = vadd.f32 %v162, %v218
  %v234 = vadd.f32 %v163, %v218
  %v235 = vadd.f32 %v164, %v218
  %v236 = vadd.f32 %v165, %v218
  %v237 = vadd.f32 %v166, %v218
  %v238 = vadd.f32 %v167, %v218
  %v239 = vadd.f32 %v168, %v218
  %v240 = vadd.f32 %v169, %v218
  %v241 = vadd.f32 %v170, %v218
  %v242 = vadd.f32 %v171, %v218
  %v243 = vadd.f32 %v172, %v218
  %v244 = vadd.f32 %v173, %v218
  %v245 = vadd.f32 %v174, %v218
  %v246 = vadd.f32 %v175, %v218
  %v247 = vadd.f32 %v176, %v218
  %v248 = vadd.f32 %v177, %v218
  %v249 = vadd.f32 %v178, %v218
  %v250 = vadd.f32 %v179, %v218
  %v251 = vadd.f32 %v180, %v218
  %v252 = vadd.f32 %v181, %v218
  %v253 = vadd.f32 %v182, %v218
  %v254 = vadd.f32 %v183, %v218
  %v255 = vadd.f32 %v184, %v218
  %v256 = vadd.f32 %v185, %v218
  %v257 = vadd.f32 %v186, %v218
  %v258 = vadd.f32 %v187, %v218
  %v259 = vadd.f32 %v188, %v218
  %v260 = vadd.f32 %v189, %v218
  %v261 = vadd.f32 %v190, %v218
  %v262 = vadd.f32 %v191, %v218
  %v263 = vadd.f32 %v192, %v218
  %v264 = vadd.f32 %v193, %v218
  %v265 = vadd.f32 %v194, %v218
  %v266 = vadd.f32 %v195, %v218
  %v267 = vadd.f32 %v196, %v218
  %v268 = vadd.f32 %v197, %v218
  %v269 = vadd.f32 %v198, %v218
  %v270 = vadd.f32 %v199, %v218
  %v271 = vadd.f32 %v200, %v218
  %v272 = vadd.f32 %v201, %v218
  %v273 = vadd.f32 %v202, %v218
  %v274 = vadd.f32 %v203, %v218
  %v275 = vadd.f32 %v204, %v218
  %v276 = vadd.f32 %v205, %v218
  %v277 = vadd.f32 %v206, %v218
  %v278 = vadd.f32 %v207, %v218
  %v279 = vadd.f32 %v208, %v218
  %v280 = vadd.f32 %v209, %v218
  %v281 = vadd.f32 %v210, %v218
  %v282 = vadd.f32 %v211, %v218
  %v283 = vadd.f32 %v212, %v218
  %v284 = vmax.f32 %v220, 0.0
  %v285 = vmax.f32 %v221, 0.0
  %v286 = vmax.f32 %v222, 0.0
  %v287 = vmax.f32 %v223, 0.0
  %v288 = vmax.f32 %v224, 0.0
  %v289 = vmax.f32 %v225, 0.0
  %v290 = vmax.f32 %v226, 0.0
  %v291 = vmax.f32 %v227, 0.0
  %v292 = vmax.f32 %v228, 0.0
  %v293 = vmax.f32 %v229, 0.0
  %v294 = vmax.f32 %v230, 0.0
  %v295 = vmax.f32 %v231, 0.0
  %v296 = vmax.f32 %v232, 0.0
  %v297 = vmax.f32 %v233, 0.0
  %v298 = vmax.f32 %v234, 0.0
  %v299 = vmax.f32 %v235, 0.0
  %v300 = vmax.f32 %v236, 0.0
  %v301 = vmax.f32 %v237, 0.0
  %v302 = vmax.f32 %v238, 0.0
  %v303 = vmax.f32 %v239, 0.0
  %v304 = vmax.f32 %v240, 0.0
  %v305 = vmax.f32 %v241, 0.0
  %v306 = vmax.f32 %v242, 0.0
  %v307 = vmax.f32 %v243, 0.0
  %v308 = vmax.f32 %v244, 0.0
  %v309 = vmax.f32 %v245, 0.0
  %v310 = vmax.f32 %v246, 0.0
  %v311 = vmax.f32 %v247, 0.0
  %v312 = vmax.f32 %v248, 0.0
  %v313 = vmax.f32 %v249, 0.0
  %v314 = vmax.f32 %v250, 0.0
  %v315 = vmax.f32 %v251, 0.0
  %v316 = vmax.f32 %v252, 0.0
  %v317 = vmax.f32 %v253, 0.0
  %v318 = vmax.f32 %v254, 0.0
  %v319 = vmax.f32 %v255, 0.0
  %v320 = vmax.f32 %v256, 0.0
  %v321 = vmax.f32 %v257, 0.0
  %v322 = vmax.f32 %v258, 0.0
  %v323 = vmax.f32 %v259, 0.0
  %v324 = vmax.f32 %v260, 0.0
  %v325 = vmax.f32 %v261, 0.0
  %v326 = vmax.f32 %v262, 0.0
  %v327 = vmax.f32 %v263, 0.0
  %v328 = vmax.f32 %v264, 0.0
  %v329 = vmax.f32 %v265, 0.0
  %v330 = vmax.f32 %v266, 0.0
  %v331 = vmax.f32 %v267, 0.0
  %v332 = vmax.f32 %v268, 0.0
  %v333 = vmax.f32 %v269, 0.0
  %v334 = vmax.f32 %v270, 0.0
  %v335 = vmax.f32 %v271, 0.0
  %v336 = vmax.f32 %v272, 0.0
  %v337 = vmax.f32 %v273, 0.0
  %v338 = vmax.f32 %v274, 0.0
  %v339 = vmax.f32 %v275, 0.0
  %v340 = vmax.f32 %v276, 0.0
  %v341 = vmax.f32 %v277, 0.0
  %v342 = vmax.f32 %v278, 0.0
  %v343 = vmax.f32 %v279, 0.0
  %v344 = vmax.f32 %v280, 0.0
  %v345 = vmax.f32 %v281, 0.0
  %v346 = vmax.f32 %v282, 0.0
  %v347 = vmax.f32 %v283, 0.0
  %v348 = vpack.c.bf16 %v285, %v284
  %v349 = vpack.c.bf16 %v287, %v286
  %v350 = vpack.c.bf16 %v289, %v288
  %v351 = vpack.c.bf16 %v291, %v290
  %v352 = vpack.c.bf16 %v293, %v292
  %v353 = vpack.c.bf16 %v295, %v294
  %v354 = vpack.c.bf16 %v297, %v296
  %v355 = vpack.c.bf16 %v299, %v298
  %v356 = vpack.c.bf16 %v301, %v300
  %v357 = vpack.c.bf16 %v303, %v302
  %v358 = vpack.c.bf16 %v305, %v304
  %v359 = vpack.c.bf16 %v307, %v306
  %v360 = vpack.c.bf16 %v309, %v308
  %v361 = vpack.c.bf16 %v311, %v310
  %v362 = vpack.c.bf16 %v313, %v312
  %v363 = vpack.c.bf16 %v315, %v314
  %v364 = vpack.c.bf16 %v317, %v316
  %v365 = vpack.c.bf16 %v319, %v318
  %v366 = vpack.c.bf16 %v321, %v320
  %v367 = vpack.c.bf16 %v323, %v322
  %v368 = vpack.c.bf16 %v325, %v324
  %v369 = vpack.c.bf16 %v327, %v326
  %v370 = vpack.c.bf16 %v329, %v328
  %v371 = vpack.c.bf16 %v331, %v330
  %v372 = vpack.c.bf16 %v333, %v332
  %v373 = vpack.c.bf16 %v335, %v334
  %v374 = vpack.c.bf16 %v337, %v336
  %v375 = vpack.c.bf16 %v339, %v338
  %v376 = vpack.c.bf16 %v341, %v340
  %v377 = vpack.c.bf16 %v343, %v342
  %v378 = vpack.c.bf16 %v345, %v344
  %v379 = vpack.c.bf16 %v347, %v346
  %v412 = vunpack.c.l.b16 %v348
  %v413 = vunpack.c.h.b16 %v348
  %v414 = vunpack.c.l.b16 %v349
  %v415 = vunpack.c.h.b16 %v349
  %v416 = vunpack.c.l.b16 %v350
  %v417 = vunpack.c.h.b16 %v350
  %v418 = vunpack.c.l.b16 %v351
  %v419 = vunpack.c.h.b16 %v351
  %v420 = vunpack.c.l.b16 %v352
  %v421 = vunpack.c.h.b16 %v352
  %v422 = vunpack.c.l.b16 %v353
  %v423 = vunpack.c.h.b16 %v353
  %v424 = vunpack.c.l.b16 %v354
  %v425 = vunpack.c.h.b16 %v354
  %v426 = vunpack.c.l.b16 %v355
  %v427 = vunpack.c.h.b16 %v355
  %v428 = vunpack.c.l.b16 %v356
  %v429 = vunpack.c.h.b16 %v356
  %v430 = vunpack.c.l.b16 %v357
  %v431 = vunpack.c.h.b16 %v357
  %v432 = vunpack.c.l.b16 %v358
  %v433 = vunpack.c.h.b16 %v358
  %v434 = vunpack.c.l.b16 %v359
  %v435 = vunpack.c.h.b16 %v359
  %v436 = vunpack.c.l.b16 %v360
  %v437 = vunpack.c.h.b16 %v360
  %v438 = vunpack.c.l.b16 %v361
  %v439 = vunpack.c.h.b16 %v361
  %v440 = vunpack.c.l.b16 %v362
  %v441 = vunpack.c.h.b16 %v362
  %v442 = vunpack.c.l.b16 %v363
  %v443 = vunpack.c.h.b16 %v363
  %v444 = vunpack.c.l.b16 %v364
  %v445 = vunpack.c.h.b16 %v364
  %v446 = vunpack.c.l.b16 %v365
  %v447 = vunpack.c.h.b16 %v365
  %v448 = vunpack.c.l.b16 %v366
  %v449 = vunpack.c.h.b16 %v366
  %v450 = vunpack.c.l.b16 %v367
  %v451 = vunpack.c.h.b16 %v367
  %v452 = vunpack.c.l.b16 %v368
  %v453 = vunpack.c.h.b16 %v368
  %v454 = vunpack.c.l.b16 %v369
  %v455 = vunpack.c.h.b16 %v369
  %v456 = vunpack.c.l.b16 %v370
  %v457 = vunpack.c.h.b16 %v370
  %v458 = vunpack.c.l.b16 %v371
  %v459 = vunpack.c.h.b16 %v371
  %v460 = vunpack.c.l.b16 %v372
  %v461 = vunpack.c.h.b16 %v372
  %v462 = vunpack.c.l.b16 %v373
  %v463 = vunpack.c.h.b16 %v373
  %v464 = vunpack.c.l.b16 %v374
  %v465 = vunpack.c.h.b16 %v374
  %v466 = vunpack.c.l.b16 %v375
  %v467 = vunpack.c.h.b16 %v375
  %v468 = vunpack.c.l.b16 %v376
  %v469 = vunpack.c.h.b16 %v376
  %v470 = vunpack.c.l.b16 %v377
  %v471 = vunpack.c.h.b16 %v377
  %v472 = vunpack.c.l.b16 %v378
  %v473 = vunpack.c.h.b16 %v378
  %v474 = vunpack.c.l.b16 %v379
  %v475 = vunpack.c.h.b16 %v379
  %v476 = vpack.c.b16 %v412, %v412
  %v477 = vpack.c.b16 %v413, %v413
  %v478 = vpack.c.b16 %v414, %v414
  %v479 = vpack.c.b16 %v415, %v415
  %v480 = vpack.c.b16 %v416, %v416
  %v481 = vpack.c.b16 %v417, %v417
  %v482 = vpack.c.b16 %v418, %v418
  %v483 = vpack.c.b16 %v419, %v419
  %v484 = vpack.c.b16 %v420, %v420
  %v485 = vpack.c.b16 %v421, %v421
  %v486 = vpack.c.b16 %v422, %v422
  %v487 = vpack.c.b16 %v423, %v423
  %v488 = vpack.c.b16 %v424, %v424
  %v489 = vpack.c.b16 %v425, %v425
  %v490 = vpack.c.b16 %v426, %v426
  %v491 = vpack.c.b16 %v427, %v427
  %v492 = vpack.c.b16 %v428, %v428
  %v493 = vpack.c.b16 %v429, %v429
  %v494 = vpack.c.b16 %v430, %v430
  %v495 = vpack.c.b16 %v431, %v431
  %v496 = vpack.c.b16 %v432, %v432
  %v497 = vpack.c.b16 %v433, %v433
  %v498 = vpack.c.b16 %v434, %v434
  %v499 = vpack.c.b16 %v435, %v435
  %v500 = vpack.c.b16 %v436, %v436
  %v501 = vpack.c.b16 %v437, %v437
  %v502 = vpack.c.b16 %v438, %v438
  %v503 = vpack.c.b16 %v439, %v439
  %v504 = vpack.c.b16 %v440, %v440
  %v505 = vpack.c.b16 %v441, %v441
  %v506 = vpack.c.b16 %v442, %v442
  %v507 = vpack.c.b16 %v443, %v443
  %v508 = vpack.c.b16 %v444, %v444
  %v509 = vpack.c.b16 %v445, %v445
  %v510 = vpack.c.b16 %v446, %v446
  %v511 = vpack.c.b16 %v447, %v447
  %v512 = vpack.c.b16 %v448, %v448
  %v513 = vpack.c.b16 %v449, %v449
  %v514 = vpack.c.b16 %v450, %v450
  %v515 = vpack.c.b16 %v451, %v451
  %v516 = vpack.c.b16 %v452, %v452
  %v517 = vpack.c.b16 %v453, %v453
  %v518 = vpack.c.b16 %v454, %v454
  %v519 = vpack.c.b16 %v455, %v455
  %v520 = vpack.c.b16 %v456, %v456
  %v521 = vpack.c.b16 %v457, %v457
  %v522 = vpack.c.b16 %v458, %v458
  %v523 = vpack.c.b16 %v459, %v459
  %v524 = vpack.c.b16 %v460, %v460
  %v525 = vpack.c.b16 %v461, %v461
  %v526 = vpack.c.b16 %v462, %v462
  %v527 = vpack.c.b16 %v463, %v463
  %v528 = vpack.c.b16 %v464, %v464
  %v529 = vpack.c.b16 %v465, %v465
  %v530 = vpack.c.b16 %v466, %v466
  %v531 = vpack.c.b16 %v467, %v467
  %v532 = vpack.c.b16 %v468, %v468
  %v533 = vpack.c.b16 %v469, %v469
  %v534 = vpack.c.b16 %v470, %v470
  %v535 = vpack.c.b16 %v471, %v471
  %v536 = vpack.c.b16 %v472, %v472
  %v537 = vpack.c.b16 %v473, %v473
  %v538 = vpack.c.b16 %v474, %v474
  %v539 = vpack.c.b16 %v475, %v475
  %604 = vst [vmem:[%s3] sm:$0xf] %v476
  %605 = vst [vmem:[%s3 + $0x4] sm:$0xf] %v477
  %606 = vst [vmem:[%s3 + $0x8] sm:$0xf] %v478
  %607 = vst [vmem:[%s3 + $0xc] sm:$0xf] %v479
  %608 = vst [vmem:[%s3 + $0x10] sm:$0xf] %v480
  %609 = vst [vmem:[%s3 + $0x14] sm:$0xf] %v481
  %610 = vst [vmem:[%s3 + $0x18] sm:$0xf] %v482
  %611 = vst [vmem:[%s3 + $0x1c] sm:$0xf] %v483
  %612 = vst [vmem:[%s3 + $0x20] sm:$0xf] %v484
  %613 = vst [vmem:[%s3 + $0x24] sm:$0xf] %v485
  %614 = vst [vmem:[%s3 + $0x28] sm:$0xf] %v486
  %615 = vst [vmem:[%s3 + $0x2c] sm:$0xf] %v487
  %616 = vst [vmem:[%s3 + $0x30] sm:$0xf] %v488
  %617 = vst [vmem:[%s3 + $0x34] sm:$0xf] %v489
  %618 = vst [vmem:[%s3 + $0x38] sm:$0xf] %v490
  %619 = vst [vmem:[%s3 + $0x3c] sm:$0xf] %v491
  %620 = vst [vmem:[%s3 + $0x40] sm:$0xf] %v492
  %621 = vst [vmem:[%s3 + $0x44] sm:$0xf] %v493
  %622 = vst [vmem:[%s3 + $0x48] sm:$0xf] %v494
  %623 = vst [vmem:[%s3 + $0x4c] sm:$0xf] %v495
  %624 = vst [vmem:[%s3 + $0x50] sm:$0xf] %v496
  %625 = vst [vmem:[%s3 + $0x54] sm:$0xf] %v497
  %626 = vst [vmem:[%s3 + $0x58] sm:$0xf] %v498
  %627 = vst [vmem:[%s3 + $0x5c] sm:$0xf] %v499
  %628 = vst [vmem:[%s3 + $0x60] sm:$0xf] %v500
  %629 = vst [vmem:[%s3 + $0x64] sm:$0xf] %v501
  %630 = vst [vmem:[%s3 + $0x68] sm:$0xf] %v502
  %631 = vst [vmem:[%s3 + $0x6c] sm:$0xf] %v503
  %632 = vst [vmem:[%s3 + $0x70] sm:$0xf] %v504
  %633 = vst [vmem:[%s3 + $0x74] sm:$0xf] %v505
  %634 = vst [vmem:[%s3 + $0x78] sm:$0xf] %v506
  %635 = vst [vmem:[%s3 + $0x7c] sm:$0xf] %v507
  %636 = vst [vmem:[%s3 + $0x80] sm:$0xf] %v508
  %637 = vst [vmem:[%s3 + $0x84] sm:$0xf] %v509
  %638 = vst [vmem:[%s3 + $0x88] sm:$0xf] %v510
  %639 = vst [vmem:[%s3 + $0x8c] sm:$0xf] %v511
  %640 = vst [vmem:[%s3 + $0x90] sm:$0xf] %v512
  %641 = vst [vmem:[%s3 + $0x94] sm:$0xf] %v513
  %642 = vst [vmem:[%s3 + $0x98] sm:$0xf] %v514
  %643 = vst [vmem:[%s3 + $0x9c] sm:$0xf] %v515
  %644 = vst [vmem:[%s3 + $0xa0] sm:$0xf] %v516
  %645 = vst [vmem:[%s3 + $0xa4] sm:$0xf] %v517
  %646 = vst [vmem:[%s3 + $0xa8] sm:$0xf] %v518
  %647 = vst [vmem:[%s3 + $0xac] sm:$0xf] %v519
  %648 = vst [vmem:[%s3 + $0xb0] sm:$0xf] %v520
  %649 = vst [vmem:[%s3 + $0xb4] sm:$0xf] %v521
  %650 = vst [vmem:[%s3 + $0xb8] sm:$0xf] %v522
  %651 = vst [vmem:[%s3 + $0xbc] sm:$0xf] %v523
  %652 = vst [vmem:[%s3 + $0xc0] sm:$0xf] %v524
  %653 = vst [vmem:[%s3 + $0xc4] sm:$0xf] %v525
  %654 = vst [vmem:[%s3 + $0xc8] sm:$0xf] %v526
  %655 = vst [vmem:[%s3 + $0xcc] sm:$0xf] %v527
  %656 = vst [vmem:[%s3 + $0xd0] sm:$0xf] %v528
  %657 = vst [vmem:[%s3 + $0xd4] sm:$0xf] %v529
  %658 = vst [vmem:[%s3 + $0xd8] sm:$0xf] %v530
  %659 = vst [vmem:[%s3 + $0xdc] sm:$0xf] %v531
  %660 = vst [vmem:[%s3 + $0xe0] sm:$0xf] %v532
  %661 = vst [vmem:[%s3 + $0xe4] sm:$0xf] %v533
  %662 = vst [vmem:[%s3 + $0xe8] sm:$0xf] %v534
  %663 = vst [vmem:[%s3 + $0xec] sm:$0xf] %v535
  %664 = vst [vmem:[%s3 + $0xf0] sm:$0xf] %v536
  %665 = vst [vmem:[%s3 + $0xf4] sm:$0xf] %v537
  %666 = vst [vmem:[%s3 + $0xf8] sm:$0xf] %v538
  %667 = vst [vmem:[%s3 + $0xfc] sm:$0xf] %v539
  // Predicated region
  $region14: #{resnet_block_forward.5} parent=0 // pred_check
    _
  $region15: #{resnet_block_forward.5} parent=0 // pred_check_branch
    %669 = sbr.rel (0) target = $region17
  $region16: #{resnet_block_forward.5} parent=0 // pred_region
    _
  $region17: #{resnet_block_forward.5} parent=0 // pred_fallthru
    _
  // Predicated region
  $region18: #{resnet_block_forward.5} parent=0 // pred_check
    _
  $region19: #{resnet_block_forward.5} parent=0 // pred_check_branch
    %671 = sbr.rel (0) target = $region21
  $region20: #{resnet_block_forward.5} parent=0 // pred_region
    _
  $region21: #{resnet_block_forward.5} parent=0 // pred_fallthru
    _

// kernel: resnet_block_forward.7
$region0: #{resnet_block_forward.7}
  #allocation0 [shape = 'u32[]', space=smem, size = 0x4, offset = 0x4, fixed_abs, tag = 'smem constant byte address 0x4 - core index']
  #allocation1 [shape = 'u32[144,128]{1,0:T(1,128)}', space=vmem, size = 0x12000, scoped, tag = 'internal scratch']
  %s0 = inlined_call_operand.vmem [shape: bf16[512,128], index: 0, kind: input, shape index: {}]
  %s1 = inlined_call_operand.vmem [shape: f32[1,128], index: 1, kind: input, shape index: {}]
  %s2 = inlined_call_operand.vmem [shape: f32[1,128], index: 2, kind: input, shape index: {}]
  %s3 = inlined_call_operand.vmem [shape: f32[512,128], index: 3, kind: input, shape index: {}, may-alias: {3,4}]
  %s4 = inlined_call_operand.vmem [shape: f32[512,128], index: 4, kind: output, shape index: {}, may-alias: {3,4}]
  %s5 = sld [smem:[#allocation0]]
  $region26: #{resnet_block_forward.7} parent=0
    _
  %s7 = ssub.s32 1, %s5
  %s8 = scalar_select 0, %s7, %s5
  // Predicated region
  $region2: #{resnet_block_forward.7} parent=0 // pred_check
    _
  $region3: #{resnet_block_forward.7} parent=0 // pred_check_branch
    %10 = sbr.rel (0) target = $region5
  $region4: #{resnet_block_forward.7} parent=0 // pred_region
    _
  $region5: #{resnet_block_forward.7} parent=0 // pred_fallthru
    _
  // Predicated region
  $region6: #{resnet_block_forward.7} parent=0 // pred_check
    _
  $region7: #{resnet_block_forward.7} parent=0 // pred_check_branch
    %12 = sbr.rel (0) target = $region9
  $region8: #{resnet_block_forward.7} parent=0 // pred_region
    _
  $region9: #{resnet_block_forward.7} parent=0 // pred_fallthru
    _
  // Predicated region
  $region10: #{resnet_block_forward.7} parent=0 // pred_check
    _
  $region11: #{resnet_block_forward.7} parent=0 // pred_check_branch
    %14 = sbr.rel (0) target = $region13
  $region12: #{resnet_block_forward.7} parent=0 // pred_region
    _
  $region13: #{resnet_block_forward.7} parent=0 // pred_fallthru
    _
  // Predicated region
  $region14: #{resnet_block_forward.7} parent=0 // pred_check
    _
  $region15: #{resnet_block_forward.7} parent=0 // pred_check_branch
    %16 = sbr.rel (0) target = $region17
  $region16: #{resnet_block_forward.7} parent=0 // pred_region
    _
  $region17: #{resnet_block_forward.7} parent=0 // pred_fallthru
    _
  %v17 = vld [vmem:[%s0] sm:$0xf]
  %v18 = vld [vmem:[%s0 + $0x4] sm:$0xf]
  %v19 = vld [vmem:[%s0 + $0x8] sm:$0xf]
  %v20 = vld [vmem:[%s0 + $0xc] sm:$0xf]
  %v21 = vld [vmem:[%s0 + $0x10] sm:$0xf]
  %v22 = vld [vmem:[%s0 + $0x14] sm:$0xf]
  %v23 = vld [vmem:[%s0 + $0x18] sm:$0xf]
  %v24 = vld [vmem:[%s0 + $0x1c] sm:$0xf]
  %v25 = vld [vmem:[%s0 + $0x20] sm:$0xf]
  %v26 = vld [vmem:[%s0 + $0x24] sm:$0xf]
  %v27 = vld [vmem:[%s0 + $0x28] sm:$0xf]
  %v28 = vld [vmem:[%s0 + $0x2c] sm:$0xf]
  %v29 = vld [vmem:[%s0 + $0x30] sm:$0xf]
  %v30 = vld [vmem:[%s0 + $0x34] sm:$0xf]
  %v31 = vld [vmem:[%s0 + $0x38] sm:$0xf]
  %v32 = vld [vmem:[%s0 + $0x3c] sm:$0xf]
  %v33 = vld [vmem:[%s0 + $0x40] sm:$0xf]
  %v34 = vld [vmem:[%s0 + $0x44] sm:$0xf]
  %v35 = vld [vmem:[%s0 + $0x48] sm:$0xf]
  %v36 = vld [vmem:[%s0 + $0x4c] sm:$0xf]
  %v37 = vld [vmem:[%s0 + $0x50] sm:$0xf]
  %v38 = vld [vmem:[%s0 + $0x54] sm:$0xf]
  %v39 = vld [vmem:[%s0 + $0x58] sm:$0xf]
  %v40 = vld [vmem:[%s0 + $0x5c] sm:$0xf]
  %v41 = vld [vmem:[%s0 + $0x60] sm:$0xf]
  %v42 = vld [vmem:[%s0 + $0x64] sm:$0xf]
  %v43 = vld [vmem:[%s0 + $0x68] sm:$0xf]
  %v44 = vld [vmem:[%s0 + $0x6c] sm:$0xf]
  %v45 = vld [vmem:[%s0 + $0x70] sm:$0xf]
  %v46 = vld [vmem:[%s0 + $0x74] sm:$0xf]
  %v47 = vld [vmem:[%s0 + $0x78] sm:$0xf]
  %v48 = vld [vmem:[%s0 + $0x7c] sm:$0xf]
  %v49 = vld [vmem:[%s0 + $0x80] sm:$0xf]
  %v50 = vld [vmem:[%s0 + $0x84] sm:$0xf]
  %v51 = vld [vmem:[%s0 + $0x88] sm:$0xf]
  %v52 = vld [vmem:[%s0 + $0x8c] sm:$0xf]
  %v53 = vld [vmem:[%s0 + $0x90] sm:$0xf]
  %v54 = vld [vmem:[%s0 + $0x94] sm:$0xf]
  %v55 = vld [vmem:[%s0 + $0x98] sm:$0xf]
  %v56 = vld [vmem:[%s0 + $0x9c] sm:$0xf]
  %v57 = vld [vmem:[%s0 + $0xa0] sm:$0xf]
  %v58 = vld [vmem:[%s0 + $0xa4] sm:$0xf]
  %v59 = vld [vmem:[%s0 + $0xa8] sm:$0xf]
  %v60 = vld [vmem:[%s0 + $0xac] sm:$0xf]
  %v61 = vld [vmem:[%s0 + $0xb0] sm:$0xf]
  %v62 = vld [vmem:[%s0 + $0xb4] sm:$0xf]
  %v63 = vld [vmem:[%s0 + $0xb8] sm:$0xf]
  %v64 = vld [vmem:[%s0 + $0xbc] sm:$0xf]
  %v65 = vld [vmem:[%s0 + $0xc0] sm:$0xf]
  %v66 = vld [vmem:[%s0 + $0xc4] sm:$0xf]
  %v67 = vld [vmem:[%s0 + $0xc8] sm:$0xf]
  %v68 = vld [vmem:[%s0 + $0xcc] sm:$0xf]
  %v69 = vld [vmem:[%s0 + $0xd0] sm:$0xf]
  %v70 = vld [vmem:[%s0 + $0xd4] sm:$0xf]
  %v71 = vld [vmem:[%s0 + $0xd8] sm:$0xf]
  %v72 = vld [vmem:[%s0 + $0xdc] sm:$0xf]
  %v73 = vld [vmem:[%s0 + $0xe0] sm:$0xf]
  %v74 = vld [vmem:[%s0 + $0xe4] sm:$0xf]
  %v75 = vld [vmem:[%s0 + $0xe8] sm:$0xf]
  %v76 = vld [vmem:[%s0 + $0xec] sm:$0xf]
  %v77 = vld [vmem:[%s0 + $0xf0] sm:$0xf]
  %v78 = vld [vmem:[%s0 + $0xf4] sm:$0xf]
  %v79 = vld [vmem:[%s0 + $0xf8] sm:$0xf]
  %v80 = vld [vmem:[%s0 + $0xfc] sm:$0xf]
  %v81 = vunpack.c.l.bf16 %v17
  %v82 = vunpack.c.l.bf16 %v18
  %v83 = vunpack.c.l.bf16 %v19
  %v84 = vunpack.c.l.bf16 %v20
  %v85 = vunpack.c.l.bf16 %v21
  %v86 = vunpack.c.l.bf16 %v22
  %v87 = vunpack.c.l.bf16 %v23
  %v88 = vunpack.c.l.bf16 %v24
  %v89 = vunpack.c.l.bf16 %v25
  %v90 = vunpack.c.l.bf16 %v26
  %v91 = vunpack.c.l.bf16 %v27
  %v92 = vunpack.c.l.bf16 %v28
  %v93 = vunpack.c.l.bf16 %v29
  %v94 = vunpack.c.l.bf16 %v30
  %v95 = vunpack.c.l.bf16 %v31
  %v96 = vunpack.c.l.bf16 %v32
  %v97 = vunpack.c.l.bf16 %v33
  %v98 = vunpack.c.l.bf16 %v34
  %v99 = vunpack.c.l.bf16 %v35
  %v100 = vunpack.c.l.bf16 %v36
  %v101 = vunpack.c.l.bf16 %v37
  %v102 = vunpack.c.l.bf16 %v38
  %v103 = vunpack.c.l.bf16 %v39
  %v104 = vunpack.c.l.bf16 %v40
  %v105 = vunpack.c.l.bf16 %v41
  %v106 = vunpack.c.l.bf16 %v42
  %v107 = vunpack.c.l.bf16 %v43
  %v108 = vunpack.c.l.bf16 %v44
  %v109 = vunpack.c.l.bf16 %v45
  %v110 = vunpack.c.l.bf16 %v46
  %v111 = vunpack.c.l.bf16 %v47
  %v112 = vunpack.c.l.bf16 %v48
  %v113 = vunpack.c.l.bf16 %v49
  %v114 = vunpack.c.l.bf16 %v50
  %v115 = vunpack.c.l.bf16 %v51
  %v116 = vunpack.c.l.bf16 %v52
  %v117 = vunpack.c.l.bf16 %v53
  %v118 = vunpack.c.l.bf16 %v54
  %v119 = vunpack.c.l.bf16 %v55
  %v120 = vunpack.c.l.bf16 %v56
  %v121 = vunpack.c.l.bf16 %v57
  %v122 = vunpack.c.l.bf16 %v58
  %v123 = vunpack.c.l.bf16 %v59
  %v124 = vunpack.c.l.bf16 %v60
  %v125 = vunpack.c.l.bf16 %v61
  %v126 = vunpack.c.l.bf16 %v62
  %v127 = vunpack.c.l.bf16 %v63
  %v128 = vunpack.c.l.bf16 %v64
  %v129 = vunpack.c.l.bf16 %v65
  %v130 = vunpack.c.l.bf16 %v66
  %v131 = vunpack.c.l.bf16 %v67
  %v132 = vunpack.c.l.bf16 %v68
  %v133 = vunpack.c.l.bf16 %v69
  %v134 = vunpack.c.l.bf16 %v70
  %v135 = vunpack.c.l.bf16 %v71
  %v136 = vunpack.c.l.bf16 %v72
  %v137 = vunpack.c.l.bf16 %v73
  %v138 = vunpack.c.l.bf16 %v74
  %v139 = vunpack.c.l.bf16 %v75
  %v140 = vunpack.c.l.bf16 %v76
  %v141 = vunpack.c.l.bf16 %v77
  %v142 = vunpack.c.l.bf16 %v78
  %v143 = vunpack.c.l.bf16 %v79
  %v144 = vunpack.c.l.bf16 %v80
  %v145 = vld [vmem:[%s1] sm:$0x1]
  %v147 = vlaneseq
  %v148 = vshrl.u32 %v147, 7
  %v149 = vsub.s32 0, %v148
  %v150 = vrot.slane %v145, %v149
  %v152 = vmul.f32 %v81, %v150
  %v153 = vmul.f32 %v82, %v150
  %v154 = vmul.f32 %v83, %v150
  %v155 = vmul.f32 %v84, %v150
  %v156 = vmul.f32 %v85, %v150
  %v157 = vmul.f32 %v86, %v150
  %v158 = vmul.f32 %v87, %v150
  %v159 = vmul.f32 %v88, %v150
  %v160 = vmul.f32 %v89, %v150
  %v161 = vmul.f32 %v90, %v150
  %v162 = vmul.f32 %v91, %v150
  %v163 = vmul.f32 %v92, %v150
  %v164 = vmul.f32 %v93, %v150
  %v165 = vmul.f32 %v94, %v150
  %v166 = vmul.f32 %v95, %v150
  %v167 = vmul.f32 %v96, %v150
  %v168 = vmul.f32 %v97, %v150
  %v169 = vmul.f32 %v98, %v150
  %v170 = vmul.f32 %v99, %v150
  %v171 = vmul.f32 %v100, %v150
  %v172 = vmul.f32 %v101, %v150
  %v173 = vmul.f32 %v102, %v150
  %v174 = vmul.f32 %v103, %v150
  %v175 = vmul.f32 %v104, %v150
  %v176 = vmul.f32 %v105, %v150
  %v177 = vmul.f32 %v106, %v150
  %v178 = vmul.f32 %v107, %v150
  %v179 = vmul.f32 %v108, %v150
  %v180 = vmul.f32 %v109, %v150
  %v181 = vmul.f32 %v110, %v150
  %v182 = vmul.f32 %v111, %v150
  %v183 = vmul.f32 %v112, %v150
  %v184 = vmul.f32 %v113, %v150
  %v185 = vmul.f32 %v114, %v150
  %v186 = vmul.f32 %v115, %v150
  %v187 = vmul.f32 %v116, %v150
  %v188 = vmul.f32 %v117, %v150
  %v189 = vmul.f32 %v118, %v150
  %v190 = vmul.f32 %v119, %v150
  %v191 = vmul.f32 %v120, %v150
  %v192 = vmul.f32 %v121, %v150
  %v193 = vmul.f32 %v122, %v150
  %v194 = vmul.f32 %v123, %v150
  %v195 = vmul.f32 %v124, %v150
  %v196 = vmul.f32 %v125, %v150
  %v197 = vmul.f32 %v126, %v150
  %v198 = vmul.f32 %v127, %v150
  %v199 = vmul.f32 %v128, %v150
  %v200 = vmul.f32 %v129, %v150
  %v201 = vmul.f32 %v130, %v150
  %v202 = vmul.f32 %v131, %v150
  %v203 = vmul.f32 %v132, %v150
  %v204 = vmul.f32 %v133, %v150
  %v205 = vmul.f32 %v134, %v150
  %v206 = vmul.f32 %v135, %v150
  %v207 = vmul.f32 %v136, %v150
  %v208 = vmul.f32 %v137, %v150
  %v209 = vmul.f32 %v138, %v150
  %v210 = vmul.f32 %v139, %v150
  %v211 = vmul.f32 %v140, %v150
  %v212 = vmul.f32 %v141, %v150
  %v213 = vmul.f32 %v142, %v150
  %v214 = vmul.f32 %v143, %v150
  %v215 = vmul.f32 %v144, %v150
  %v216 = vld [vmem:[%s2] sm:$0x1]
  %v218 = vlaneseq
  %v219 = vshrl.u32 %v218, 7
  %v220 = vsub.s32 0, %v219
  %v221 = vrot.slane %v216, %v220
  %v223 = vadd.f32 %v152, %v221
  %v224 = vadd.f32 %v153, %v221
  %v225 = vadd.f32 %v154, %v221
  %v226 = vadd.f32 %v155, %v221
  %v227 = vadd.f32 %v156, %v221
  %v228 = vadd.f32 %v157, %v221
  %v229 = vadd.f32 %v158, %v221
  %v230 = vadd.f32 %v159, %v221
  %v231 = vadd.f32 %v160, %v221
  %v232 = vadd.f32 %v161, %v221
  %v233 = vadd.f32 %v162, %v221
  %v234 = vadd.f32 %v163, %v221
  %v235 = vadd.f32 %v164, %v221
  %v236 = vadd.f32 %v165, %v221
  %v237 = vadd.f32 %v166, %v221
  %v238 = vadd.f32 %v167, %v221
  %v239 = vadd.f32 %v168, %v221
  %v240 = vadd.f32 %v169, %v221
  %v241 = vadd.f32 %v170, %v221
  %v242 = vadd.f32 %v171, %v221
  %v243 = vadd.f32 %v172, %v221
  %v244 = vadd.f32 %v173, %v221
  %v245 = vadd.f32 %v174, %v221
  %v246 = vadd.f32 %v175, %v221
  %v247 = vadd.f32 %v176, %v221
  %v248 = vadd.f32 %v177, %v221
  %v249 = vadd.f32 %v178, %v221
  %v250 = vadd.f32 %v179, %v221
  %v251 = vadd.f32 %v180, %v221
  %v252 = vadd.f32 %v181, %v221
  %v253 = vadd.f32 %v182, %v221
  %v254 = vadd.f32 %v183, %v221
  %v255 = vadd.f32 %v184, %v221
  %v256 = vadd.f32 %v185, %v221
  %v257 = vadd.f32 %v186, %v221
  %v258 = vadd.f32 %v187, %v221
  %v259 = vadd.f32 %v188, %v221
  %v260 = vadd.f32 %v189, %v221
  %v261 = vadd.f32 %v190, %v221
  %v262 = vadd.f32 %v191, %v221
  %v263 = vadd.f32 %v192, %v221
  %v264 = vadd.f32 %v193, %v221
  %v265 = vadd.f32 %v194, %v221
  %v266 = vadd.f32 %v195, %v221
  %v267 = vadd.f32 %v196, %v221
  %v268 = vadd.f32 %v197, %v221
  %v269 = vadd.f32 %v198, %v221
  %v270 = vadd.f32 %v199, %v221
  %v271 = vadd.f32 %v200, %v221
  %v272 = vadd.f32 %v201, %v221
  %v273 = vadd.f32 %v202, %v221
  %v274 = vadd.f32 %v203, %v221
  %v275 = vadd.f32 %v204, %v221
  %v276 = vadd.f32 %v205, %v221
  %v277 = vadd.f32 %v206, %v221
  %v278 = vadd.f32 %v207, %v221
  %v279 = vadd.f32 %v208, %v221
  %v280 = vadd.f32 %v209, %v221
  %v281 = vadd.f32 %v210, %v221
  %v282 = vadd.f32 %v211, %v221
  %v283 = vadd.f32 %v212, %v221
  %v284 = vadd.f32 %v213, %v221
  %v285 = vadd.f32 %v214, %v221
  %v286 = vadd.f32 %v215, %v221
  %v287 = vld [vmem:[%s3] sm:$0xff]
  %v288 = vld [vmem:[%s3 + $0x8] sm:$0xff]
  %v289 = vld [vmem:[%s3 + $0x10] sm:$0xff]
  %v290 = vld [vmem:[%s3 + $0x18] sm:$0xff]
  %v291 = vld [vmem:[%s3 + $0x20] sm:$0xff]
  %v292 = vld [vmem:[%s3 + $0x28] sm:$0xff]
  %v293 = vld [vmem:[%s3 + $0x30] sm:$0xff]
  %v294 = vld [vmem:[%s3 + $0x38] sm:$0xff]
  %v295 = vld [vmem:[%s3 + $0x40] sm:$0xff]
  %v296 = vld [vmem:[%s3 + $0x48] sm:$0xff]
  %v297 = vld [vmem:[%s3 + $0x50] sm:$0xff]
  %v298 = vld [vmem:[%s3 + $0x58] sm:$0xff]
  %v299 = vld [vmem:[%s3 + $0x60] sm:$0xff]
  %v300 = vld [vmem:[%s3 + $0x68] sm:$0xff]
  %v301 = vld [vmem:[%s3 + $0x70] sm:$0xff]
  %v302 = vld [vmem:[%s3 + $0x78] sm:$0xff]
  %v303 = vld [vmem:[%s3 + $0x80] sm:$0xff]
  %v304 = vld [vmem:[%s3 + $0x88] sm:$0xff]
  %v305 = vld [vmem:[%s3 + $0x90] sm:$0xff]
  %v306 = vld [vmem:[%s3 + $0x98] sm:$0xff]
  %v307 = vld [vmem:[%s3 + $0xa0] sm:$0xff]
  %v308 = vld [vmem:[%s3 + $0xa8] sm:$0xff]
  %v309 = vld [vmem:[%s3 + $0xb0] sm:$0xff]
  %v310 = vld [vmem:[%s3 + $0xb8] sm:$0xff]
  %v311 = vld [vmem:[%s3 + $0xc0] sm:$0xff]
  %v312 = vld [vmem:[%s3 + $0xc8] sm:$0xff]
  %v313 = vld [vmem:[%s3 + $0xd0] sm:$0xff]
  %v314 = vld [vmem:[%s3 + $0xd8] sm:$0xff]
  %v315 = vld [vmem:[%s3 + $0xe0] sm:$0xff]
  %v316 = vld [vmem:[%s3 + $0xe8] sm:$0xff]
  %v317 = vld [vmem:[%s3 + $0xf0] sm:$0xff]
  %v318 = vld [vmem:[%s3 + $0xf8] sm:$0xff]
  %v319 = vld [vmem:[%s3 + $0x100] sm:$0xff]
  %v320 = vld [vmem:[%s3 + $0x108] sm:$0xff]
  %v321 = vld [vmem:[%s3 + $0x110] sm:$0xff]
  %v322 = vld [vmem:[%s3 + $0x118] sm:$0xff]
  %v323 = vld [vmem:[%s3 + $0x120] sm:$0xff]
  %v324 = vld [vmem:[%s3 + $0x128] sm:$0xff]
  %v325 = vld [vmem:[%s3 + $0x130] sm:$0xff]
  %v326 = vld [vmem:[%s3 + $0x138] sm:$0xff]
  %v327 = vld [vmem:[%s3 + $0x140] sm:$0xff]
  %v328 = vld [vmem:[%s3 + $0x148] sm:$0xff]
  %v329 = vld [vmem:[%s3 + $0x150] sm:$0xff]
  %v330 = vld [vmem:[%s3 + $0x158] sm:$0xff]
  %v331 = vld [vmem:[%s3 + $0x160] sm:$0xff]
  %v332 = vld [vmem:[%s3 + $0x168] sm:$0xff]
  %v333 = vld [vmem:[%s3 + $0x170] sm:$0xff]
  %v334 = vld [vmem:[%s3 + $0x178] sm:$0xff]
  %v335 = vld [vmem:[%s3 + $0x180] sm:$0xff]
  %v336 = vld [vmem:[%s3 + $0x188] sm:$0xff]
  %v337 = vld [vmem:[%s3 + $0x190] sm:$0xff]
  %v338 = vld [vmem:[%s3 + $0x198] sm:$0xff]
  %v339 = vld [vmem:[%s3 + $0x1a0] sm:$0xff]
  %v340 = vld [vmem:[%s3 + $0x1a8] sm:$0xff]
  %v341 = vld [vmem:[%s3 + $0x1b0] sm:$0xff]
  %v342 = vld [vmem:[%s3 + $0x1b8] sm:$0xff]
  %v343 = vld [vmem:[%s3 + $0x1c0] sm:$0xff]
  %v344 = vld [vmem:[%s3 + $0x1c8] sm:$0xff]
  %v345 = vld [vmem:[%s3 + $0x1d0] sm:$0xff]
  %v346 = vld [vmem:[%s3 + $0x1d8] sm:$0xff]
  %v347 = vld [vmem:[%s3 + $0x1e0] sm:$0xff]
  %v348 = vld [vmem:[%s3 + $0x1e8] sm:$0xff]
  %v349 = vld [vmem:[%s3 + $0x1f0] sm:$0xff]
  %v350 = vld [vmem:[%s3 + $0x1f8] sm:$0xff]
  %v351 = vadd.f32 %v287, %v223
  %v352 = vadd.f32 %v288, %v224
  %v353 = vadd.f32 %v289, %v225
  %v354 = vadd.f32 %v290, %v226
  %v355 = vadd.f32 %v291, %v227
  %v356 = vadd.f32 %v292, %v228
  %v357 = vadd.f32 %v293, %v229
  %v358 = vadd.f32 %v294, %v230
  %v359 = vadd.f32 %v295, %v231
  %v360 = vadd.f32 %v296, %v232
  %v361 = vadd.f32 %v297, %v233
  %v362 = vadd.f32 %v298, %v234
  %v363 = vadd.f32 %v299, %v235
  %v364 = vadd.f32 %v300, %v236
  %v365 = vadd.f32 %v301, %v237
  %v366 = vadd.f32 %v302, %v238
  %v367 = vadd.f32 %v303, %v239
  %v368 = vadd.f32 %v304, %v240
  %v369 = vadd.f32 %v305, %v241
  %v370 = vadd.f32 %v306, %v242
  %v371 = vadd.f32 %v307, %v243
  %v372 = vadd.f32 %v308, %v244
  %v373 = vadd.f32 %v309, %v245
  %v374 = vadd.f32 %v310, %v246
  %v375 = vadd.f32 %v311, %v247
  %v376 = vadd.f32 %v312, %v248
  %v377 = vadd.f32 %v313, %v249
  %v378 = vadd.f32 %v314, %v250
  %v379 = vadd.f32 %v315, %v251
  %v380 = vadd.f32 %v316, %v252
  %v381 = vadd.f32 %v317, %v253
  %v382 = vadd.f32 %v318, %v254
  %v383 = vadd.f32 %v319, %v255
  %v384 = vadd.f32 %v320, %v256
  %v385 = vadd.f32 %v321, %v257
  %v386 = vadd.f32 %v322, %v258
  %v387 = vadd.f32 %v323, %v259
  %v388 = vadd.f32 %v324, %v260
  %v389 = vadd.f32 %v325, %v261
  %v390 = vadd.f32 %v326, %v262
  %v391 = vadd.f32 %v327, %v263
  %v392 = vadd.f32 %v328, %v264
  %v393 = vadd.f32 %v329, %v265
  %v394 = vadd.f32 %v330, %v266
  %v395 = vadd.f32 %v331, %v267
  %v396 = vadd.f32 %v332, %v268
  %v397 = vadd.f32 %v333, %v269
  %v398 = vadd.f32 %v334, %v270
  %v399 = vadd.f32 %v335, %v271
  %v400 = vadd.f32 %v336, %v272
  %v401 = vadd.f32 %v337, %v273
  %v402 = vadd.f32 %v338, %v274
  %v403 = vadd.f32 %v339, %v275
  %v404 = vadd.f32 %v340, %v276
  %v405 = vadd.f32 %v341, %v277
  %v406 = vadd.f32 %v342, %v278
  %v407 = vadd.f32 %v343, %v279
  %v408 = vadd.f32 %v344, %v280
  %v409 = vadd.f32 %v345, %v281
  %v410 = vadd.f32 %v346, %v282
  %v411 = vadd.f32 %v347, %v283
  %v412 = vadd.f32 %v348, %v284
  %v413 = vadd.f32 %v349, %v285
  %v414 = vadd.f32 %v350, %v286
  %415 = vst [vmem:[%s4] sm:$0xff] %v351
  %416 = vst [vmem:[%s4 + $0x8] sm:$0xff] %v352
  %417 = vst [vmem:[%s4 + $0x10] sm:$0xff] %v353
  %418 = vst [vmem:[%s4 + $0x18] sm:$0xff] %v354
  %419 = vst [vmem:[%s4 + $0x20] sm:$0xff] %v355
  %420 = vst [vmem:[%s4 + $0x28] sm:$0xff] %v356
  %421 = vst [vmem:[%s4 + $0x30] sm:$0xff] %v357
  %422 = vst [vmem:[%s4 + $0x38] sm:$0xff] %v358
  %423 = vst [vmem:[%s4 + $0x40] sm:$0xff] %v359
  %424 = vst [vmem:[%s4 + $0x48] sm:$0xff] %v360
  %425 = vst [vmem:[%s4 + $0x50] sm:$0xff] %v361
  %426 = vst [vmem:[%s4 + $0x58] sm:$0xff] %v362
  %427 = vst [vmem:[%s4 + $0x60] sm:$0xff] %v363
  %428 = vst [vmem:[%s4 + $0x68] sm:$0xff] %v364
  %429 = vst [vmem:[%s4 + $0x70] sm:$0xff] %v365
  %430 = vst [vmem:[%s4 + $0x78] sm:$0xff] %v366
  %431 = vst [vmem:[%s4 + $0x80] sm:$0xff] %v367
  %432 = vst [vmem:[%s4 + $0x88] sm:$0xff] %v368
  %433 = vst [vmem:[%s4 + $0x90] sm:$0xff] %v369
  %434 = vst [vmem:[%s4 + $0x98] sm:$0xff] %v370
  %435 = vst [vmem:[%s4 + $0xa0] sm:$0xff] %v371
  %436 = vst [vmem:[%s4 + $0xa8] sm:$0xff] %v372
  %437 = vst [vmem:[%s4 + $0xb0] sm:$0xff] %v373
  %438 = vst [vmem:[%s4 + $0xb8] sm:$0xff] %v374
  %439 = vst [vmem:[%s4 + $0xc0] sm:$0xff] %v375
  %440 = vst [vmem:[%s4 + $0xc8] sm:$0xff] %v376
  %441 = vst [vmem:[%s4 + $0xd0] sm:$0xff] %v377
  %442 = vst [vmem:[%s4 + $0xd8] sm:$0xff] %v378
  %443 = vst [vmem:[%s4 + $0xe0] sm:$0xff] %v379
  %444 = vst [vmem:[%s4 + $0xe8] sm:$0xff] %v380
  %445 = vst [vmem:[%s4 + $0xf0] sm:$0xff] %v381
  %446 = vst [vmem:[%s4 + $0xf8] sm:$0xff] %v382
  %447 = vst [vmem:[%s4 + $0x100] sm:$0xff] %v383
  %448 = vst [vmem:[%s4 + $0x108] sm:$0xff] %v384
  %449 = vst [vmem:[%s4 + $0x110] sm:$0xff] %v385
  %450 = vst [vmem:[%s4 + $0x118] sm:$0xff] %v386
  %451 = vst [vmem:[%s4 + $0x120] sm:$0xff] %v387
  %452 = vst [vmem:[%s4 + $0x128] sm:$0xff] %v388
  %453 = vst [vmem:[%s4 + $0x130] sm:$0xff] %v389
  %454 = vst [vmem:[%s4 + $0x138] sm:$0xff] %v390
  %455 = vst [vmem:[%s4 + $0x140] sm:$0xff] %v391
  %456 = vst [vmem:[%s4 + $0x148] sm:$0xff] %v392
  %457 = vst [vmem:[%s4 + $0x150] sm:$0xff] %v393
  %458 = vst [vmem:[%s4 + $0x158] sm:$0xff] %v394
  %459 = vst [vmem:[%s4 + $0x160] sm:$0xff] %v395
  %460 = vst [vmem:[%s4 + $0x168] sm:$0xff] %v396
  %461 = vst [vmem:[%s4 + $0x170] sm:$0xff] %v397
  %462 = vst [vmem:[%s4 + $0x178] sm:$0xff] %v398
  %463 = vst [vmem:[%s4 + $0x180] sm:$0xff] %v399
  %464 = vst [vmem:[%s4 + $0x188] sm:$0xff] %v400
  %465 = vst [vmem:[%s4 + $0x190] sm:$0xff] %v401
  %466 = vst [vmem:[%s4 + $0x198] sm:$0xff] %v402
  %467 = vst [vmem:[%s4 + $0x1a0] sm:$0xff] %v403
  %468 = vst [vmem:[%s4 + $0x1a8] sm:$0xff] %v404
  %469 = vst [vmem:[%s4 + $0x1b0] sm:$0xff] %v405
  %470 = vst [vmem:[%s4 + $0x1b8] sm:$0xff] %v406
  %471 = vst [vmem:[%s4 + $0x1c0] sm:$0xff] %v407
  %472 = vst [vmem:[%s4 + $0x1c8] sm:$0xff] %v408
  %473 = vst [vmem:[%s4 + $0x1d0] sm:$0xff] %v409
  %474 = vst [vmem:[%s4 + $0x1d8] sm:$0xff] %v410
  %475 = vst [vmem:[%s4 + $0x1e0] sm:$0xff] %v411
  %476 = vst [vmem:[%s4 + $0x1e8] sm:$0xff] %v412
  %477 = vst [vmem:[%s4 + $0x1f0] sm:$0xff] %v413
  %478 = vst [vmem:[%s4 + $0x1f8] sm:$0xff] %v414
  // Predicated region
  $region18: #{resnet_block_forward.7} parent=0 // pred_check
    _
  $region19: #{resnet_block_forward.7} parent=0 // pred_check_branch
    %480 = sbr.rel (0) target = $region21
  $region20: #{resnet_block_forward.7} parent=0 // pred_region
    _
  $region21: #{resnet_block_forward.7} parent=0 // pred_fallthru
    _
  // Predicated region
  $region22: #{resnet_block_forward.7} parent=0 // pred_check
    _
  $region23: #{resnet_block_forward.7} parent=0 // pred_check_branch
    %482 = sbr.rel (0) target = $region25
  $region24: #{resnet_block_forward.7} parent=0 // pred_region
    _
  $region25: #{resnet_block_forward.7} parent=0 // pred_fallthru
    _

// kernel: resnet_block_forward.4
$region0: #{resnet_block_forward.4}
  #allocation0 [shape = 'u32[]', space=smem, size = 0x4, offset = 0x4, fixed_abs, tag = 'smem constant byte address 0x4 - core index']
  #allocation1 [shape = 'u32[144,128]{1,0:T(1,128)}', space=vmem, size = 0x12000, scoped, tag = 'internal scratch']
  %s0 = inlined_call_operand.vmem [shape: bf16[2,18,18,128], index: 0, kind: input, shape index: {}]
  %s1 = inlined_call_operand.vmem [shape: bf16[9,128,128], index: 1, kind: input, shape index: {}]
  %s2 = inlined_call_operand.vmem [shape: bf16[2,16,16,128], index: 2, kind: output, shape index: {0}]
  %s3 = inlined_call_operand.vmem [shape: f32[2,1,8,128], index: 3, kind: output, shape index: {1}]
  %s4 = inlined_call_operand.vmem [shape: f32[2,1,8,128], index: 4, kind: output, shape index: {2}]
  %5 = xla_tuple %s2, %s3, %s4
  %s6 = sld [smem:[#allocation0]]
  $region57: #{resnet_block_forward.4} parent=0
    _
  %s8 = ssub.s32 1, %s6
  %s9 = scalar_select 0, %s8, %s6
  loop: start=0, step=1, limit=4
  $region2: #{resnet_block_forward.4} parent=0 // loop_pre_header
    _
  $region3: #{resnet_block_forward.4} parent=0 // loop_header
    %s11 = sphi 0, %s15
    %p12 = scmp.ge.s32.totalorder %s11, 4
    %s18 = sphi 0, %s30
    %s19 = sphi 0, %s26
    %s20 = sphi 0, %s18
    %s21 = sphi 0, %s19
    %s22 = sphi 0, %s20
    %s23 = sphi 0, %s21
    %s33 = sphi 0, %s35
    %s36 = sphi 0, %s33
    %s37 = sphi 0, %s36
    %s53 = sphi 0, %s37
    %s57 = sphi 0, %s57
    %s59 = sphi 0, %s57
    %s60 = sphi 0, %s59
    %s74 = sphi 0, %s60
    %s82 = sphi 0, %s84
    %s85 = sphi 0, %s82
    %s86 = sphi 0, %s85
    %s102 = sphi 0, %s86
    %s110 = sphi 0, %s112
    %s113 = sphi 0, %s110
    %s114 = sphi 0, %s113
    %s130 = sphi 0, %s114
    %s138 = sphi 0, %s140
    %s141 = sphi 0, %s138
    %s142 = sphi 0, %s141
    %s158 = sphi 0, %s142
  $region4: #{resnet_block_forward.4} parent=0 // loop_header_branch
    %14 = sbr.rel (%p12) target = $region8
  $region5: #{resnet_block_forward.4} parent=0 // loop_body
    %s16 = ssub.s32 %s11, 1
    %s17 = ssub.s32 %s11, 2
    %s24 = sadd.s32 1, %s19
    %p25 = scmp.ge.s32.totalorder %s24, 1
    %s26 = scalar_select %p25, 0, %s24
    %s27 = sadd.s32 1, %s18
    %s28 = scalar_select %p25, %s27, %s18
    %p29 = scmp.ge.s32.totalorder %s28, 2
    %s30 = scalar_select %p29, 0, %s28
    %s31 = ssub.s32 %s18, %s30
    %p32 = scmp.eq.s32.totalorder %s31, 0
    %s34 = sadd.s32 %s33, 1
    %s35 = scalar_select %p32, %s33, %s34
    %p38 = pneg %p32
    %p39 = scmp.eq.s32.totalorder %s11, 1
    %p40 = por %p38, %p39
    %p41 = scmp.ne.s32.totalorder %s33, %s36
    %p42 = scmp.eq.s32.totalorder %s11, 0
    %p43 = por %p41, %p42
    %p44 = scmp.ne.s32.totalorder %s33, %s36
    %p45 = scmp.eq.s32.totalorder %s16, 1
    %p46 = por %p44, %p45
    %p47 = scmp.ne.s32.totalorder %s36, %s37
    %p48 = scmp.eq.s32.totalorder %s16, 0
    %p49 = por %p47, %p48
    %p50 = scmp.ne.s32.totalorder %s36, %s37
    %p51 = scmp.eq.s32.totalorder %s17, 1
    %p52 = por %p50, %p51
    %p54 = scmp.ne.s32.totalorder %s37, %s53
    %p55 = scmp.eq.s32.totalorder %s17, 0
    %p56 = por %p54, %p55
    %s58 = sadd.s32 %s57, 1
    %p61 = scmp.eq.s32.totalorder %s11, 1
    %p62 = scmp.ne.s32.totalorder %s57, %s59
    %p63 = scmp.eq.s32.totalorder %s11, 0
    %p64 = por %p62, %p63
    %p65 = scmp.ne.s32.totalorder %s57, %s59
    %p66 = scmp.eq.s32.totalorder %s16, 1
    %p67 = por %p65, %p66
    %p68 = scmp.ne.s32.totalorder %s59, %s60
    %p69 = scmp.eq.s32.totalorder %s16, 0
    %p70 = por %p68, %p69
    %p71 = scmp.ne.s32.totalorder %s59, %s60
    %p72 = scmp.eq.s32.totalorder %s17, 1
    %p73 = por %p71, %p72
    %p75 = scmp.ne.s32.totalorder %s60, %s74
    %p76 = scmp.eq.s32.totalorder %s17, 0
    %p77 = por %p75, %p76
    %s78 = ssub.s32 %s18, %s30
    %s79 = ssub.s32 %s19, %s26
    %s80 = sor.u32 %s78, %s79
    %p81 = scmp.eq.s32.totalorder %s80, 0
    %s83 = sadd.s32 %s82, 1
    %s84 = scalar_select %p81, %s82, %s83
    %p87 = pneg %p81
    %p88 = scmp.eq.s32.totalorder %s11, 1
    %p89 = por %p87, %p88
    %p90 = scmp.ne.s32.totalorder %s82, %s85
    %p91 = scmp.eq.s32.totalorder %s11, 0
    %p92 = por %p90, %p91
    %p93 = scmp.ne.s32.totalorder %s82, %s85
    %p94 = scmp.eq.s32.totalorder %s16, 1
    %p95 = por %p93, %p94
    %p96 = scmp.ne.s32.totalorder %s85, %s86
    %p97 = scmp.eq.s32.totalorder %s16, 0
    %p98 = por %p96, %p97
    %p99 = scmp.ne.s32.totalorder %s85, %s86
    %p100 = scmp.eq.s32.totalorder %s17, 1
    %p101 = por %p99, %p100
    %p103 = scmp.ne.s32.totalorder %s86, %s102
    %p104 = scmp.eq.s32.totalorder %s17, 0
    %p105 = por %p103, %p104
    %s106 = ssub.s32 %s18, %s30
    %s107 = ssub.s32 %s19, %s26
    %s108 = sor.u32 %s106, %s107
    %p109 = scmp.eq.s32.totalorder %s108, 0
    %s111 = sadd.s32 %s110, 1
    %s112 = scalar_select %p109, %s110, %s111
    %p115 = pneg %p109
    %p116 = scmp.eq.s32.totalorder %s11, 1
    %p117 = por %p115, %p116
    %p118 = scmp.ne.s32.totalorder %s110, %s113
    %p119 = scmp.eq.s32.totalorder %s11, 0
    %p120 = por %p118, %p119
    %p121 = scmp.ne.s32.totalorder %s110, %s113
    %p122 = scmp.eq.s32.totalorder %s16, 1
    %p123 = por %p121, %p122
    %p124 = scmp.ne.s32.totalorder %s113, %s114
    %p125 = scmp.eq.s32.totalorder %s16, 0
    %p126 = por %p124, %p125
    %p127 = scmp.ne.s32.totalorder %s113, %s114
    %p128 = scmp.eq.s32.totalorder %s17, 1
    %p129 = por %p127, %p128
    %p131 = scmp.ne.s32.totalorder %s114, %s130
    %p132 = scmp.eq.s32.totalorder %s17, 0
    %p133 = por %p131, %p132
    %s134 = ssub.s32 %s18, %s30
    %s135 = ssub.s32 %s19, %s26
    %s136 = sor.u32 %s134, %s135
    %p137 = scmp.eq.s32.totalorder %s136, 0
    %s139 = sadd.s32 %s138, 1
    %s140 = scalar_select %p137, %s138, %s139
    %p143 = pneg %p137
    %p144 = scmp.eq.s32.totalorder %s11, 1
    %p145 = por %p143, %p144
    %p146 = scmp.ne.s32.totalorder %s138, %s141
    %p147 = scmp.eq.s32.totalorder %s11, 0
    %p148 = por %p146, %p147
    %p149 = scmp.ne.s32.totalorder %s138, %s141
    %p150 = scmp.eq.s32.totalorder %s16, 1
    %p151 = por %p149, %p150
    %p152 = scmp.ne.s32.totalorder %s141, %s142
    %p153 = scmp.eq.s32.totalorder %s16, 0
    %p154 = por %p152, %p153
    %p155 = scmp.ne.s32.totalorder %s141, %s142
    %p156 = scmp.eq.s32.totalorder %s17, 1
    %p157 = por %p155, %p156
    %p159 = scmp.ne.s32.totalorder %s142, %s158
    %p160 = scmp.eq.s32.totalorder %s17, 0
    %p161 = por %p159, %p160
    %p162 = scmp.le.s32.totalorder 1, %s11
    %p163 = scmp.lt.s32.totalorder %s11, 3
    %p164 = pnand %p162, %p163
    %p165 = pneg %p164
    // Predicated region
    $region9: #{resnet_block_forward.4} parent=5 // pred_check
      _
    $region10: #{resnet_block_forward.4} parent=5 // pred_check_branch
      %167 = sbr.rel (%p164) target = $region12
    $region11: #{resnet_block_forward.4} parent=5 // pred_region
      %s168 = ssub.s32 %s11, 1
      // Predicated region
      $region13: #{resnet_block_forward.4} parent=11 // pred_check
        %p169 = pneg %p70
      $region14: #{resnet_block_forward.4} parent=11 // pred_check_branch
        %171 = sbr.rel (%p169) target = $region16
      $region15: #{resnet_block_forward.4} parent=11 // pred_region
        _
      $region16: #{resnet_block_forward.4} parent=11 // pred_fallthru
        _
    $region12: #{resnet_block_forward.4} parent=5 // pred_fallthru
      _
    %p172 = scmp.lt.s32.totalorder %s11, 2
    // Predicated region
    $region17: #{resnet_block_forward.4} parent=5 // pred_check
      %p173 = pneg %p172
    $region18: #{resnet_block_forward.4} parent=5 // pred_check_branch
      %175 = sbr.rel (%p173) target = $region20
    $region19: #{resnet_block_forward.4} parent=5 // pred_region
      // Predicated region
      $region21: #{resnet_block_forward.4} parent=19 // pred_check
        %p176 = pneg %p43
      $region22: #{resnet_block_forward.4} parent=19 // pred_check_branch
        %178 = sbr.rel (%p176) target = $region24
      $region23: #{resnet_block_forward.4} parent=19 // pred_region
        %p179 = scmp.lt.s32.totalorder %s18, 1
        %s180 = scalar_select %p179, %s18, 1
        %s181 = smul.addr %s180, 54
        %s182 = smul.addr %s181, 4
        %s183 = scalar_lea.vmem %s0, %s182
      $region24: #{resnet_block_forward.4} parent=19 // pred_fallthru
        _
    $region20: #{resnet_block_forward.4} parent=5 // pred_fallthru
      _
    %p184 = scmp.le.s32.totalorder 1, %s11
    %p185 = scmp.lt.s32.totalorder %s11, 3
    %p186 = pnand %p184, %p185
    %p187 = pneg %p186
    // Predicated region
    $region25: #{resnet_block_forward.4} parent=5 // pred_check
      _
    $region26: #{resnet_block_forward.4} parent=5 // pred_check_branch
      %189 = sbr.rel (%p186) target = $region28
    $region27: #{resnet_block_forward.4} parent=5 // pred_region
      %s190 = ssub.s32 %s11, 1
      %p191 = scmp.lt.s32.totalorder %s20, 1
      %s192 = scalar_select %p191, %s20, 1
      %s193 = smul.addr %s192, 54
      %s194 = smul.addr %s193, 4
      %s195 = scalar_lea.vmem %s0, %s194
      %p196 = pneg %p49
      %p197 = pneg %p46
      %p198 = pneg %p70
      %p199 = pneg %p67
      %p200 = pneg %p98
      %p201 = pneg %p95
      %s202 = smul.u32 16, %s21
      %p203 = scmp.lt.s32.totalorder %s20, 1
      %s204 = scalar_select %p203, %s20, 1
      %p205 = scmp.lt.s32.totalorder %s202, 15
      %s206 = scalar_select %p205, %s202, 15
      %s207 = smul.addr %s206, 2
      %s208 = smul.addr %s204, 32
      %s209 = sadd.s32 %s207, %s208
      %s210 = smul.addr %s209, 4
      %s211 = scalar_lea.vmem %s2, %s210
      %p212 = pneg %p126
      %p213 = pneg %p123
      %p214 = scmp.lt.s32.totalorder %s20, 1
      %s215 = scalar_select %p214, %s20, 1
      %p216 = scmp.lt.s32.totalorder %s21, 0
      %s217 = scalar_select %p216, %s21, 0
      %s218 = sadd.s32 %s217, %s215
      %s219 = smul.addr %s218, 8
      %s220 = scalar_lea.vmem %s3, %s219
      %p221 = pneg %p154
      %p222 = pneg %p151
      %p223 = scmp.lt.s32.totalorder %s20, 1
      %s224 = scalar_select %p223, %s20, 1
      %p225 = scmp.lt.s32.totalorder %s21, 0
      %s226 = scalar_select %p225, %s21, 0
      %s227 = sadd.s32 %s226, %s224
      %s228 = smul.addr %s227, 8
      %s229 = scalar_lea.vmem %s4, %s228
      %p230 = scmp.lt.s32.totalorder %s20, 1
      %s231 = scalar_select %p230, %s20, 1
      %s232 = smul.addr %s231, 54
      %s233 = smul.addr %s232, 4
      %s234 = scalar_lea.vmem %s0, %s233
      %s235 = smul.u32 16, %s21
      %p236 = scmp.lt.s32.totalorder %s20, 1
      %s237 = scalar_select %p236, %s20, 1
      %p238 = scmp.lt.s32.totalorder %s235, 15
      %s239 = scalar_select %p238, %s235, 15
      %s240 = smul.addr %s239, 2
      %s241 = smul.addr %s237, 32
      %s242 = sadd.s32 %s240, %s241
      %s243 = smul.addr %s242, 4
      %s244 = scalar_lea.vmem %s2, %s243
      %s245 = smul.u32 16, %s21
      %p246 = scmp.lt.s32.totalorder %s20, 1
      %s247 = scalar_select %p246, %s20, 1
      %p248 = scmp.lt.s32.totalorder %s21, 0
      %s249 = scalar_select %p248, %s21, 0
      %s250 = sadd.s32 %s249, %s247
      %s251 = smul.addr %s250, 8
      %s252 = scalar_lea.vmem %s3, %s251
      %p253 = scmp.lt.s32.totalorder %s20, 1
      %s254 = scalar_select %p253, %s20, 1
      %p255 = scmp.lt.s32.totalorder %s21, 0
      %s256 = scalar_select %p255, %s21, 0
      %s257 = sadd.s32 %s256, %s254
      %s258 = smul.addr %s257, 8
      %s259 = scalar_lea.vmem %s4, %s258
      %s261 = smul.u32 %s21, 16
      %s262 = smul.u32 %s261, 3
      %s263 = smul.addr %s262, 4
      %s264 = scalar_lea.vmem %s234, %s263
      %v265 = vld [vmem:[%s264] sm:$0xf]
      %v266 = vld [vmem:[%s264 + $0x4] sm:$0xf]
      %v267 = vld [vmem:[%s264 + $0x8] sm:$0x1]
      %v268 = vld [vmem:[%s264 + $0xc] sm:$0xf]
      %v269 = vld [vmem:[%s264 + $0x10] sm:$0xf]
      %v270 = vld [vmem:[%s264 + $0x14] sm:$0x1]
      %v271 = vld [vmem:[%s264 + $0x18] sm:$0xf]
      %v272 = vld [vmem:[%s264 + $0x1c] sm:$0xf]
      %v273 = vld [vmem:[%s264 + $0x20] sm:$0x1]
      %v274 = vld [vmem:[%s264 + $0x24] sm:$0xf]
      %v275 = vld [vmem:[%s264 + $0x28] sm:$0xf]
      %v276 = vld [vmem:[%s264 + $0x2c] sm:$0x1]
      %v277 = vld [vmem:[%s264 + $0x30] sm:$0xf]
      %v278 = vld [vmem:[%s264 + $0x34] sm:$0xf]
      %v279 = vld [vmem:[%s264 + $0x38] sm:$0x1]
      %v280 = vld [vmem:[%s264 + $0x3c] sm:$0xf]
      %v281 = vld [vmem:[%s264 + $0x40] sm:$0xf]
      %v282 = vld [vmem:[%s264 + $0x44] sm:$0x1]
      %v283 = vld [vmem:[%s264 + $0x48] sm:$0xf]
      %v284 = vld [vmem:[%s264 + $0x4c] sm:$0xf]
      %v285 = vld [vmem:[%s264 + $0x50] sm:$0x1]
      %v286 = vld [vmem:[%s264 + $0x54] sm:$0xf]
      %v287 = vld [vmem:[%s264 + $0x58] sm:$0xf]
      %v288 = vld [vmem:[%s264 + $0x5c] sm:$0x1]
      %v289 = vld [vmem:[%s264 + $0x60] sm:$0xf]
      %v290 = vld [vmem:[%s264 + $0x64] sm:$0xf]
      %v291 = vld [vmem:[%s264 + $0x68] sm:$0x1]
      %v292 = vld [vmem:[%s264 + $0x6c] sm:$0xf]
      %v293 = vld [vmem:[%s264 + $0x70] sm:$0xf]
      %v294 = vld [vmem:[%s264 + $0x74] sm:$0x1]
      %v295 = vld [vmem:[%s264 + $0x78] sm:$0xf]
      %v296 = vld [vmem:[%s264 + $0x7c] sm:$0xf]
      %v297 = vld [vmem:[%s264 + $0x80] sm:$0x1]
      %v298 = vld [vmem:[%s264 + $0x84] sm:$0xf]
      %v299 = vld [vmem:[%s264 + $0x88] sm:$0xf]
      %v300 = vld [vmem:[%s264 + $0x8c] sm:$0x1]
      %v301 = vld [vmem:[%s264 + $0x90] sm:$0xf]
      %v302 = vld [vmem:[%s264 + $0x94] sm:$0xf]
      %v303 = vld [vmem:[%s264 + $0x98] sm:$0x1]
      %v304 = vld [vmem:[%s264 + $0x9c] sm:$0xf]
      %v305 = vld [vmem:[%s264 + $0xa0] sm:$0xf]
      %v306 = vld [vmem:[%s264 + $0xa4] sm:$0x1]
      %v307 = vld [vmem:[%s264 + $0xa8] sm:$0xf]
      %v308 = vld [vmem:[%s264 + $0xac] sm:$0xf]
      %v309 = vld [vmem:[%s264 + $0xb0] sm:$0x1]
      %v310 = vld [vmem:[%s264 + $0xb4] sm:$0xf]
      %v311 = vld [vmem:[%s264 + $0xb8] sm:$0xf]
      %v312 = vld [vmem:[%s264 + $0xbc] sm:$0x1]
      %v313 = vld [vmem:[%s264 + $0xc0] sm:$0xf]
      %v314 = vld [vmem:[%s264 + $0xc4] sm:$0xf]
      %v315 = vld [vmem:[%s264 + $0xc8] sm:$0x1]
      %v316 = vld [vmem:[%s264 + $0xcc] sm:$0xf]
      %v317 = vld [vmem:[%s264 + $0xd0] sm:$0xf]
      %v318 = vld [vmem:[%s264 + $0xd4] sm:$0x1]
      %v319 = vld [vmem:[%s1] sm:$0xf]
      %v320 = vld [vmem:[%s1 + $0x4] sm:$0xf]
      %v321 = vld [vmem:[%s1 + $0x8] sm:$0xf]
      %v322 = vld [vmem:[%s1 + $0xc] sm:$0xf]
      %v323 = vld [vmem:[%s1 + $0x10] sm:$0xf]
      %v324 = vld [vmem:[%s1 + $0x14] sm:$0xf]
      %v325 = vld [vmem:[%s1 + $0x18] sm:$0xf]
      %v326 = vld [vmem:[%s1 + $0x1c] sm:$0xf]
      %v327 = vld [vmem:[%s1 + $0x20] sm:$0xf]
      %v328 = vld [vmem:[%s1 + $0x24] sm:$0xf]
      %v329 = vld [vmem:[%s1 + $0x28] sm:$0xf]
      %v330 = vld [vmem:[%s1 + $0x2c] sm:$0xf]
      %v331 = vld [vmem:[%s1 + $0x30] sm:$0xf]
      %v332 = vld [vmem:[%s1 + $0x34] sm:$0xf]
      %v333 = vld [vmem:[%s1 + $0x38] sm:$0xf]
      %v334 = vld [vmem:[%s1 + $0x3c] sm:$0xf]
      %vm335 = vsmask.f32 3328
      %vm336 = vsmask.f32 7440
      %vm337 = vmor %vm335, %vm336
      %v339 = vshrl.u32 %v265, 16
      %v341 = vrot.slane %v339, 4
      %v342 = vshll.u32 %v265, 16
      %v344 = vrot.slane %v342, 5
      %v345 = vor.u32 %v341, %v344
      %v346 = vrot.slane %v345, 4
      %v348 = vshll.u32 %v266, 16
      %v350 = vrot.slane %v348, 5
      %v351 = vsel %vm337, %v346, %v350
      %v352 = vshrl.u32 %v266, 16
      %v354 = vrot.slane %v352, 4
      %v355 = vor.u32 %v354, %v350
      %v356 = vrot.slane %v355, 4
      %v358 = vshll.u32 %v267, 16
      %v360 = vrot.slane %v358, 5
      %v361 = vsel %vm337, %v356, %v360
      %v363 = vshrl.u32 %v268, 16
      %v365 = vrot.slane %v363, 4
      %v366 = vshll.u32 %v268, 16
      %v368 = vrot.slane %v366, 5
      %v369 = vor.u32 %v365, %v368
      %v370 = vrot.slane %v369, 4
      %v372 = vshll.u32 %v269, 16
      %v374 = vrot.slane %v372, 5
      %v375 = vsel %vm337, %v370, %v374
      %v376 = vshrl.u32 %v269, 16
      %v378 = vrot.slane %v376, 4
      %v379 = vor.u32 %v378, %v374
      %v380 = vrot.slane %v379, 4
      %v382 = vshll.u32 %v270, 16
      %v384 = vrot.slane %v382, 5
      %v385 = vsel %vm337, %v380, %v384
      %v387 = vshrl.u32 %v271, 16
      %v389 = vrot.slane %v387, 4
      %v390 = vshll.u32 %v271, 16
      %v392 = vrot.slane %v390, 5
      %v393 = vor.u32 %v389, %v392
      %v394 = vrot.slane %v393, 4
      %v396 = vshll.u32 %v272, 16
      %v398 = vrot.slane %v396, 5
      %v399 = vsel %vm337, %v394, %v398
      %v400 = vshrl.u32 %v272, 16
      %v402 = vrot.slane %v400, 4
      %v403 = vor.u32 %v402, %v398
      %v404 = vrot.slane %v403, 4
      %v406 = vshll.u32 %v273, 16
      %v408 = vrot.slane %v406, 5
      %v409 = vsel %vm337, %v404, %v408
      %v411 = vshrl.u32 %v274, 16
      %v413 = vrot.slane %v411, 4
      %v414 = vshll.u32 %v274, 16
      %v416 = vrot.slane %v414, 5
      %v417 = vor.u32 %v413, %v416
      %v418 = vrot.slane %v417, 4
      %v420 = vshll.u32 %v275, 16
      %v422 = vrot.slane %v420, 5
      %v423 = vsel %vm337, %v418, %v422
      %v424 = vshrl.u32 %v275, 16
      %v426 = vrot.slane %v424, 4
      %v427 = vor.u32 %v426, %v422
      %v428 = vrot.slane %v427, 4
      %v430 = vshll.u32 %v276, 16
      %v432 = vrot.slane %v430, 5
      %v433 = vsel %vm337, %v428, %v432
      %v435 = vshrl.u32 %v277, 16
      %v437 = vrot.slane %v435, 4
      %v438 = vshll.u32 %v277, 16
      %v440 = vrot.slane %v438, 5
      %v441 = vor.u32 %v437, %v440
      %v442 = vrot.slane %v441, 4
      %v444 = vshll.u32 %v278, 16
      %v446 = vrot.slane %v444, 5
      %v447 = vsel %vm337, %v442, %v446
      %v448 = vshrl.u32 %v278, 16
      %v450 = vrot.slane %v448, 4
      %v451 = vor.u32 %v450, %v446
      %v452 = vrot.slane %v451, 4
      %v454 = vshll.u32 %v279, 16
      %v456 = vrot.slane %v454, 5
      %v457 = vsel %vm337, %v452, %v456
      %v459 = vshrl.u32 %v280, 16
      %v461 = vrot.slane %v459, 4
      %v462 = vshll.u32 %v280, 16
      %v464 = vrot.slane %v462, 5
      %v465 = vor.u32 %v461, %v464
      %v466 = vrot.slane %v465, 4
      %v468 = vshll.u32 %v281, 16
      %v470 = vrot.slane %v468, 5
      %v471 = vsel %vm337, %v466, %v470
      %v472 = vshrl.u32 %v281, 16
      %v474 = vrot.slane %v472, 4
      %v475 = vor.u32 %v474, %v470
      %v476 = vrot.slane %v475, 4
      %v478 = vshll.u32 %v282, 16
      %v480 = vrot.slane %v478, 5
      %v481 = vsel %vm337, %v476, %v480
      %v483 = vshrl.u32 %v283, 16
      %v485 = vrot.slane %v483, 4
      %v486 = vshll.u32 %v283, 16
      %v488 = vrot.slane %v486, 5
      %v489 = vor.u32 %v485, %v488
      %v490 = vrot.slane %v489, 4
      %v492 = vshll.u32 %v284, 16
      %v494 = vrot.slane %v492, 5
      %v495 = vsel %vm337, %v490, %v494
      %v496 = vshrl.u32 %v284, 16
      %v498 = vrot.slane %v496, 4
      %v499 = vor.u32 %v498, %v494
      %v500 = vrot.slane %v499, 4
      %v502 = vshll.u32 %v285, 16
      %v504 = vrot.slane %v502, 5
      %v505 = vsel %vm337, %v500, %v504
      %v507 = vshrl.u32 %v286, 16
      %v509 = vrot.slane %v507, 4
      %v510 = vshll.u32 %v286, 16
      %v512 = vrot.slane %v510, 5
      %v513 = vor.u32 %v509, %v512
      %v514 = vrot.slane %v513, 4
      %v516 = vshll.u32 %v287, 16
      %v518 = vrot.slane %v516, 5
      %v519 = vsel %vm337, %v514, %v518
      %v520 = vshrl.u32 %v287, 16
      %v522 = vrot.slane %v520, 4
      %v523 = vor.u32 %v522, %v518
      %v524 = vrot.slane %v523, 4
      %v526 = vshll.u32 %v288, 16
      %v528 = vrot.slane %v526, 5
      %v529 = vsel %vm337, %v524, %v528
      %v531 = vshrl.u32 %v289, 16
      %v533 = vrot.slane %v531, 4
      %v534 = vshll.u32 %v289, 16
      %v536 = vrot.slane %v534, 5
      %v537 = vor.u32 %v533, %v536
      %v538 = vrot.slane %v537, 4
      %v540 = vshll.u32 %v290, 16
      %v542 = vrot.slane %v540, 5
      %v543 = vsel %vm337, %v538, %v542
      %v544 = vshrl.u32 %v290, 16
      %v546 = vrot.slane %v544, 4
      %v547 = vor.u32 %v546, %v542
      %v548 = vrot.slane %v547, 4
      %v550 = vshll.u32 %v291, 16
      %v552 = vrot.slane %v550, 5
      %v553 = vsel %vm337, %v548, %v552
      %v555 = vshrl.u32 %v292, 16
      %v557 = vrot.slane %v555, 4
      %v558 = vshll.u32 %v292, 16
      %v560 = vrot.slane %v558, 5
      %v561 = vor.u32 %v557, %v560
      %v562 = vrot.slane %v561, 4
      %v564 = vshll.u32 %v293, 16
      %v566 = vrot.slane %v564, 5
      %v567 = vsel %vm337, %v562, %v566
      %v568 = vshrl.u32 %v293, 16
      %v570 = vrot.slane %v568, 4
      %v571 = vor.u32 %v570, %v566
      %v572 = vrot.slane %v571, 4
      %v574 = vshll.u32 %v294, 16
      %v576 = vrot.slane %v574, 5
      %v577 = vsel %vm337, %v572, %v576
      %v579 = vshrl.u32 %v295, 16
      %v581 = vrot.slane %v579, 4
      %v582 = vshll.u32 %v295, 16
      %v584 = vrot.slane %v582, 5
      %v585 = vor.u32 %v581, %v584
      %v586 = vrot.slane %v585, 4
      %v588 = vshll.u32 %v296, 16
      %v590 = vrot.slane %v588, 5
      %v591 = vsel %vm337, %v586, %v590
      %v592 = vshrl.u32 %v296, 16
      %v594 = vrot.slane %v592, 4
      %v595 = vor.u32 %v594, %v590
      %v596 = vrot.slane %v595, 4
      %v598 = vshll.u32 %v297, 16
      %v600 = vrot.slane %v598, 5
      %v601 = vsel %vm337, %v596, %v600
      %v603 = vshrl.u32 %v298, 16
      %v605 = vrot.slane %v603, 4
      %v606 = vshll.u32 %v298, 16
      %v608 = vrot.slane %v606, 5
      %v609 = vor.u32 %v605, %v608
      %v610 = vrot.slane %v609, 4
      %v612 = vshll.u32 %v299, 16
      %v614 = vrot.slane %v612, 5
      %v615 = vsel %vm337, %v610, %v614
      %v616 = vshrl.u32 %v299, 16
      %v618 = vrot.slane %v616, 4
      %v619 = vor.u32 %v618, %v614
      %v620 = vrot.slane %v619, 4
      %v622 = vshll.u32 %v300, 16
      %v624 = vrot.slane %v622, 5
      %v625 = vsel %vm337, %v620, %v624
      %v627 = vshrl.u32 %v301, 16
      %v629 = vrot.slane %v627, 4
      %v630 = vshll.u32 %v301, 16
      %v632 = vrot.slane %v630, 5
      %v633 = vor.u32 %v629, %v632
      %v634 = vrot.slane %v633, 4
      %v636 = vshll.u32 %v302, 16
      %v638 = vrot.slane %v636, 5
      %v639 = vsel %vm337, %v634, %v638
      %v640 = vshrl.u32 %v302, 16
      %v642 = vrot.slane %v640, 4
      %v643 = vor.u32 %v642, %v638
      %v644 = vrot.slane %v643, 4
      %v646 = vshll.u32 %v303, 16
      %v648 = vrot.slane %v646, 5
      %v649 = vsel %vm337, %v644, %v648
      %v651 = vshrl.u32 %v304, 16
      %v653 = vrot.slane %v651, 4
      %v654 = vshll.u32 %v304, 16
      %v656 = vrot.slane %v654, 5
      %v657 = vor.u32 %v653, %v656
      %v658 = vrot.slane %v657, 4
      %v660 = vshll.u32 %v305, 16
      %v662 = vrot.slane %v660, 5
      %v663 = vsel %vm337, %v658, %v662
      %v664 = vshrl.u32 %v305, 16
      %v666 = vrot.slane %v664, 4
      %v667 = vor.u32 %v666, %v662
      %v668 = vrot.slane %v667, 4
      %v670 = vshll.u32 %v306, 16
      %v672 = vrot.slane %v670, 5
      %v673 = vsel %vm337, %v668, %v672
      %v675 = vshrl.u32 %v307, 16
      %v677 = vrot.slane %v675, 4
      %v678 = vshll.u32 %v307, 16
      %v680 = vrot.slane %v678, 5
      %v681 = vor.u32 %v677, %v680
      %v682 = vrot.slane %v681, 4
      %v684 = vshll.u32 %v308, 16
      %v686 = vrot.slane %v684, 5
      %v687 = vsel %vm337, %v682, %v686
      %v688 = vshrl.u32 %v308, 16
      %v690 = vrot.slane %v688, 4
      %v691 = vor.u32 %v690, %v686
      %v692 = vrot.slane %v691, 4
      %v694 = vshll.u32 %v309, 16
      %v696 = vrot.slane %v694, 5
      %v697 = vsel %vm337, %v692, %v696
      %v699 = vshrl.u32 %v310, 16
      %v701 = vrot.slane %v699, 4
      %v702 = vshll.u32 %v310, 16
      %v704 = vrot.slane %v702, 5
      %v705 = vor.u32 %v701, %v704
      %v706 = vrot.slane %v705, 4
      %v708 = vshll.u32 %v311, 16
      %v710 = vrot.slane %v708, 5
      %v711 = vsel %vm337, %v706, %v710
      %v712 = vshrl.u32 %v311, 16
      %v714 = vrot.slane %v712, 4
      %v715 = vor.u32 %v714, %v710
      %v716 = vrot.slane %v715, 4
      %v718 = vshll.u32 %v312, 16
      %v720 = vrot.slane %v718, 5
      %v721 = vsel %vm337, %v716, %v720
      %s722 = scalar_lea.vmem %s1, 64
      %v723 = vld [vmem:[%s722] sm:$0xf]
      %v724 = vld [vmem:[%s722 + $0x4] sm:$0xf]
      %v725 = vld [vmem:[%s722 + $0x8] sm:$0xf]
      %v726 = vld [vmem:[%s722 + $0xc] sm:$0xf]
      %v727 = vld [vmem:[%s722 + $0x10] sm:$0xf]
      %v728 = vld [vmem:[%s722 + $0x14] sm:$0xf]
      %v729 = vld [vmem:[%s722 + $0x18] sm:$0xf]
      %v730 = vld [vmem:[%s722 + $0x1c] sm:$0xf]
      %v731 = vld [vmem:[%s722 + $0x20] sm:$0xf]
      %v732 = vld [vmem:[%s722 + $0x24] sm:$0xf]
      %v733 = vld [vmem:[%s722 + $0x28] sm:$0xf]
      %v734 = vld [vmem:[%s722 + $0x2c] sm:$0xf]
      %v735 = vld [vmem:[%s722 + $0x30] sm:$0xf]
      %v736 = vld [vmem:[%s722 + $0x34] sm:$0xf]
      %v737 = vld [vmem:[%s722 + $0x38] sm:$0xf]
      %v738 = vld [vmem:[%s722 + $0x3c] sm:$0xf]
      %v739 = vunpack.c.l.b16 %v351
      %v740 = vunpack.c.l.b16 %v361
      %v741 = vunpack.c.l.b16 %v375
      %v742 = vunpack.c.l.b16 %v385
      %v743 = vunpack.c.l.b16 %v399
      %v744 = vunpack.c.l.b16 %v409
      %v745 = vunpack.c.l.b16 %v423
      %v746 = vunpack.c.l.b16 %v433
      %v747 = vunpack.c.l.b16 %v447
      %v748 = vunpack.c.l.b16 %v457
      %v749 = vunpack.c.l.b16 %v471
      %v750 = vunpack.c.l.b16 %v481
      %v751 = vunpack.c.l.b16 %v495
      %v752 = vunpack.c.l.b16 %v505
      %v753 = vunpack.c.l.b16 %v519
      %v754 = vunpack.c.l.b16 %v529
      %v755 = vunpack.c.l.b16 %v543
      %v756 = vunpack.c.l.b16 %v553
      %v757 = vunpack.c.l.b16 %v567
      %v758 = vunpack.c.l.b16 %v577
      %v759 = vunpack.c.l.b16 %v591
      %v760 = vunpack.c.l.b16 %v601
      %v761 = vunpack.c.l.b16 %v615
      %v762 = vunpack.c.l.b16 %v625
      %v763 = vunpack.c.l.b16 %v639
      %v764 = vunpack.c.l.b16 %v649
      %v765 = vunpack.c.l.b16 %v663
      %v766 = vunpack.c.l.b16 %v673
      %v767 = vunpack.c.l.b16 %v687
      %v768 = vunpack.c.l.b16 %v697
      %v769 = vunpack.c.l.b16 %v711
      %v770 = vunpack.c.l.b16 %v721
      %v771 = vpack.c.b16 %v740, %v739
      %v772 = vpack.c.b16 %v742, %v741
      %v773 = vpack.c.b16 %v744, %v743
      %v774 = vpack.c.b16 %v746, %v745
      %v775 = vpack.c.b16 %v748, %v747
      %v776 = vpack.c.b16 %v750, %v749
      %v777 = vpack.c.b16 %v752, %v751
      %v778 = vpack.c.b16 %v754, %v753
      %v779 = vpack.c.b16 %v756, %v755
      %v780 = vpack.c.b16 %v758, %v757
      %v781 = vpack.c.b16 %v760, %v759
      %v782 = vpack.c.b16 %v762, %v761
      %v783 = vpack.c.b16 %v764, %v763
      %v784 = vpack.c.b16 %v766, %v765
      %v785 = vpack.c.b16 %v768, %v767
      %v786 = vpack.c.b16 %v770, %v769
      %v819 = vunpack.c.l.b16 %v723
      %v820 = vunpack.c.l.b16 %v724
      %v821 = vunpack.c.l.b16 %v725
      %v822 = vunpack.c.l.b16 %v726
      %v823 = vunpack.c.l.b16 %v727
      %v824 = vunpack.c.l.b16 %v728
      %v825 = vunpack.c.l.b16 %v729
      %v826 = vunpack.c.l.b16 %v730
      %v827 = vunpack.c.l.b16 %v731
      %v828 = vunpack.c.l.b16 %v732
      %v829 = vunpack.c.l.b16 %v733
      %v830 = vunpack.c.l.b16 %v734
      %v831 = vunpack.c.l.b16 %v735
      %v832 = vunpack.c.l.b16 %v736
      %v833 = vunpack.c.l.b16 %v737
      %v834 = vunpack.c.l.b16 %v738
      %v835 = vpack.c.b16 %v820, %v819
      %v836 = vpack.c.b16 %v822, %v821
      %v837 = vpack.c.b16 %v824, %v823
      %v838 = vpack.c.b16 %v826, %v825
      %v839 = vpack.c.b16 %v828, %v827
      %v840 = vpack.c.b16 %v830, %v829
      %v841 = vpack.c.b16 %v832, %v831
      %v842 = vpack.c.b16 %v834, %v833
      %851 = vmatprep.subr.bf16.mxu0 0
      %852 = vmatpush1.bf16.msra.mxu0 %v835
      %853 = vmatprep.subr.bf16.mxu0 0
      %854 = vmatpush1.bf16.msra.mxu0 %v836
      %855 = vmatprep.subr.bf16.mxu0 0
      %856 = vmatpush1.bf16.msra.mxu0 %v837
      %857 = vmatprep.subr.bf16.mxu0 0
      %858 = vmatpush1.bf16.msra.mxu0 %v838
      %859 = vmatprep.subr.bf16.mxu0 0
      %860 = vmatpush1.bf16.msra.mxu0 %v839
      %861 = vmatprep.subr.bf16.mxu0 0
      %862 = vmatpush1.bf16.msra.mxu0 %v840
      %863 = vmatprep.subr.bf16.mxu0 0
      %864 = vmatpush1.bf16.msra.mxu0 %v841
      %865 = vmatprep.subr.bf16.mxu0 0
      %866 = vmatpush1.bf16.msra.mxu0 %v842
      %867 = vmatprep.subr.bf16.mxu0 0
      %868 = vmatpush1.bf16.msra.mxu0 0
      %869 = vmatprep.subr.bf16.mxu0 0
      %870 = vmatpush1.bf16.msra.mxu0 0
      %871 = vmatprep.subr.bf16.mxu0 0
      %872 = vmatpush1.bf16.msra.mxu0 0
      %873 = vmatprep.subr.bf16.mxu0 0
      %874 = vmatpush1.bf16.msra.mxu0 0
      %875 = vmatprep.subr.bf16.mxu0 0
      %876 = vmatpush1.bf16.msra.mxu0 0
      %877 = vmatprep.subr.bf16.mxu0 0
      %878 = vmatpush1.bf16.msra.mxu0 0
      %879 = vmatprep.subr.bf16.mxu0 0
      %880 = vmatpush1.bf16.msra.mxu0 0
      %881 = vmatprep.subr.bf16.mxu0 0
      %882 = vmatpush1.bf16.msra.mxu0 0
      %883 = vmatprep.mubr.bf16.mxu0 0
      %884 = vmatmul.mubr.bf16.gmra.mrb[0].mxu0 %v771
      %v885 = vpop.f32.mrb[0].mxu0
      %v886 = vadd.f32 0.0, %v885
      %v887 = vpop.f32.mrb[0].mxu0
      %v888 = vpop.f32.mrb[0].mxu0
      %v889 = vadd.f32 0.0, %v888
      %v890 = vpop.f32.mrb[0].mxu0
      %891 = vmatprep.mubr.bf16.mxu0 0
      %892 = vmatmul.mubr.bf16.gmra.mrb[0].mxu0 %v772
      %v893 = vpop.f32.mrb[0].mxu0
      %v894 = vadd.f32 0.0, %v893
      %v895 = vpop.f32.mrb[0].mxu0
      %v896 = vpop.f32.mrb[0].mxu0
      %v897 = vadd.f32 0.0, %v896
      %v898 = vpop.f32.mrb[0].mxu0
      %899 = vmatprep.mubr.bf16.mxu0 0
      %900 = vmatmul.mubr.bf16.gmra.mrb[0].mxu0 %v773
      %v901 = vpop.f32.mrb[0].mxu0
      %v902 = vadd.f32 0.0, %v901
      %v903 = vpop.f32.mrb[0].mxu0
      %v904 = vpop.f32.mrb[0].mxu0
      %v905 = vadd.f32 0.0, %v904
      %v906 = vpop.f32.mrb[0].mxu0
      %907 = vmatprep.mubr.bf16.mxu0 0
      %908 = vmatmul.mubr.bf16.gmra.mrb[0].mxu0 %v774
      %v909 = vpop.f32.mrb[0].mxu0
      %v910 = vadd.f32 0.0, %v909
      %v911 = vpop.f32.mrb[0].mxu0
      %v912 = vpop.f32.mrb[0].mxu0
      %v913 = vadd.f32 0.0, %v912
      %v914 = vpop.f32.mrb[0].mxu0
      %915 = vmatprep.mubr.bf16.mxu0 0
      %916 = vmatmul.mubr.bf16.gmra.mrb[0].mxu0 %v775
      %v917 = vpop.f32.mrb[0].mxu0
      %v918 = vadd.f32 0.0, %v917
      %v919 = vpop.f32.mrb[0].mxu0
      %v920 = vpop.f32.mrb[0].mxu0
      %v921 = vadd.f32 0.0, %v920
      %v922 = vpop.f32.mrb[0].mxu0
      %923 = vmatprep.mubr.bf16.mxu0 0
      %924 = vmatmul.mubr.bf16.gmra.mrb[0].mxu0 %v776
      %v925 = vpop.f32.mrb[0].mxu0
      %v926 = vadd.f32 0.0, %v925
      %v927 = vpop.f32.mrb[0].mxu0
      %v928 = vpop.f32.mrb[0].mxu0
      %v929 = vadd.f32 0.0, %v928
      %v930 = vpop.f32.mrb[0].mxu0
      %931 = vmatprep.mubr.bf16.mxu0 0
      %932 = vmatmul.mubr.bf16.gmra.mrb[0].mxu0 %v777
      %v933 = vpop.f32.mrb[0].mxu0
      %v934 = vadd.f32 0.0, %v933
      %v935 = vpop.f32.mrb[0].mxu0
      %v936 = vpop.f32.mrb[0].mxu0
      %v937 = vadd.f32 0.0, %v936
      %v938 = vpop.f32.mrb[0].mxu0
      %939 = vmatprep.mubr.bf16.mxu0 0
      %940 = vmatmul.mubr.bf16.gmra.mrb[0].mxu0 %v778
      %v941 = vpop.f32.mrb[0].mxu0
      %v942 = vadd.f32 0.0, %v941
      %v943 = vpop.f32.mrb[0].mxu0
      %v944 = vpop.f32.mrb[0].mxu0
      %v945 = vadd.f32 0.0, %v944
      %v946 = vpop.f32.mrb[0].mxu0
      %947 = vmatprep.mubr.bf16.mxu0 0
      %948 = vmatmul.mubr.bf16.gmra.mrb[0].mxu0 %v779
      %v949 = vpop.f32.mrb[0].mxu0
      %v950 = vadd.f32 0.0, %v949
      %v951 = vpop.f32.mrb[0].mxu0
      %v952 = vpop.f32.mrb[0].mxu0
      %v953 = vadd.f32 0.0, %v952
      %v954 = vpop.f32.mrb[0].mxu0
      %955 = vmatprep.mubr.bf16.mxu0 0
      %956 = vmatmul.mubr.bf16.gmra.mrb[0].mxu0 %v780
      %v957 = vpop.f32.mrb[0].mxu0
      %v958 = vadd.f32 0.0, %v957
      %v959 = vpop.f32.mrb[0].mxu0
      %v960 = vpop.f32.mrb[0].mxu0
      %v961 = vadd.f32 0.0, %v960
      %v962 = vpop.f32.mrb[0].mxu0
      %963 = vmatprep.mubr.bf16.mxu0 0
      %964 = vmatmul.mubr.bf16.gmra.mrb[0].mxu0 %v781
      %v965 = vpop.f32.mrb[0].mxu0
      %v966 = vadd.f32 0.0, %v965
      %v967 = vpop.f32.mrb[0].mxu0
      %v968 = vpop.f32.mrb[0].mxu0
      %v969 = vadd.f32 0.0, %v968
      %v970 = vpop.f32.mrb[0].mxu0
      %971 = vmatprep.mubr.bf16.mxu0 0
      %972 = vmatmul.mubr.bf16.gmra.mrb[0].mxu0 %v782
      %v973 = vpop.f32.mrb[0].mxu0
      %v974 = vadd.f32 0.0, %v973
      %v975 = vpop.f32.mrb[0].mxu0
      %v976 = vpop.f32.mrb[0].mxu0
      %v977 = vadd.f32 0.0, %v976
      %v978 = vpop.f32.mrb[0].mxu0
      %979 = vmatprep.mubr.bf16.mxu0 0
      %980 = vmatmul.mubr.bf16.gmra.mrb[0].mxu0 %v783
      %v981 = vpop.f32.mrb[0].mxu0
      %v982 = vadd.f32 0.0, %v981
      %v983 = vpop.f32.mrb[0].mxu0
      %v984 = vpop.f32.mrb[0].mxu0
      %v985 = vadd.f32 0.0, %v984
      %v986 = vpop.f32.mrb[0].mxu0
      %987 = vmatprep.mubr.bf16.mxu0 0
      %988 = vmatmul.mubr.bf16.gmra.mrb[0].mxu0 %v784
      %v989 = vpop.f32.mrb[0].mxu0
      %v990 = vadd.f32 0.0, %v989
      %v991 = vpop.f32.mrb[0].mxu0
      %v992 = vpop.f32.mrb[0].mxu0
      %v993 = vadd.f32 0.0, %v992
      %v994 = vpop.f32.mrb[0].mxu0
      %995 = vmatprep.mubr.bf16.mxu0 0
      %996 = vmatmul.mubr.bf16.gmra.mrb[0].mxu0 %v785
      %v997 = vpop.f32.mrb[0].mxu0
      %v998 = vadd.f32 0.0, %v997
      %v999 = vpop.f32.mrb[0].mxu0
      %v1000 = vpop.f32.mrb[0].mxu0
      %v1001 = vadd.f32 0.0, %v1000
      %v1002 = vpop.f32.mrb[0].mxu0
      %1003 = vmatprep.mubr.bf16.mxu0 0
      %1004 = vmatmul.mubr.bf16.gmra.mrb[0].mxu0 %v786
      %v1005 = vpop.f32.mrb[0].mxu0
      %v1006 = vadd.f32 0.0, %v1005
      %v1007 = vpop.f32.mrb[0].mxu0
      %v1008 = vpop.f32.mrb[0].mxu0
      %v1009 = vadd.f32 0.0, %v1008
      %v1010 = vpop.f32.mrb[0].mxu0
      %1011 = vdwg.mxu0
      %v1044 = vunpack.c.l.b16 %v265
      %v1045 = vunpack.c.l.b16 %v266
      %v1046 = vunpack.c.l.b16 %v268
      %v1047 = vunpack.c.l.b16 %v269
      %v1048 = vunpack.c.l.b16 %v271
      %v1049 = vunpack.c.l.b16 %v272
      %v1050 = vunpack.c.l.b16 %v274
      %v1051 = vunpack.c.l.b16 %v275
      %v1052 = vunpack.c.l.b16 %v277
      %v1053 = vunpack.c.l.b16 %v278
      %v1054 = vunpack.c.l.b16 %v280
      %v1055 = vunpack.c.l.b16 %v281
      %v1056 = vunpack.c.l.b16 %v283
      %v1057 = vunpack.c.l.b16 %v284
      %v1058 = vunpack.c.l.b16 %v286
      %v1059 = vunpack.c.l.b16 %v287
      %v1060 = vunpack.c.l.b16 %v289
      %v1061 = vunpack.c.l.b16 %v290
      %v1062 = vunpack.c.l.b16 %v292
      %v1063 = vunpack.c.l.b16 %v293
      %v1064 = vunpack.c.l.b16 %v295
      %v1065 = vunpack.c.l.b16 %v296
      %v1066 = vunpack.c.l.b16 %v298
      %v1067 = vunpack.c.l.b16 %v299
      %v1068 = vunpack.c.l.b16 %v301
      %v1069 = vunpack.c.l.b16 %v302
      %v1070 = vunpack.c.l.b16 %v304
      %v1071 = vunpack.c.l.b16 %v305
      %v1072 = vunpack.c.l.b16 %v307
      %v1073 = vunpack.c.l.b16 %v308
      %v1074 = vunpack.c.l.b16 %v310
      %v1075 = vunpack.c.l.b16 %v311
      %v1076 = vpack.c.b16 %v1045, %v1044
      %v1077 = vpack.c.b16 %v1047, %v1046
      %v1078 = vpack.c.b16 %v1049, %v1048
      %v1079 = vpack.c.b16 %v1051, %v1050
      %v1080 = vpack.c.b16 %v1053, %v1052
      %v1081 = vpack.c.b16 %v1055, %v1054
      %v1082 = vpack.c.b16 %v1057, %v1056
      %v1083 = vpack.c.b16 %v1059, %v1058
      %v1084 = vpack.c.b16 %v1061, %v1060
      %v1085 = vpack.c.b16 %v1063, %v1062
      %v1086 = vpack.c.b16 %v1065, %v1064
      %v1087 = vpack.c.b16 %v1067, %v1066
      %v1088 = vpack.c.b16 %v1069, %v1068
      %v1089 = vpack.c.b16 %v1071, %v1070
      %v1090 = vpack.c.b16 %v1073, %v1072
      %v1091 = vpack.c.b16 %v1075, %v1074
      %v1124 = vunpack.c.l.b16 %v319
      %v1125 = vunpack.c.l.b16 %v320
      %v1126 = vunpack.c.l.b16 %v321
      %v1127 = vunpack.c.l.b16 %v322
      %v1128 = vunpack.c.l.b16 %v323
      %v1129 = vunpack.c.l.b16 %v324
      %v1130 = vunpack.c.l.b16 %v325
      %v1131 = vunpack.c.l.b16 %v326
      %v1132 = vunpack.c.l.b16 %v327
      %v1133 = vunpack.c.l.b16 %v328
      %v1134 = vunpack.c.l.b16 %v329
      %v1135 = vunpack.c.l.b16 %v330
      %v1136 = vunpack.c.l.b16 %v331
      %v1137 = vunpack.c.l.b16 %v332
      %v1138 = vunpack.c.l.b16 %v333
      %v1139 = vunpack.c.l.b16 %v334
      %v1140 = vpack.c.b16 %v1125, %v1124
      %v1141 = vpack.c.b16 %v1127, %v1126
      %v1142 = vpack.c.b16 %v1129, %v1128
      %v1143 = vpack.c.b16 %v1131, %v1130
      %v1144 = vpack.c.b16 %v1133, %v1132
      %v1145 = vpack.c.b16 %v1135, %v1134
      %v1146 = vpack.c.b16 %v1137, %v1136
      %v1147 = vpack.c.b16 %v1139, %v1138
      %1156 = vmatprep.subr.bf16.mxu0 0
      %1157 = vmatpush1.bf16.msra.mxu0 %v1140
      %1158 = vmatprep.subr.bf16.mxu0 0
      %1159 = vmatpush1.bf16.msra.mxu0 %v1141
      %1160 = vmatprep.subr.bf16.mxu0 0
      %1161 = vmatpush1.bf16.msra.mxu0 %v1142
      %1162 = vmatprep.subr.bf16.mxu0 0
      %1163 = vmatpush1.bf16.msra.mxu0 %v1143
      %1164 = vmatprep.subr.bf16.mxu0 0
      %1165 = vmatpush1.bf16.msra.mxu0 %v1144
      %1166 = vmatprep.subr.bf16.mxu0 0
      %1167 = vmatpush1.bf16.msra.mxu0 %v1145
      %1168 = vmatprep.subr.bf16.mxu0 0
      %1169 = vmatpush1.bf16.msra.mxu0 %v1146
      %1170 = vmatprep.subr.bf16.mxu0 0
      %1171 = vmatpush1.bf16.msra.mxu0 %v1147
      %1172 = vmatprep.subr.bf16.mxu0 0
      %1173 = vmatpush1.bf16.msra.mxu0 0
      %1174 = vmatprep.subr.bf16.mxu0 0
      %1175 = vmatpush1.bf16.msra.mxu0 0
      %1176 = vmatprep.subr.bf16.mxu0 0
      %1177 = vmatpush1.bf16.msra.mxu0 0
      %1178 = vmatprep.subr.bf16.mxu0 0
      %1179 = vmatpush1.bf16.msra.mxu0 0
      %1180 = vmatprep.subr.bf16.mxu0 0
      %1181 = vmatpush1.bf16.msra.mxu0 0
      %1182 = vmatprep.subr.bf16.mxu0 0
      %1183 = vmatpush1.bf16.msra.mxu0 0
      %1184 = vmatprep.subr.bf16.mxu0 0
      %1185 = vmatpush1.bf16.msra.mxu0 0
      %1186 = vmatprep.subr.bf16.mxu0 0
      %1187 = vmatpush1.bf16.msra.mxu0 0
      %1188 = vmatprep.mubr.bf16.mxu0 0
      %1189 = vmatmul.mubr.bf16.gmra.mrb[0].mxu0 %v1076
      %v1190 = vpop.f32.mrb[0].mxu0
      %v1191 = vadd.f32 %v886, %v1190
      %v1192 = vpop.f32.mrb[0].mxu0
      %v1193 = vpop.f32.mrb[0].mxu0
      %v1194 = vadd.f32 %v889, %v1193
      %v1195 = vpop.f32.mrb[0].mxu0
      %1196 = vmatprep.mubr.bf16.mxu0 0
      %1197 = vmatmul.mubr.bf16.gmra.mrb[0].mxu0 %v1077
      %v1198 = vpop.f32.mrb[0].mxu0
      %v1199 = vadd.f32 %v894, %v1198
      %v1200 = vpop.f32.mrb[0].mxu0
      %v1201 = vpop.f32.mrb[0].mxu0
      %v1202 = vadd.f32 %v897, %v1201
      %v1203 = vpop.f32.mrb[0].mxu0
      %1204 = vmatprep.mubr.bf16.mxu0 0
      %1205 = vmatmul.mubr.bf16.gmra.mrb[0].mxu0 %v1078
      %v1206 = vpop.f32.mrb[0].mxu0
      %v1207 = vadd.f32 %v902, %v1206
      %v1208 = vpop.f32.mrb[0].mxu0
      %v1209 = vpop.f32.mrb[0].mxu0
      %v1210 = vadd.f32 %v905, %v1209
      %v1211 = vpop.f32.mrb[0].mxu0
      %1212 = vmatprep.mubr.bf16.mxu0 0
      %1213 = vmatmul.mubr.bf16.gmra.mrb[0].mxu0 %v1079
      %v1214 = vpop.f32.mrb[0].mxu0
      %v1215 = vadd.f32 %v910, %v1214
      %v1216 = vpop.f32.mrb[0].mxu0
      %v1217 = vpop.f32.mrb[0].mxu0
      %v1218 = vadd.f32 %v913, %v1217
      %v1219 = vpop.f32.mrb[0].mxu0
      %1220 = vmatprep.mubr.bf16.mxu0 0
      %1221 = vmatmul.mubr.bf16.gmra.mrb[0].mxu0 %v1080
      %v1222 = vpop.f32.mrb[0].mxu0
      %v1223 = vadd.f32 %v918, %v1222
      %v1224 = vpop.f32.mrb[0].mxu0
      %v1225 = vpop.f32.mrb[0].mxu0
      %v1226 = vadd.f32 %v921, %v1225
      %v1227 = vpop.f32.mrb[0].mxu0
      %1228 = vmatprep.mubr.bf16.mxu0 0
      %1229 = vmatmul.mubr.bf16.gmra.mrb[0].mxu0 %v1081
      %v1230 = vpop.f32.mrb[0].mxu0
      %v1231 = vadd.f32 %v926, %v1230
      %v1232 = vpop.f32.mrb[0].mxu0
      %v1233 = vpop.f32.mrb[0].mxu0
      %v1234 = vadd.f32 %v929, %v1233
      %v1235 = vpop.f32.mrb[0].mxu0
      %1236 = vmatprep.mubr.bf16.mxu0 0
      %1237 = vmatmul.mubr.bf16.gmra.mrb[0].mxu0 %v1082
      %v1238 = vpop.f32.mrb[0].mxu0
      %v1239 = vadd.f32 %v934, %v1238
      %v1240 = vpop.f32.mrb[0].mxu0
      %v1241 = vpop.f32.mrb[0].mxu0
      %v1242 = vadd.f32 %v937, %v1241
      %v1243 = vpop.f32.mrb[0].mxu0
      %1244 = vmatprep.mubr.bf16.mxu0 0
      %1245 = vmatmul.mubr.bf16.gmra.mrb[0].mxu0 %v1083
      %v1246 = vpop.f32.mrb[0].mxu0
      %v1247 = vadd.f32 %v942, %v1246
      %v1248 = vpop.f32.mrb[0].mxu0
      %v1249 = vpop.f32.mrb[0].mxu0
      %v1250 = vadd.f32 %v945, %v1249
      %v1251 = vpop.f32.mrb[0].mxu0
      %1252 = vmatprep.mubr.bf16.mxu0 0
      %1253 = vmatmul.mubr.bf16.gmra.mrb[0].mxu0 %v1084
      %v1254 = vpop.f32.mrb[0].mxu0
      %v1255 = vadd.f32 %v950, %v1254
      %v1256 = vpop.f32.mrb[0].mxu0
      %v1257 = vpop.f32.mrb[0].mxu0
      %v1258 = vadd.f32 %v953, %v1257
      %v1259 = vpop.f32.mrb[0].mxu0
      %1260 = vmatprep.mubr.bf16.mxu0 0
      %1261 = vmatmul.mubr.bf16.gmra.mrb[0].mxu0 %v1085
      %v1262 = vpop.f32.mrb[0].mxu0
      %v1263 = vadd.f32 %v958, %v1262
      %v1264 = vpop.f32.mrb[0].mxu0
      %v1265 = vpop.f32.mrb[0].mxu0
      %v1266 = vadd.f32 %v961, %v1265
      %v1267 = vpop.f32.mrb[0].mxu0
      %1268 = vmatprep.mubr.bf16.mxu0 0
      %1269 = vmatmul.mubr.bf16.gmra.mrb[0].mxu0 %v1086
      %v1270 = vpop.f32.mrb[0].mxu0
      %v1271 = vadd.f32 %v966, %v1270
      %v1272 = vpop.f32.mrb[0].mxu0
      %v1273 = vpop.f32.mrb[0].mxu0
      %v1274 = vadd.f32 %v969, %v1273
      %v1275 = vpop.f32.mrb[0].mxu0
      %1276 = vmatprep.mubr.bf16.mxu0 0
      %1277 = vmatmul.mubr.bf16.gmra.mrb[0].mxu0 %v1087
      %v1278 = vpop.f32.mrb[0].mxu0
      %v1279 = vadd.f32 %v974, %v1278
      %v1280 = vpop.f32.mrb[0].mxu0
      %v1281 = vpop.f32.mrb[0].mxu0
      %v1282 = vadd.f32 %v977, %v1281
      %v1283 = vpop.f32.mrb[0].mxu0
      %1284 = vmatprep.mubr.bf16.mxu0 0
      %1285 = vmatmul.mubr.bf16.gmra.mrb[0].mxu0 %v1088
      %v1286 = vpop.f32.mrb[0].mxu0
      %v1287 = vadd.f32 %v982, %v1286
      %v1288 = vpop.f32.mrb[0].mxu0
      %v1289 = vpop.f32.mrb[0].mxu0
      %v1290 = vadd.f32 %v985, %v1289
      %v1291 = vpop.f32.mrb[0].mxu0
      %1292 = vmatprep.mubr.bf16.mxu0 0
      %1293 = vmatmul.mubr.bf16.gmra.mrb[0].mxu0 %v1089
      %v1294 = vpop.f32.mrb[0].mxu0
      %v1295 = vadd.f32 %v990, %v1294
      %v1296 = vpop.f32.mrb[0].mxu0
      %v1297 = vpop.f32.mrb[0].mxu0
      %v1298 = vadd.f32 %v993, %v1297
      %v1299 = vpop.f32.mrb[0].mxu0
      %1300 = vmatprep.mubr.bf16.mxu0 0
      %1301 = vmatmul.mubr.bf16.gmra.mrb[0].mxu0 %v1090
      %v1302 = vpop.f32.mrb[0].mxu0
      %v1303 = vadd.f32 %v998, %v1302
      %v1304 = vpop.f32.mrb[0].mxu0
      %v1305 = vpop.f32.mrb[0].mxu0
      %v1306 = vadd.f32 %v1001, %v1305
      %v1307 = vpop.f32.mrb[0].mxu0
      %1308 = vmatprep.mubr.bf16.mxu0 0
      %1309 = vmatmul.mubr.bf16.gmra.mrb[0].mxu0 %v1091
      %v1310 = vpop.f32.mrb[0].mxu0
      %v1311 = vadd.f32 %v1006, %v1310
      %v1312 = vpop.f32.mrb[0].mxu0
      %v1313 = vpop.f32.mrb[0].mxu0
      %v1314 = vadd.f32 %v1009, %v1313
      %v1315 = vpop.f32.mrb[0].mxu0
      %1316 = vdwg.mxu0
      %vm1333 = vcmask 1042432
      %vm1334 = vcmask 1046532
      %vm1335 = vmor %vm1333, %vm1334
      %v1336 = vrot.slane %v265, 5
      %v1337 = vrot.slane %v1336, 4
      %v1338 = vrot.slane %v266, 5
      %v1339 = vsel %vm1335, %v1337, %v1338
      %v1340 = vrot.slane %v1338, 4
      %v1341 = vrot.slane %v267, 5
      %v1342 = vsel %vm1335, %v1340, %v1341
      %v1343 = vrot.slane %v268, 5
      %v1344 = vrot.slane %v1343, 4
      %v1345 = vrot.slane %v269, 5
      %v1346 = vsel %vm1335, %v1344, %v1345
      %v1347 = vrot.slane %v1345, 4
      %v1348 = vrot.slane %v270, 5
      %v1349 = vsel %vm1335, %v1347, %v1348
      %v1350 = vrot.slane %v271, 5
      %v1351 = vrot.slane %v1350, 4
      %v1352 = vrot.slane %v272, 5
      %v1353 = vsel %vm1335, %v1351, %v1352
      %v1354 = vrot.slane %v1352, 4
      %v1355 = vrot.slane %v273, 5
      %v1356 = vsel %vm1335, %v1354, %v1355
      %v1357 = vrot.slane %v274, 5
      %v1358 = vrot.slane %v1357, 4
      %v1359 = vrot.slane %v275, 5
      %v1360 = vsel %vm1335, %v1358, %v1359
      %v1361 = vrot.slane %v1359, 4
      %v1362 = vrot.slane %v276, 5
      %v1363 = vsel %vm1335, %v1361, %v1362
      %v1364 = vrot.slane %v277, 5
      %v1365 = vrot.slane %v1364, 4
      %v1366 = vrot.slane %v278, 5
      %v1367 = vsel %vm1335, %v1365, %v1366
      %v1368 = vrot.slane %v1366, 4
      %v1369 = vrot.slane %v279, 5
      %v1370 = vsel %vm1335, %v1368, %v1369
      %v1371 = vrot.slane %v280, 5
      %v1372 = vrot.slane %v1371, 4
      %v1373 = vrot.slane %v281, 5
      %v1374 = vsel %vm1335, %v1372, %v1373
      %v1375 = vrot.slane %v1373, 4
      %v1376 = vrot.slane %v282, 5
      %v1377 = vsel %vm1335, %v1375, %v1376
      %v1378 = vrot.slane %v283, 5
      %v1379 = vrot.slane %v1378, 4
      %v1380 = vrot.slane %v284, 5
      %v1381 = vsel %vm1335, %v1379, %v1380
      %v1382 = vrot.slane %v1380, 4
      %v1383 = vrot.slane %v285, 5
      %v1384 = vsel %vm1335, %v1382, %v1383
      %v1385 = vrot.slane %v286, 5
      %v1386 = vrot.slane %v1385, 4
      %v1387 = vrot.slane %v287, 5
      %v1388 = vsel %vm1335, %v1386, %v1387
      %v1389 = vrot.slane %v1387, 4
      %v1390 = vrot.slane %v288, 5
      %v1391 = vsel %vm1335, %v1389, %v1390
      %v1392 = vrot.slane %v289, 5
      %v1393 = vrot.slane %v1392, 4
      %v1394 = vrot.slane %v290, 5
      %v1395 = vsel %vm1335, %v1393, %v1394
      %v1396 = vrot.slane %v1394, 4
      %v1397 = vrot.slane %v291, 5
      %v1398 = vsel %vm1335, %v1396, %v1397
      %v1399 = vrot.slane %v292, 5
      %v1400 = vrot.slane %v1399, 4
      %v1401 = vrot.slane %v293, 5
      %v1402 = vsel %vm1335, %v1400, %v1401
      %v1403 = vrot.slane %v1401, 4
      %v1404 = vrot.slane %v294, 5
      %v1405 = vsel %vm1335, %v1403, %v1404
      %v1406 = vrot.slane %v295, 5
      %v1407 = vrot.slane %v1406, 4
      %v1408 = vrot.slane %v296, 5
      %v1409 = vsel %vm1335, %v1407, %v1408
      %v1410 = vrot.slane %v1408, 4
      %v1411 = vrot.slane %v297, 5
      %v1412 = vsel %vm1335, %v1410, %v1411
      %v1413 = vrot.slane %v298, 5
      %v1414 = vrot.slane %v1413, 4
      %v1415 = vrot.slane %v299, 5
      %v1416 = vsel %vm1335, %v1414, %v1415
      %v1417 = vrot.slane %v1415, 4
      %v1418 = vrot.slane %v300, 5
      %v1419 = vsel %vm1335, %v1417, %v1418
      %v1420 = vrot.slane %v301, 5
      %v1421 = vrot.slane %v1420, 4
      %v1422 = vrot.slane %v302, 5
      %v1423 = vsel %vm1335, %v1421, %v1422
      %v1424 = vrot.slane %v1422, 4
      %v1425 = vrot.slane %v303, 5
      %v1426 = vsel %vm1335, %v1424, %v1425
      %v1427 = vrot.slane %v304, 5
      %v1428 = vrot.slane %v1427, 4
      %v1429 = vrot.slane %v305, 5
      %v1430 = vsel %vm1335, %v1428, %v1429
      %v1431 = vrot.slane %v1429, 4
      %v1432 = vrot.slane %v306, 5
      %v1433 = vsel %vm1335, %v1431, %v1432
      %v1434 = vrot.slane %v307, 5
      %v1435 = vrot.slane %v1434, 4
      %v1436 = vrot.slane %v308, 5
      %v1437 = vsel %vm1335, %v1435, %v1436
      %v1438 = vrot.slane %v1436, 4
      %v1439 = vrot.slane %v309, 5
      %v1440 = vsel %vm1335, %v1438, %v1439
      %v1441 = vrot.slane %v310, 5
      %v1442 = vrot.slane %v1441, 4
      %v1443 = vrot.slane %v311, 5
      %v1444 = vsel %vm1335, %v1442, %v1443
      %v1445 = vrot.slane %v1443, 4
      %v1446 = vrot.slane %v312, 5
      %v1447 = vsel %vm1335, %v1445, %v1446
      %s1448 = scalar_lea.vmem %s1, 128
      %v1449 = vld [vmem:[%s1448] sm:$0xf]
      %v1450 = vld [vmem:[%s1448 + $0x4] sm:$0xf]
      %v1451 = vld [vmem:[%s1448 + $0x8] sm:$0xf]
      %v1452 = vld [vmem:[%s1448 + $0xc] sm:$0xf]
      %v1453 = vld [vmem:[%s1448 + $0x10] sm:$0xf]
      %v1454 = vld [vmem:[%s1448 + $0x14] sm:$0xf]
      %v1455 = vld [vmem:[%s1448 + $0x18] sm:$0xf]
      %v1456 = vld [vmem:[%s1448 + $0x1c] sm:$0xf]
      %v1457 = vld [vmem:[%s1448 + $0x20] sm:$0xf]
      %v1458 = vld [vmem:[%s1448 + $0x24] sm:$0xf]
      %v1459 = vld [vmem:[%s1448 + $0x28] sm:$0xf]
      %v1460 = vld [vmem:[%s1448 + $0x2c] sm:$0xf]
      %v1461 = vld [vmem:[%s1448 + $0x30] sm:$0xf]
      %v1462 = vld [vmem:[%s1448 + $0x34] sm:$0xf]
      %v1463 = vld [vmem:[%s1448 + $0x38] sm:$0xf]
      %v1464 = vld [vmem:[%s1448 + $0x3c] sm:$0xf]
      %v1465 = vunpack.c.l.b16 %v1339
      %v1466 = vunpack.c.l.b16 %v1342
      %v1467 = vunpack.c.l.b16 %v1346
      %v1468 = vunpack.c.l.b16 %v1349
      %v1469 = vunpack.c.l.b16 %v1353
      %v1470 = vunpack.c.l.b16 %v1356
      %v1471 = vunpack.c.l.b16 %v1360
      %v1472 = vunpack.c.l.b16 %v1363
      %v1473 = vunpack.c.l.b16 %v1367
      %v1474 = vunpack.c.l.b16 %v1370
      %v1475 = vunpack.c.l.b16 %v1374
      %v1476 = vunpack.c.l.b16 %v1377
      %v1477 = vunpack.c.l.b16 %v1381
      %v1478 = vunpack.c.l.b16 %v1384
      %v1479 = vunpack.c.l.b16 %v1388
      %v1480 = vunpack.c.l.b16 %v1391
      %v1481 = vunpack.c.l.b16 %v1395
      %v1482 = vunpack.c.l.b16 %v1398
      %v1483 = vunpack.c.l.b16 %v1402
      %v1484 = vunpack.c.l.b16 %v1405
      %v1485 = vunpack.c.l.b16 %v1409
      %v1486 = vunpack.c.l.b16 %v1412
      %v1487 = vunpack.c.l.b16 %v1416
      %v1488 = vunpack.c.l.b16 %v1419
      %v1489 = vunpack.c.l.b16 %v1423
      %v1490 = vunpack.c.l.b16 %v1426
      %v1491 = vunpack.c.l.b16 %v1430
      %v1492 = vunpack.c.l.b16 %v1433
      %v1493 = vunpack.c.l.b16 %v1437
      %v1494 = vunpack.c.l.b16 %v1440
      %v1495 = vunpack.c.l.b16 %v1444
      %v1496 = vunpack.c.l.b16 %v1447
      %v1497 = vpack.c.b16 %v1466, %v1465
      %v1498 = vpack.c.b16 %v1468, %v1467
      %v1499 = vpack.c.b16 %v1470, %v1469
      %v1500 = vpack.c.b16 %v1472, %v1471
      %v1501 = vpack.c.b16 %v1474, %v1473
      %v1502 = vpack.c.b16 %v1476, %v1475
      %v1503 = vpack.c.b16 %v1478, %v1477
      %v1504 = vpack.c.b16 %v1480, %v1479
      %v1505 = vpack.c.b16 %v1482, %v1481
      %v1506 = vpack.c.b16 %v1484, %v1483
      %v1507 = vpack.c.b16 %v1486, %v1485
      %v1508 = vpack.c.b16 %v1488, %v1487
      %v1509 = vpack.c.b16 %v1490, %v1489
      %v1510 = vpack.c.b16 %v1492, %v1491
      %v1511 = vpack.c.b16 %v1494, %v1493
      %v1512 = vpack.c.b16 %v1496, %v1495
      %v1545 = vunpack.c.l.b16 %v1449
      %v1546 = vunpack.c.l.b16 %v1450
      %v1547 = vunpack.c.l.b16 %v1451
      %v1548 = vunpack.c.l.b16 %v1452
      %v1549 = vunpack.c.l.b16 %v1453
      %v1550 = vunpack.c.l.b16 %v1454
      %v1551 = vunpack.c.l.b16 %v1455
      %v1552 = vunpack.c.l.b16 %v1456
      %v1553 = vunpack.c.l.b16 %v1457
      %v1554 = vunpack.c.l.b16 %v1458
      %v1555 = vunpack.c.l.b16 %v1459
      %v1556 = vunpack.c.l.b16 %v1460
      %v1557 = vunpack.c.l.b16 %v1461
      %v1558 = vunpack.c.l.b16 %v1462
      %v1559 = vunpack.c.l.b16 %v1463
      %v1560 = vunpack.c.l.b16 %v1464
      %v1561 = vpack.c.b16 %v1546, %v1545
      %v1562 = vpack.c.b16 %v1548, %v1547
      %v1563 = vpack.c.b16 %v1550, %v1549
      %v1564 = vpack.c.b16 %v1552, %v1551
      %v1565 = vpack.c.b16 %v1554, %v1553
      %v1566 = vpack.c.b16 %v1556, %v1555
      %v1567 = vpack.c.b16 %v1558, %v1557
      %v1568 = vpack.c.b16 %v1560, %v1559
      %1577 = vmatprep.subr.bf16.mxu0 0
      %1578 = vmatpush1.bf16.msra.mxu0 %v1561
      %1579 = vmatprep.subr.bf16.mxu0 0
      %1580 = vmatpush1.bf16.msra.mxu0 %v1562
      %1581 = vmatprep.subr.bf16.mxu0 0
      %1582 = vmatpush1.bf16.msra.mxu0 %v1563
      %1583 = vmatprep.subr.bf16.mxu0 0
      %1584 = vmatpush1.bf16.msra.mxu0 %v1564
      %1585 = vmatprep.subr.bf16.mxu0 0
      %1586 = vmatpush1.bf16.msra.mxu0 %v1565
      %1587 = vmatprep.subr.bf16.mxu0 0
      %1588 = vmatpush1.bf16.msra.mxu0 %v1566
      %1589 = vmatprep.subr.bf16.mxu0 0
      %1590 = vmatpush1.bf16.msra.mxu0 %v1567
      %1591 = vmatprep.subr.bf16.mxu0 0
      %1592 = vmatpush1.bf16.msra.mxu0 %v1568
      %1593 = vmatprep.subr.bf16.mxu0 0
      %1594 = vmatpush1.bf16.msra.mxu0 0
      %1595 = vmatprep.subr.bf16.mxu0 0
      %1596 = vmatpush1.bf16.msra.mxu0 0
      %1597 = vmatprep.subr.bf16.mxu0 0
      %1598 = vmatpush1.bf16.msra.mxu0 0
      %1599 = vmatprep.subr.bf16.mxu0 0
      %1600 = vmatpush1.bf16.msra.mxu0 0
      %1601 = vmatprep.subr.bf16.mxu0 0
      %1602 = vmatpush1.bf16.msra.mxu0 0
      %1603 = vmatprep.subr.bf16.mxu0 0
      %1604 = vmatpush1.bf16.msra.mxu0 0
      %1605 = vmatprep.subr.bf16.mxu0 0
      %1606 = vmatpush1.bf16.msra.mxu0 0
      %1607 = vmatprep.subr.bf16.mxu0 0
      %1608 = vmatpush1.bf16.msra.mxu0 0
      %1609 = vmatprep.mubr.bf16.mxu0 0
      %1610 = vmatmul.mubr.bf16.gmra.mrb[0].mxu0 %v1497
      %v1611 = vpop.f32.mrb[0].mxu0
      %v1612 = vadd.f32 0.0, %v1611
      %v1613 = vpop.f32.mrb[0].mxu0
      %v1614 = vpop.f32.mrb[0].mxu0
      %v1615 = vadd.f32 0.0, %v1614
      %v1616 = vpop.f32.mrb[0].mxu0
      %1617 = vmatprep.mubr.bf16.mxu0 0
      %1618 = vmatmul.mubr.bf16.gmra.mrb[0].mxu0 %v1498
      %v1619 = vpop.f32.mrb[0].mxu0
      %v1620 = vadd.f32 0.0, %v1619
      %v1621 = vpop.f32.mrb[0].mxu0
      %v1622 = vpop.f32.mrb[0].mxu0
      %v1623 = vadd.f32 0.0, %v1622
      %v1624 = vpop.f32.mrb[0].mxu0
      %1625 = vmatprep.mubr.bf16.mxu0 0
      %1626 = vmatmul.mubr.bf16.gmra.mrb[0].mxu0 %v1499
      %v1627 = vpop.f32.mrb[0].mxu0
      %v1628 = vadd.f32 0.0, %v1627
      %v1629 = vpop.f32.mrb[0].mxu0
      %v1630 = vpop.f32.mrb[0].mxu0
      %v1631 = vadd.f32 0.0, %v1630
      %v1632 = vpop.f32.mrb[0].mxu0
      %1633 = vmatprep.mubr.bf16.mxu0 0
      %1634 = vmatmul.mubr.bf16.gmra.mrb[0].mxu0 %v1500
      %v1635 = vpop.f32.mrb[0].mxu0
      %v1636 = vadd.f32 0.0, %v1635
      %v1637 = vpop.f32.mrb[0].mxu0
      %v1638 = vpop.f32.mrb[0].mxu0
      %v1639 = vadd.f32 0.0, %v1638
      %v1640 = vpop.f32.mrb[0].mxu0
      %1641 = vmatprep.mubr.bf16.mxu0 0
      %1642 = vmatmul.mubr.bf16.gmra.mrb[0].mxu0 %v1501
      %v1643 = vpop.f32.mrb[0].mxu0
      %v1644 = vadd.f32 0.0, %v1643
      %v1645 = vpop.f32.mrb[0].mxu0
      %v1646 = vpop.f32.mrb[0].mxu0
      %v1647 = vadd.f32 0.0, %v1646
      %v1648 = vpop.f32.mrb[0].mxu0
      %1649 = vmatprep.mubr.bf16.mxu0 0
      %1650 = vmatmul.mubr.bf16.gmra.mrb[0].mxu0 %v1502
      %v1651 = vpop.f32.mrb[0].mxu0
      %v1652 = vadd.f32 0.0, %v1651
      %v1653 = vpop.f32.mrb[0].mxu0
      %v1654 = vpop.f32.mrb[0].mxu0
      %v1655 = vadd.f32 0.0, %v1654
      %v1656 = vpop.f32.mrb[0].mxu0
      %1657 = vmatprep.mubr.bf16.mxu0 0
      %1658 = vmatmul.mubr.bf16.gmra.mrb[0].mxu0 %v1503
      %v1659 = vpop.f32.mrb[0].mxu0
      %v1660 = vadd.f32 0.0, %v1659
      %v1661 = vpop.f32.mrb[0].mxu0
      %v1662 = vpop.f32.mrb[0].mxu0
      %v1663 = vadd.f32 0.0, %v1662
      %v1664 = vpop.f32.mrb[0].mxu0
      %1665 = vmatprep.mubr.bf16.mxu0 0
      %1666 = vmatmul.mubr.bf16.gmra.mrb[0].mxu0 %v1504
      %v1667 = vpop.f32.mrb[0].mxu0
      %v1668 = vadd.f32 0.0, %v1667
      %v1669 = vpop.f32.mrb[0].mxu0
      %v1670 = vpop.f32.mrb[0].mxu0
      %v1671 = vadd.f32 0.0, %v1670
      %v1672 = vpop.f32.mrb[0].mxu0
      %1673 = vmatprep.mubr.bf16.mxu0 0
      %1674 = vmatmul.mubr.bf16.gmra.mrb[0].mxu0 %v1505
      %v1675 = vpop.f32.mrb[0].mxu0
      %v1676 = vadd.f32 0.0, %v1675
      %v1677 = vpop.f32.mrb[0].mxu0
      %v1678 = vpop.f32.mrb[0].mxu0
      %v1679 = vadd.f32 0.0, %v1678
      %v1680 = vpop.f32.mrb[0].mxu0
      %1681 = vmatprep.mubr.bf16.mxu0 0
      %1682 = vmatmul.mubr.bf16.gmra.mrb[0].mxu0 %v1506
      %v1683 = vpop.f32.mrb[0].mxu0
      %v1684 = vadd.f32 0.0, %v1683
      %v1685 = vpop.f32.mrb[0].mxu0
      %v1686 = vpop.f32.mrb[0].mxu0
      %v1687 = vadd.f32 0.0, %v1686
      %v1688 = vpop.f32.mrb[0].mxu0
      %1689 = vmatprep.mubr.bf16.mxu0 0
      %1690 = vmatmul.mubr.bf16.gmra.mrb[0].mxu0 %v1507
      %v1691 = vpop.f32.mrb[0].mxu0
      %v1692 = vadd.f32 0.0, %v1691
      %v1693 = vpop.f32.mrb[0].mxu0
      %v1694 = vpop.f32.mrb[0].mxu0
      %v1695 = vadd.f32 0.0, %v1694
      %v1696 = vpop.f32.mrb[0].mxu0
      %1697 = vmatprep.mubr.bf16.mxu0 0
      %1698 = vmatmul.mubr.bf16.gmra.mrb[0].mxu0 %v1508
      %v1699 = vpop.f32.mrb[0].mxu0
      %v1700 = vadd.f32 0.0, %v1699
      %v1701 = vpop.f32.mrb[0].mxu0
      %v1702 = vpop.f32.mrb[0].mxu0
      %v1703 = vadd.f32 0.0, %v1702
      %v1704 = vpop.f32.mrb[0].mxu0
      %1705 = vmatprep.mubr.bf16.mxu0 0
      %1706 = vmatmul.mubr.bf16.gmra.mrb[0].mxu0 %v1509
      %v1707 = vpop.f32.mrb[0].mxu0
      %v1708 = vadd.f32 0.0, %v1707
      %v1709 = vpop.f32.mrb[0].mxu0
      %v1710 = vpop.f32.mrb[0].mxu0
      %v1711 = vadd.f32 0.0, %v1710
      %v1712 = vpop.f32.mrb[0].mxu0
      %1713 = vmatprep.mubr.bf16.mxu0 0
      %1714 = vmatmul.mubr.bf16.gmra.mrb[0].mxu0 %v1510
      %v1715 = vpop.f32.mrb[0].mxu0
      %v1716 = vadd.f32 0.0, %v1715
      %v1717 = vpop.f32.mrb[0].mxu0
      %v1718 = vpop.f32.mrb[0].mxu0
      %v1719 = vadd.f32 0.0, %v1718
      %v1720 = vpop.f32.mrb[0].mxu0
      %1721 = vmatprep.mubr.bf16.mxu0 0
      %1722 = vmatmul.mubr.bf16.gmra.mrb[0].mxu0 %v1511
      %v1723 = vpop.f32.mrb[0].mxu0
      %v1724 = vadd.f32 0.0, %v1723
      %v1725 = vpop.f32.mrb[0].mxu0
      %v1726 = vpop.f32.mrb[0].mxu0
      %v1727 = vadd.f32 0.0, %v1726
      %v1728 = vpop.f32.mrb[0].mxu0
      %1729 = vmatprep.mubr.bf16.mxu0 0
      %1730 = vmatmul.mubr.bf16.gmra.mrb[0].mxu0 %v1512
      %v1731 = vpop.f32.mrb[0].mxu0
      %v1732 = vadd.f32 0.0, %v1731
      %v1733 = vpop.f32.mrb[0].mxu0
      %v1734 = vpop.f32.mrb[0].mxu0
      %v1735 = vadd.f32 0.0, %v1734
      %v1736 = vpop.f32.mrb[0].mxu0
      %1737 = vdwg.mxu0
      %v1738 = vadd.f32 %v1191, %v1612
      %v1739 = vadd.f32 %v1194, %v1615
      %v1740 = vadd.f32 %v1199, %v1620
      %v1741 = vadd.f32 %v1202, %v1623
      %v1742 = vadd.f32 %v1207, %v1628
      %v1743 = vadd.f32 %v1210, %v1631
      %v1744 = vadd.f32 %v1215, %v1636
      %v1745 = vadd.f32 %v1218, %v1639
      %v1746 = vadd.f32 %v1223, %v1644
      %v1747 = vadd.f32 %v1226, %v1647
      %v1748 = vadd.f32 %v1231, %v1652
      %v1749 = vadd.f32 %v1234, %v1655
      %v1750 = vadd.f32 %v1239, %v1660
      %v1751 = vadd.f32 %v1242, %v1663
      %v1752 = vadd.f32 %v1247, %v1668
      %v1753 = vadd.f32 %v1250, %v1671
      %v1754 = vadd.f32 %v1255, %v1676
      %v1755 = vadd.f32 %v1258, %v1679
      %v1756 = vadd.f32 %v1263, %v1684
      %v1757 = vadd.f32 %v1266, %v1687
      %v1758 = vadd.f32 %v1271, %v1692
      %v1759 = vadd.f32 %v1274, %v1695
      %v1760 = vadd.f32 %v1279, %v1700
      %v1761 = vadd.f32 %v1282, %v1703
      %v1762 = vadd.f32 %v1287, %v1708
      %v1763 = vadd.f32 %v1290, %v1711
      %v1764 = vadd.f32 %v1295, %v1716
      %v1765 = vadd.f32 %v1298, %v1719
      %v1766 = vadd.f32 %v1303, %v1724
      %v1767 = vadd.f32 %v1306, %v1727
      %v1768 = vadd.f32 %v1311, %v1732
      %v1769 = vadd.f32 %v1314, %v1735
      %s1770 = scalar_lea.vmem %s1, 192
      %v1771 = vld [vmem:[%s1770] sm:$0xf]
      %v1772 = vld [vmem:[%s1770 + $0x4] sm:$0xf]
      %v1773 = vld [vmem:[%s1770 + $0x8] sm:$0xf]
      %v1774 = vld [vmem:[%s1770 + $0xc] sm:$0xf]
      %v1775 = vld [vmem:[%s1770 + $0x10] sm:$0xf]
      %v1776 = vld [vmem:[%s1770 + $0x14] sm:$0xf]
      %v1777 = vld [vmem:[%s1770 + $0x18] sm:$0xf]
      %v1778 = vld [vmem:[%s1770 + $0x1c] sm:$0xf]
      %v1779 = vld [vmem:[%s1770 + $0x20] sm:$0xf]
      %v1780 = vld [vmem:[%s1770 + $0x24] sm:$0xf]
      %v1781 = vld [vmem:[%s1770 + $0x28] sm:$0xf]
      %v1782 = vld [vmem:[%s1770 + $0x2c] sm:$0xf]
      %v1783 = vld [vmem:[%s1770 + $0x30] sm:$0xf]
      %v1784 = vld [vmem:[%s1770 + $0x34] sm:$0xf]
      %v1785 = vld [vmem:[%s1770 + $0x38] sm:$0xf]
      %v1786 = vld [vmem:[%s1770 + $0x3c] sm:$0xf]
      %v1789 = vunpack.c.l.b16 %v313
      %v1790 = vunpack.c.l.b16 %v314
      %v1791 = vpack.c.b16 %v1790, %v1789
      %v1809 = vunpack.c.l.b16 %v1771
      %v1810 = vunpack.c.l.b16 %v1772
      %v1811 = vunpack.c.l.b16 %v1773
      %v1812 = vunpack.c.l.b16 %v1774
      %v1813 = vunpack.c.l.b16 %v1775
      %v1814 = vunpack.c.l.b16 %v1776
      %v1815 = vunpack.c.l.b16 %v1777
      %v1816 = vunpack.c.l.b16 %v1778
      %v1817 = vunpack.c.l.b16 %v1779
      %v1818 = vunpack.c.l.b16 %v1780
      %v1819 = vunpack.c.l.b16 %v1781
      %v1820 = vunpack.c.l.b16 %v1782
      %v1821 = vunpack.c.l.b16 %v1783
      %v1822 = vunpack.c.l.b16 %v1784
      %v1823 = vunpack.c.l.b16 %v1785
      %v1824 = vunpack.c.l.b16 %v1786
      %v1825 = vpack.c.b16 %v1810, %v1809
      %v1826 = vpack.c.b16 %v1812, %v1811
      %v1827 = vpack.c.b16 %v1814, %v1813
      %v1828 = vpack.c.b16 %v1816, %v1815
      %v1829 = vpack.c.b16 %v1818, %v1817
      %v1830 = vpack.c.b16 %v1820, %v1819
      %v1831 = vpack.c.b16 %v1822, %v1821
      %v1832 = vpack.c.b16 %v1824, %v1823
      %1841 = vmatprep.subr.bf16.mxu0 0
      %1842 = vmatpush1.bf16.msra.mxu0 %v1825
      %1843 = vmatprep.subr.bf16.mxu0 0
      %1844 = vmatpush1.bf16.msra.mxu0 %v1826
      %1845 = vmatprep.subr.bf16.mxu0 0
      %1846 = vmatpush1.bf16.msra.mxu0 %v1827
      %1847 = vmatprep.subr.bf16.mxu0 0
      %1848 = vmatpush1.bf16.msra.mxu0 %v1828
      %1849 = vmatprep.subr.bf16.mxu0 0
      %1850 = vmatpush1.bf16.msra.mxu0 %v1829
      %1851 = vmatprep.subr.bf16.mxu0 0
      %1852 = vmatpush1.bf16.msra.mxu0 %v1830
      %1853 = vmatprep.subr.bf16.mxu0 0
      %1854 = vmatpush1.bf16.msra.mxu0 %v1831
      %1855 = vmatprep.subr.bf16.mxu0 0
      %1856 = vmatpush1.bf16.msra.mxu0 %v1832
      %1857 = vmatprep.subr.bf16.mxu0 0
      %1858 = vmatpush1.bf16.msra.mxu0 0
      %1859 = vmatprep.subr.bf16.mxu0 0
      %1860 = vmatpush1.bf16.msra.mxu0 0
      %1861 = vmatprep.subr.bf16.mxu0 0
      %1862 = vmatpush1.bf16.msra.mxu0 0
      %1863 = vmatprep.subr.bf16.mxu0 0
      %1864 = vmatpush1.bf16.msra.mxu0 0
      %1865 = vmatprep.subr.bf16.mxu0 0
      %1866 = vmatpush1.bf16.msra.mxu0 0
      %1867 = vmatprep.subr.bf16.mxu0 0
      %1868 = vmatpush1.bf16.msra.mxu0 0
      %1869 = vmatprep.subr.bf16.mxu0 0
      %1870 = vmatpush1.bf16.msra.mxu0 0
      %1871 = vmatprep.subr.bf16.mxu0 0
      %1872 = vmatpush1.bf16.msra.mxu0 0
      %1873 = vmatprep.mubr.bf16.mxu0 0
      %1874 = vmatmul.mubr.bf16.gmra.mrb[0].mxu0 %v1077
      %v1875 = vpop.f32.mrb[0].mxu0
      %v1876 = vadd.f32 0.0, %v1875
      %v1877 = vpop.f32.mrb[0].mxu0
      %v1878 = vpop.f32.mrb[0].mxu0
      %v1879 = vadd.f32 0.0, %v1878
      %v1880 = vpop.f32.mrb[0].mxu0
      %1881 = vmatprep.mubr.bf16.mxu0 0
      %1882 = vmatmul.mubr.bf16.gmra.mrb[0].mxu0 %v1078
      %v1883 = vpop.f32.mrb[0].mxu0
      %v1884 = vadd.f32 0.0, %v1883
      %v1885 = vpop.f32.mrb[0].mxu0
      %v1886 = vpop.f32.mrb[0].mxu0
      %v1887 = vadd.f32 0.0, %v1886
      %v1888 = vpop.f32.mrb[0].mxu0
      %1889 = vmatprep.mubr.bf16.mxu0 0
      %1890 = vmatmul.mubr.bf16.gmra.mrb[0].mxu0 %v1079
      %v1891 = vpop.f32.mrb[0].mxu0
      %v1892 = vadd.f32 0.0, %v1891
      %v1893 = vpop.f32.mrb[0].mxu0
      %v1894 = vpop.f32.mrb[0].mxu0
      %v1895 = vadd.f32 0.0, %v1894
      %v1896 = vpop.f32.mrb[0].mxu0
      %1897 = vmatprep.mubr.bf16.mxu0 0
      %1898 = vmatmul.mubr.bf16.gmra.mrb[0].mxu0 %v1080
      %v1899 = vpop.f32.mrb[0].mxu0
      %v1900 = vadd.f32 0.0, %v1899
      %v1901 = vpop.f32.mrb[0].mxu0
      %v1902 = vpop.f32.mrb[0].mxu0
      %v1903 = vadd.f32 0.0, %v1902
      %v1904 = vpop.f32.mrb[0].mxu0
      %1905 = vmatprep.mubr.bf16.mxu0 0
      %1906 = vmatmul.mubr.bf16.gmra.mrb[0].mxu0 %v1081
      %v1907 = vpop.f32.mrb[0].mxu0
      %v1908 = vadd.f32 0.0, %v1907
      %v1909 = vpop.f32.mrb[0].mxu0
      %v1910 = vpop.f32.mrb[0].mxu0
      %v1911 = vadd.f32 0.0, %v1910
      %v1912 = vpop.f32.mrb[0].mxu0
      %1913 = vmatprep.mubr.bf16.mxu0 0
      %1914 = vmatmul.mubr.bf16.gmra.mrb[0].mxu0 %v1082
      %v1915 = vpop.f32.mrb[0].mxu0
      %v1916 = vadd.f32 0.0, %v1915
      %v1917 = vpop.f32.mrb[0].mxu0
      %v1918 = vpop.f32.mrb[0].mxu0
      %v1919 = vadd.f32 0.0, %v1918
      %v1920 = vpop.f32.mrb[0].mxu0
      %1921 = vmatprep.mubr.bf16.mxu0 0
      %1922 = vmatmul.mubr.bf16.gmra.mrb[0].mxu0 %v1083
      %v1923 = vpop.f32.mrb[0].mxu0
      %v1924 = vadd.f32 0.0, %v1923
      %v1925 = vpop.f32.mrb[0].mxu0
      %v1926 = vpop.f32.mrb[0].mxu0
      %v1927 = vadd.f32 0.0, %v1926
      %v1928 = vpop.f32.mrb[0].mxu0
      %1929 = vmatprep.mubr.bf16.mxu0 0
      %1930 = vmatmul.mubr.bf16.gmra.mrb[0].mxu0 %v1084
      %v1931 = vpop.f32.mrb[0].mxu0
      %v1932 = vadd.f32 0.0, %v1931
      %v1933 = vpop.f32.mrb[0].mxu0
      %v1934 = vpop.f32.mrb[0].mxu0
      %v1935 = vadd.f32 0.0, %v1934
      %v1936 = vpop.f32.mrb[0].mxu0
      %1937 = vmatprep.mubr.bf16.mxu0 0
      %1938 = vmatmul.mubr.bf16.gmra.mrb[0].mxu0 %v1085
      %v1939 = vpop.f32.mrb[0].mxu0
      %v1940 = vadd.f32 0.0, %v1939
      %v1941 = vpop.f32.mrb[0].mxu0
      %v1942 = vpop.f32.mrb[0].mxu0
      %v1943 = vadd.f32 0.0, %v1942
      %v1944 = vpop.f32.mrb[0].mxu0
      %1945 = vmatprep.mubr.bf16.mxu0 0
      %1946 = vmatmul.mubr.bf16.gmra.mrb[0].mxu0 %v1086
      %v1947 = vpop.f32.mrb[0].mxu0
      %v1948 = vadd.f32 0.0, %v1947
      %v1949 = vpop.f32.mrb[0].mxu0
      %v1950 = vpop.f32.mrb[0].mxu0
      %v1951 = vadd.f32 0.0, %v1950
      %v1952 = vpop.f32.mrb[0].mxu0
      %1953 = vmatprep.mubr.bf16.mxu0 0
      %1954 = vmatmul.mubr.bf16.gmra.mrb[0].mxu0 %v1087
      %v1955 = vpop.f32.mrb[0].mxu0
      %v1956 = vadd.f32 0.0, %v1955
      %v1957 = vpop.f32.mrb[0].mxu0
      %v1958 = vpop.f32.mrb[0].mxu0
      %v1959 = vadd.f32 0.0, %v1958
      %v1960 = vpop.f32.mrb[0].mxu0
      %1961 = vmatprep.mubr.bf16.mxu0 0
      %1962 = vmatmul.mubr.bf16.gmra.mrb[0].mxu0 %v1088
      %v1963 = vpop.f32.mrb[0].mxu0
      %v1964 = vadd.f32 0.0, %v1963
      %v1965 = vpop.f32.mrb[0].mxu0
      %v1966 = vpop.f32.mrb[0].mxu0
      %v1967 = vadd.f32 0.0, %v1966
      %v1968 = vpop.f32.mrb[0].mxu0
      %1969 = vmatprep.mubr.bf16.mxu0 0
      %1970 = vmatmul.mubr.bf16.gmra.mrb[0].mxu0 %v1089
      %v1971 = vpop.f32.mrb[0].mxu0
      %v1972 = vadd.f32 0.0, %v1971
      %v1973 = vpop.f32.mrb[0].mxu0
      %v1974 = vpop.f32.mrb[0].mxu0
      %v1975 = vadd.f32 0.0, %v1974
      %v1976 = vpop.f32.mrb[0].mxu0
      %1977 = vmatprep.mubr.bf16.mxu0 0
      %1978 = vmatmul.mubr.bf16.gmra.mrb[0].mxu0 %v1090
      %v1979 = vpop.f32.mrb[0].mxu0
      %v1980 = vadd.f32 0.0, %v1979
      %v1981 = vpop.f32.mrb[0].mxu0
      %v1982 = vpop.f32.mrb[0].mxu0
      %v1983 = vadd.f32 0.0, %v1982
      %v1984 = vpop.f32.mrb[0].mxu0
      %1985 = vmatprep.mubr.bf16.mxu0 0
      %1986 = vmatmul.mubr.bf16.gmra.mrb[0].mxu0 %v1091
      %v1987 = vpop.f32.mrb[0].mxu0
      %v1988 = vadd.f32 0.0, %v1987
      %v1989 = vpop.f32.mrb[0].mxu0
      %v1990 = vpop.f32.mrb[0].mxu0
      %v1991 = vadd.f32 0.0, %v1990
      %v1992 = vpop.f32.mrb[0].mxu0
      %1993 = vmatprep.mubr.bf16.mxu0 0
      %1994 = vmatmul.mubr.bf16.gmra.mrb[0].mxu0 %v1791
      %v1995 = vpop.f32.mrb[0].mxu0
      %v1996 = vadd.f32 0.0, %v1995
      %v1997 = vpop.f32.mrb[0].mxu0
      %v1998 = vpop.f32.mrb[0].mxu0
      %v1999 = vadd.f32 0.0, %v1998
      %v2000 = vpop.f32.mrb[0].mxu0
      %2001 = vdwg.mxu0
      %v2002 = vadd.f32 %v1738, %v1876
      %v2003 = vadd.f32 %v1739, %v1879
      %v2004 = vadd.f32 %v1740, %v1884
      %v2005 = vadd.f32 %v1741, %v1887
      %v2006 = vadd.f32 %v1742, %v1892
      %v2007 = vadd.f32 %v1743, %v1895
      %v2008 = vadd.f32 %v1744, %v1900
      %v2009 = vadd.f32 %v1745, %v1903
      %v2010 = vadd.f32 %v1746, %v1908
      %v2011 = vadd.f32 %v1747, %v1911
      %v2012 = vadd.f32 %v1748, %v1916
      %v2013 = vadd.f32 %v1749, %v1919
      %v2014 = vadd.f32 %v1750, %v1924
      %v2015 = vadd.f32 %v1751, %v1927
      %v2016 = vadd.f32 %v1752, %v1932
      %v2017 = vadd.f32 %v1753, %v1935
      %v2018 = vadd.f32 %v1754, %v1940
      %v2019 = vadd.f32 %v1755, %v1943
      %v2020 = vadd.f32 %v1756, %v1948
      %v2021 = vadd.f32 %v1757, %v1951
      %v2022 = vadd.f32 %v1758, %v1956
      %v2023 = vadd.f32 %v1759, %v1959
      %v2024 = vadd.f32 %v1760, %v1964
      %v2025 = vadd.f32 %v1761, %v1967
      %v2026 = vadd.f32 %v1762, %v1972
      %v2027 = vadd.f32 %v1763, %v1975
      %v2028 = vadd.f32 %v1764, %v1980
      %v2029 = vadd.f32 %v1765, %v1983
      %v2030 = vadd.f32 %v1766, %v1988
      %v2031 = vadd.f32 %v1767, %v1991
      %v2032 = vadd.f32 %v1768, %v1996
      %v2033 = vadd.f32 %v1769, %v1999
      %v2035 = vshrl.u32 %v313, 16
      %v2037 = vrot.slane %v2035, 4
      %v2038 = vshll.u32 %v313, 16
      %v2040 = vrot.slane %v2038, 5
      %v2041 = vor.u32 %v2037, %v2040
      %v2042 = vrot.slane %v2041, 4
      %v2044 = vshll.u32 %v314, 16
      %v2046 = vrot.slane %v2044, 5
      %v2047 = vsel %vm337, %v2042, %v2046
      %v2048 = vshrl.u32 %v314, 16
      %v2050 = vrot.slane %v2048, 4
      %v2051 = vor.u32 %v2050, %v2046
      %v2052 = vrot.slane %v2051, 4
      %v2054 = vshll.u32 %v315, 16
      %v2056 = vrot.slane %v2054, 5
      %v2057 = vsel %vm337, %v2052, %v2056
      %s2058 = scalar_lea.vmem %s1, 256
      %v2059 = vld [vmem:[%s2058] sm:$0xf]
      %v2060 = vld [vmem:[%s2058 + $0x4] sm:$0xf]
      %v2061 = vld [vmem:[%s2058 + $0x8] sm:$0xf]
      %v2062 = vld [vmem:[%s2058 + $0xc] sm:$0xf]
      %v2063 = vld [vmem:[%s2058 + $0x10] sm:$0xf]
      %v2064 = vld [vmem:[%s2058 + $0x14] sm:$0xf]
      %v2065 = vld [vmem:[%s2058 + $0x18] sm:$0xf]
      %v2066 = vld [vmem:[%s2058 + $0x1c] sm:$0xf]
      %v2067 = vld [vmem:[%s2058 + $0x20] sm:$0xf]
      %v2068 = vld [vmem:[%s2058 + $0x24] sm:$0xf]
      %v2069 = vld [vmem:[%s2058 + $0x28] sm:$0xf]
      %v2070 = vld [vmem:[%s2058 + $0x2c] sm:$0xf]
      %v2071 = vld [vmem:[%s2058 + $0x30] sm:$0xf]
      %v2072 = vld [vmem:[%s2058 + $0x34] sm:$0xf]
      %v2073 = vld [vmem:[%s2058 + $0x38] sm:$0xf]
      %v2074 = vld [vmem:[%s2058 + $0x3c] sm:$0xf]
      %v2075 = vunpack.c.l.b16 %v2047
      %v2076 = vunpack.c.l.b16 %v2057
      %v2077 = vpack.c.b16 %v2076, %v2075
      %v2095 = vunpack.c.l.b16 %v2059
      %v2096 = vunpack.c.l.b16 %v2060
      %v2097 = vunpack.c.l.b16 %v2061
      %v2098 = vunpack.c.l.b16 %v2062
      %v2099 = vunpack.c.l.b16 %v2063
      %v2100 = vunpack.c.l.b16 %v2064
      %v2101 = vunpack.c.l.b16 %v2065
      %v2102 = vunpack.c.l.b16 %v2066
      %v2103 = vunpack.c.l.b16 %v2067
      %v2104 = vunpack.c.l.b16 %v2068
      %v2105 = vunpack.c.l.b16 %v2069
      %v2106 = vunpack.c.l.b16 %v2070
      %v2107 = vunpack.c.l.b16 %v2071
      %v2108 = vunpack.c.l.b16 %v2072
      %v2109 = vunpack.c.l.b16 %v2073
      %v2110 = vunpack.c.l.b16 %v2074
      %v2111 = vpack.c.b16 %v2096, %v2095
      %v2112 = vpack.c.b16 %v2098, %v2097
      %v2113 = vpack.c.b16 %v2100, %v2099
      %v2114 = vpack.c.b16 %v2102, %v2101
      %v2115 = vpack.c.b16 %v2104, %v2103
      %v2116 = vpack.c.b16 %v2106, %v2105
      %v2117 = vpack.c.b16 %v2108, %v2107
      %v2118 = vpack.c.b16 %v2110, %v2109
      %2127 = vmatprep.subr.bf16.mxu0 0
      %2128 = vmatpush1.bf16.msra.mxu0 %v2111
      %2129 = vmatprep.subr.bf16.mxu0 0
      %2130 = vmatpush1.bf16.msra.mxu0 %v2112
      %2131 = vmatprep.subr.bf16.mxu0 0
      %2132 = vmatpush1.bf16.msra.mxu0 %v2113
      %2133 = vmatprep.subr.bf16.mxu0 0
      %2134 = vmatpush1.bf16.msra.mxu0 %v2114
      %2135 = vmatprep.subr.bf16.mxu0 0
      %2136 = vmatpush1.bf16.msra.mxu0 %v2115
      %2137 = vmatprep.subr.bf16.mxu0 0
      %2138 = vmatpush1.bf16.msra.mxu0 %v2116
      %2139 = vmatprep.subr.bf16.mxu0 0
      %2140 = vmatpush1.bf16.msra.mxu0 %v2117
      %2141 = vmatprep.subr.bf16.mxu0 0
      %2142 = vmatpush1.bf16.msra.mxu0 %v2118
      %2143 = vmatprep.subr.bf16.mxu0 0
      %2144 = vmatpush1.bf16.msra.mxu0 0
      %2145 = vmatprep.subr.bf16.mxu0 0
      %2146 = vmatpush1.bf16.msra.mxu0 0
      %2147 = vmatprep.subr.bf16.mxu0 0
      %2148 = vmatpush1.bf16.msra.mxu0 0
      %2149 = vmatprep.subr.bf16.mxu0 0
      %2150 = vmatpush1.bf16.msra.mxu0 0
      %2151 = vmatprep.subr.bf16.mxu0 0
      %2152 = vmatpush1.bf16.msra.mxu0 0
      %2153 = vmatprep.subr.bf16.mxu0 0
      %2154 = vmatpush1.bf16.msra.mxu0 0
      %2155 = vmatprep.subr.bf16.mxu0 0
      %2156 = vmatpush1.bf16.msra.mxu0 0
      %2157 = vmatprep.subr.bf16.mxu0 0
      %2158 = vmatpush1.bf16.msra.mxu0 0
      %2159 = vmatprep.mubr.bf16.mxu0 0
      %2160 = vmatmul.mubr.bf16.gmra.mrb[0].mxu0 %v772
      %v2161 = vpop.f32.mrb[0].mxu0
      %v2162 = vadd.f32 0.0, %v2161
      %v2163 = vpop.f32.mrb[0].mxu0
      %v2164 = vpop.f32.mrb[0].mxu0
      %v2165 = vadd.f32 0.0, %v2164
      %v2166 = vpop.f32.mrb[0].mxu0
      %2167 = vmatprep.mubr.bf16.mxu0 0
      %2168 = vmatmul.mubr.bf16.gmra.mrb[0].mxu0 %v773
      %v2169 = vpop.f32.mrb[0].mxu0
      %v2170 = vadd.f32 0.0, %v2169
      %v2171 = vpop.f32.mrb[0].mxu0
      %v2172 = vpop.f32.mrb[0].mxu0
      %v2173 = vadd.f32 0.0, %v2172
      %v2174 = vpop.f32.mrb[0].mxu0
      %2175 = vmatprep.mubr.bf16.mxu0 0
      %2176 = vmatmul.mubr.bf16.gmra.mrb[0].mxu0 %v774
      %v2177 = vpop.f32.mrb[0].mxu0
      %v2178 = vadd.f32 0.0, %v2177
      %v2179 = vpop.f32.mrb[0].mxu0
      %v2180 = vpop.f32.mrb[0].mxu0
      %v2181 = vadd.f32 0.0, %v2180
      %v2182 = vpop.f32.mrb[0].mxu0
      %2183 = vmatprep.mubr.bf16.mxu0 0
      %2184 = vmatmul.mubr.bf16.gmra.mrb[0].mxu0 %v775
      %v2185 = vpop.f32.mrb[0].mxu0
      %v2186 = vadd.f32 0.0, %v2185
      %v2187 = vpop.f32.mrb[0].mxu0
      %v2188 = vpop.f32.mrb[0].mxu0
      %v2189 = vadd.f32 0.0, %v2188
      %v2190 = vpop.f32.mrb[0].mxu0
      %2191 = vmatprep.mubr.bf16.mxu0 0
      %2192 = vmatmul.mubr.bf16.gmra.mrb[0].mxu0 %v776
      %v2193 = vpop.f32.mrb[0].mxu0
      %v2194 = vadd.f32 0.0, %v2193
      %v2195 = vpop.f32.mrb[0].mxu0
      %v2196 = vpop.f32.mrb[0].mxu0
      %v2197 = vadd.f32 0.0, %v2196
      %v2198 = vpop.f32.mrb[0].mxu0
      %2199 = vmatprep.mubr.bf16.mxu0 0
      %2200 = vmatmul.mubr.bf16.gmra.mrb[0].mxu0 %v777
      %v2201 = vpop.f32.mrb[0].mxu0
      %v2202 = vadd.f32 0.0, %v2201
      %v2203 = vpop.f32.mrb[0].mxu0
      %v2204 = vpop.f32.mrb[0].mxu0
      %v2205 = vadd.f32 0.0, %v2204
      %v2206 = vpop.f32.mrb[0].mxu0
      %2207 = vmatprep.mubr.bf16.mxu0 0
      %2208 = vmatmul.mubr.bf16.gmra.mrb[0].mxu0 %v778
      %v2209 = vpop.f32.mrb[0].mxu0
      %v2210 = vadd.f32 0.0, %v2209
      %v2211 = vpop.f32.mrb[0].mxu0
      %v2212 = vpop.f32.mrb[0].mxu0
      %v2213 = vadd.f32 0.0, %v2212
      %v2214 = vpop.f32.mrb[0].mxu0
      %2215 = vmatprep.mubr.bf16.mxu0 0
      %2216 = vmatmul.mubr.bf16.gmra.mrb[0].mxu0 %v779
      %v2217 = vpop.f32.mrb[0].mxu0
      %v2218 = vadd.f32 0.0, %v2217
      %v2219 = vpop.f32.mrb[0].mxu0
      %v2220 = vpop.f32.mrb[0].mxu0
      %v2221 = vadd.f32 0.0, %v2220
      %v2222 = vpop.f32.mrb[0].mxu0
      %2223 = vmatprep.mubr.bf16.mxu0 0
      %2224 = vmatmul.mubr.bf16.gmra.mrb[0].mxu0 %v780
      %v2225 = vpop.f32.mrb[0].mxu0
      %v2226 = vadd.f32 0.0, %v2225
      %v2227 = vpop.f32.mrb[0].mxu0
      %v2228 = vpop.f32.mrb[0].mxu0
      %v2229 = vadd.f32 0.0, %v2228
      %v2230 = vpop.f32.mrb[0].mxu0
      %2231 = vmatprep.mubr.bf16.mxu0 0
      %2232 = vmatmul.mubr.bf16.gmra.mrb[0].mxu0 %v781
      %v2233 = vpop.f32.mrb[0].mxu0
      %v2234 = vadd.f32 0.0, %v2233
      %v2235 = vpop.f32.mrb[0].mxu0
      %v2236 = vpop.f32.mrb[0].mxu0
      %v2237 = vadd.f32 0.0, %v2236
      %v2238 = vpop.f32.mrb[0].mxu0
      %2239 = vmatprep.mubr.bf16.mxu0 0
      %2240 = vmatmul.mubr.bf16.gmra.mrb[0].mxu0 %v782
      %v2241 = vpop.f32.mrb[0].mxu0
      %v2242 = vadd.f32 0.0, %v2241
      %v2243 = vpop.f32.mrb[0].mxu0
      %v2244 = vpop.f32.mrb[0].mxu0
      %v2245 = vadd.f32 0.0, %v2244
      %v2246 = vpop.f32.mrb[0].mxu0
      %2247 = vmatprep.mubr.bf16.mxu0 0
      %2248 = vmatmul.mubr.bf16.gmra.mrb[0].mxu0 %v783
      %v2249 = vpop.f32.mrb[0].mxu0
      %v2250 = vadd.f32 0.0, %v2249
      %v2251 = vpop.f32.mrb[0].mxu0
      %v2252 = vpop.f32.mrb[0].mxu0
      %v2253 = vadd.f32 0.0, %v2252
      %v2254 = vpop.f32.mrb[0].mxu0
      %2255 = vmatprep.mubr.bf16.mxu0 0
      %2256 = vmatmul.mubr.bf16.gmra.mrb[0].mxu0 %v784
      %v2257 = vpop.f32.mrb[0].mxu0
      %v2258 = vadd.f32 0.0, %v2257
      %v2259 = vpop.f32.mrb[0].mxu0
      %v2260 = vpop.f32.mrb[0].mxu0
      %v2261 = vadd.f32 0.0, %v2260
      %v2262 = vpop.f32.mrb[0].mxu0
      %2263 = vmatprep.mubr.bf16.mxu0 0
      %2264 = vmatmul.mubr.bf16.gmra.mrb[0].mxu0 %v785
      %v2265 = vpop.f32.mrb[0].mxu0
      %v2266 = vadd.f32 0.0, %v2265
      %v2267 = vpop.f32.mrb[0].mxu0
      %v2268 = vpop.f32.mrb[0].mxu0
      %v2269 = vadd.f32 0.0, %v2268
      %v2270 = vpop.f32.mrb[0].mxu0
      %2271 = vmatprep.mubr.bf16.mxu0 0
      %2272 = vmatmul.mubr.bf16.gmra.mrb[0].mxu0 %v786
      %v2273 = vpop.f32.mrb[0].mxu0
      %v2274 = vadd.f32 0.0, %v2273
      %v2275 = vpop.f32.mrb[0].mxu0
      %v2276 = vpop.f32.mrb[0].mxu0
      %v2277 = vadd.f32 0.0, %v2276
      %v2278 = vpop.f32.mrb[0].mxu0
      %2279 = vmatprep.mubr.bf16.mxu0 0
      %2280 = vmatmul.mubr.bf16.gmra.mrb[0].mxu0 %v2077
      %v2281 = vpop.f32.mrb[0].mxu0
      %v2282 = vadd.f32 0.0, %v2281
      %v2283 = vpop.f32.mrb[0].mxu0
      %v2284 = vpop.f32.mrb[0].mxu0
      %v2285 = vadd.f32 0.0, %v2284
      %v2286 = vpop.f32.mrb[0].mxu0
      %2287 = vdwg.mxu0
      %v2288 = vadd.f32 %v2002, %v2162
      %v2289 = vadd.f32 %v2003, %v2165
      %v2290 = vadd.f32 %v2004, %v2170
      %v2291 = vadd.f32 %v2005, %v2173
      %v2292 = vadd.f32 %v2006, %v2178
      %v2293 = vadd.f32 %v2007, %v2181
      %v2294 = vadd.f32 %v2008, %v2186
      %v2295 = vadd.f32 %v2009, %v2189
      %v2296 = vadd.f32 %v2010, %v2194
      %v2297 = vadd.f32 %v2011, %v2197
      %v2298 = vadd.f32 %v2012, %v2202
      %v2299 = vadd.f32 %v2013, %v2205
      %v2300 = vadd.f32 %v2014, %v2210
      %v2301 = vadd.f32 %v2015, %v2213
      %v2302 = vadd.f32 %v2016, %v2218
      %v2303 = vadd.f32 %v2017, %v2221
      %v2304 = vadd.f32 %v2018, %v2226
      %v2305 = vadd.f32 %v2019, %v2229
      %v2306 = vadd.f32 %v2020, %v2234
      %v2307 = vadd.f32 %v2021, %v2237
      %v2308 = vadd.f32 %v2022, %v2242
      %v2309 = vadd.f32 %v2023, %v2245
      %v2310 = vadd.f32 %v2024, %v2250
      %v2311 = vadd.f32 %v2025, %v2253
      %v2312 = vadd.f32 %v2026, %v2258
      %v2313 = vadd.f32 %v2027, %v2261
      %v2314 = vadd.f32 %v2028, %v2266
      %v2315 = vadd.f32 %v2029, %v2269
      %v2316 = vadd.f32 %v2030, %v2274
      %v2317 = vadd.f32 %v2031, %v2277
      %v2318 = vadd.f32 %v2032, %v2282
      %v2319 = vadd.f32 %v2033, %v2285
      %v2321 = vrot.slane %v313, 5
      %v2322 = vrot.slane %v2321, 4
      %v2323 = vrot.slane %v314, 5
      %v2324 = vsel %vm1335, %v2322, %v2323
      %v2325 = vrot.slane %v2323, 4
      %v2326 = vrot.slane %v315, 5
      %v2327 = vsel %vm1335, %v2325, %v2326
      %s2328 = scalar_lea.vmem %s1, 320
      %v2329 = vld [vmem:[%s2328] sm:$0xf]
      %v2330 = vld [vmem:[%s2328 + $0x4] sm:$0xf]
      %v2331 = vld [vmem:[%s2328 + $0x8] sm:$0xf]
      %v2332 = vld [vmem:[%s2328 + $0xc] sm:$0xf]
      %v2333 = vld [vmem:[%s2328 + $0x10] sm:$0xf]
      %v2334 = vld [vmem:[%s2328 + $0x14] sm:$0xf]
      %v2335 = vld [vmem:[%s2328 + $0x18] sm:$0xf]
      %v2336 = vld [vmem:[%s2328 + $0x1c] sm:$0xf]
      %v2337 = vld [vmem:[%s2328 + $0x20] sm:$0xf]
      %v2338 = vld [vmem:[%s2328 + $0x24] sm:$0xf]
      %v2339 = vld [vmem:[%s2328 + $0x28] sm:$0xf]
      %v2340 = vld [vmem:[%s2328 + $0x2c] sm:$0xf]
      %v2341 = vld [vmem:[%s2328 + $0x30] sm:$0xf]
      %v2342 = vld [vmem:[%s2328 + $0x34] sm:$0xf]
      %v2343 = vld [vmem:[%s2328 + $0x38] sm:$0xf]
      %v2344 = vld [vmem:[%s2328 + $0x3c] sm:$0xf]
      %v2345 = vunpack.c.l.b16 %v2324
      %v2346 = vunpack.c.l.b16 %v2327
      %v2347 = vpack.c.b16 %v2346, %v2345
      %v2365 = vunpack.c.l.b16 %v2329
      %v2366 = vunpack.c.l.b16 %v2330
      %v2367 = vunpack.c.l.b16 %v2331
      %v2368 = vunpack.c.l.b16 %v2332
      %v2369 = vunpack.c.l.b16 %v2333
      %v2370 = vunpack.c.l.b16 %v2334
      %v2371 = vunpack.c.l.b16 %v2335
      %v2372 = vunpack.c.l.b16 %v2336
      %v2373 = vunpack.c.l.b16 %v2337
      %v2374 = vunpack.c.l.b16 %v2338
      %v2375 = vunpack.c.l.b16 %v2339
      %v2376 = vunpack.c.l.b16 %v2340
      %v2377 = vunpack.c.l.b16 %v2341
      %v2378 = vunpack.c.l.b16 %v2342
      %v2379 = vunpack.c.l.b16 %v2343
      %v2380 = vunpack.c.l.b16 %v2344
      %v2381 = vpack.c.b16 %v2366, %v2365
      %v2382 = vpack.c.b16 %v2368, %v2367
      %v2383 = vpack.c.b16 %v2370, %v2369
      %v2384 = vpack.c.b16 %v2372, %v2371
      %v2385 = vpack.c.b16 %v2374, %v2373
      %v2386 = vpack.c.b16 %v2376, %v2375
      %v2387 = vpack.c.b16 %v2378, %v2377
      %v2388 = vpack.c.b16 %v2380, %v2379
      %2397 = vmatprep.subr.bf16.mxu0 0
      %2398 = vmatpush1.bf16.msra.mxu0 %v2381
      %2399 = vmatprep.subr.bf16.mxu0 0
      %2400 = vmatpush1.bf16.msra.mxu0 %v2382
      %2401 = vmatprep.subr.bf16.mxu0 0
      %2402 = vmatpush1.bf16.msra.mxu0 %v2383
      %2403 = vmatprep.subr.bf16.mxu0 0
      %2404 = vmatpush1.bf16.msra.mxu0 %v2384
      %2405 = vmatprep.subr.bf16.mxu0 0
      %2406 = vmatpush1.bf16.msra.mxu0 %v2385
      %2407 = vmatprep.subr.bf16.mxu0 0
      %2408 = vmatpush1.bf16.msra.mxu0 %v2386
      %2409 = vmatprep.subr.bf16.mxu0 0
      %2410 = vmatpush1.bf16.msra.mxu0 %v2387
      %2411 = vmatprep.subr.bf16.mxu0 0
      %2412 = vmatpush1.bf16.msra.mxu0 %v2388
      %2413 = vmatprep.subr.bf16.mxu0 0
      %2414 = vmatpush1.bf16.msra.mxu0 0
      %2415 = vmatprep.subr.bf16.mxu0 0
      %2416 = vmatpush1.bf16.msra.mxu0 0
      %2417 = vmatprep.subr.bf16.mxu0 0
      %2418 = vmatpush1.bf16.msra.mxu0 0
      %2419 = vmatprep.subr.bf16.mxu0 0
      %2420 = vmatpush1.bf16.msra.mxu0 0
      %2421 = vmatprep.subr.bf16.mxu0 0
      %2422 = vmatpush1.bf16.msra.mxu0 0
      %2423 = vmatprep.subr.bf16.mxu0 0
      %2424 = vmatpush1.bf16.msra.mxu0 0
      %2425 = vmatprep.subr.bf16.mxu0 0
      %2426 = vmatpush1.bf16.msra.mxu0 0
      %2427 = vmatprep.subr.bf16.mxu0 0
      %2428 = vmatpush1.bf16.msra.mxu0 0
      %2429 = vmatprep.mubr.bf16.mxu0 0
      %2430 = vmatmul.mubr.bf16.gmra.mrb[0].mxu0 %v1498
      %v2431 = vpop.f32.mrb[0].mxu0
      %v2432 = vadd.f32 0.0, %v2431
      %v2433 = vpop.f32.mrb[0].mxu0
      %v2434 = vpop.f32.mrb[0].mxu0
      %v2435 = vadd.f32 0.0, %v2434
      %v2436 = vpop.f32.mrb[0].mxu0
      %2437 = vmatprep.mubr.bf16.mxu0 0
      %2438 = vmatmul.mubr.bf16.gmra.mrb[0].mxu0 %v1499
      %v2439 = vpop.f32.mrb[0].mxu0
      %v2440 = vadd.f32 0.0, %v2439
      %v2441 = vpop.f32.mrb[0].mxu0
      %v2442 = vpop.f32.mrb[0].mxu0
      %v2443 = vadd.f32 0.0, %v2442
      %v2444 = vpop.f32.mrb[0].mxu0
      %2445 = vmatprep.mubr.bf16.mxu0 0
      %2446 = vmatmul.mubr.bf16.gmra.mrb[0].mxu0 %v1500
      %v2447 = vpop.f32.mrb[0].mxu0
      %v2448 = vadd.f32 0.0, %v2447
      %v2449 = vpop.f32.mrb[0].mxu0
      %v2450 = vpop.f32.mrb[0].mxu0
      %v2451 = vadd.f32 0.0, %v2450
      %v2452 = vpop.f32.mrb[0].mxu0
      %2453 = vmatprep.mubr.bf16.mxu0 0
      %2454 = vmatmul.mubr.bf16.gmra.mrb[0].mxu0 %v1501
      %v2455 = vpop.f32.mrb[0].mxu0
      %v2456 = vadd.f32 0.0, %v2455
      %v2457 = vpop.f32.mrb[0].mxu0
      %v2458 = vpop.f32.mrb[0].mxu0
      %v2459 = vadd.f32 0.0, %v2458
      %v2460 = vpop.f32.mrb[0].mxu0
      %2461 = vmatprep.mubr.bf16.mxu0 0
      %2462 = vmatmul.mubr.bf16.gmra.mrb[0].mxu0 %v1502
      %v2463 = vpop.f32.mrb[0].mxu0
      %v2464 = vadd.f32 0.0, %v2463
      %v2465 = vpop.f32.mrb[0].mxu0
      %v2466 = vpop.f32.mrb[0].mxu0
      %v2467 = vadd.f32 0.0, %v2466
      %v2468 = vpop.f32.mrb[0].mxu0
      %2469 = vmatprep.mubr.bf16.mxu0 0
      %2470 = vmatmul.mubr.bf16.gmra.mrb[0].mxu0 %v1503
      %v2471 = vpop.f32.mrb[0].mxu0
      %v2472 = vadd.f32 0.0, %v2471
      %v2473 = vpop.f32.mrb[0].mxu0
      %v2474 = vpop.f32.mrb[0].mxu0
      %v2475 = vadd.f32 0.0, %v2474
      %v2476 = vpop.f32.mrb[0].mxu0
      %2477 = vmatprep.mubr.bf16.mxu0 0
      %2478 = vmatmul.mubr.bf16.gmra.mrb[0].mxu0 %v1504
      %v2479 = vpop.f32.mrb[0].mxu0
      %v2480 = vadd.f32 0.0, %v2479
      %v2481 = vpop.f32.mrb[0].mxu0
      %v2482 = vpop.f32.mrb[0].mxu0
      %v2483 = vadd.f32 0.0, %v2482
      %v2484 = vpop.f32.mrb[0].mxu0
      %2485 = vmatprep.mubr.bf16.mxu0 0
      %2486 = vmatmul.mubr.bf16.gmra.mrb[0].mxu0 %v1505
      %v2487 = vpop.f32.mrb[0].mxu0
      %v2488 = vadd.f32 0.0, %v2487
      %v2489 = vpop.f32.mrb[0].mxu0
      %v2490 = vpop.f32.mrb[0].mxu0
      %v2491 = vadd.f32 0.0, %v2490
      %v2492 = vpop.f32.mrb[0].mxu0
      %2493 = vmatprep.mubr.bf16.mxu0 0
      %2494 = vmatmul.mubr.bf16.gmra.mrb[0].mxu0 %v1506
      %v2495 = vpop.f32.mrb[0].mxu0
      %v2496 = vadd.f32 0.0, %v2495
      %v2497 = vpop.f32.mrb[0].mxu0
      %v2498 = vpop.f32.mrb[0].mxu0
      %v2499 = vadd.f32 0.0, %v2498
      %v2500 = vpop.f32.mrb[0].mxu0
      %2501 = vmatprep.mubr.bf16.mxu0 0
      %2502 = vmatmul.mubr.bf16.gmra.mrb[0].mxu0 %v1507
      %v2503 = vpop.f32.mrb[0].mxu0
      %v2504 = vadd.f32 0.0, %v2503
      %v2505 = vpop.f32.mrb[0].mxu0
      %v2506 = vpop.f32.mrb[0].mxu0
      %v2507 = vadd.f32 0.0, %v2506
      %v2508 = vpop.f32.mrb[0].mxu0
      %2509 = vmatprep.mubr.bf16.mxu0 0
      %2510 = vmatmul.mubr.bf16.gmra.mrb[0].mxu0 %v1508
      %v2511 = vpop.f32.mrb[0].mxu0
      %v2512 = vadd.f32 0.0, %v2511
      %v2513 = vpop.f32.mrb[0].mxu0
      %v2514 = vpop.f32.mrb[0].mxu0
      %v2515 = vadd.f32 0.0, %v2514
      %v2516 = vpop.f32.mrb[0].mxu0
      %2517 = vmatprep.mubr.bf16.mxu0 0
      %2518 = vmatmul.mubr.bf16.gmra.mrb[0].mxu0 %v1509
      %v2519 = vpop.f32.mrb[0].mxu0
      %v2520 = vadd.f32 0.0, %v2519
      %v2521 = vpop.f32.mrb[0].mxu0
      %v2522 = vpop.f32.mrb[0].mxu0
      %v2523 = vadd.f32 0.0, %v2522
      %v2524 = vpop.f32.mrb[0].mxu0
      %2525 = vmatprep.mubr.bf16.mxu0 0
      %2526 = vmatmul.mubr.bf16.gmra.mrb[0].mxu0 %v1510
      %v2527 = vpop.f32.mrb[0].mxu0
      %v2528 = vadd.f32 0.0, %v2527
      %v2529 = vpop.f32.mrb[0].mxu0
      %v2530 = vpop.f32.mrb[0].mxu0
      %v2531 = vadd.f32 0.0, %v2530
      %v2532 = vpop.f32.mrb[0].mxu0
      %2533 = vmatprep.mubr.bf16.mxu0 0
      %2534 = vmatmul.mubr.bf16.gmra.mrb[0].mxu0 %v1511
      %v2535 = vpop.f32.mrb[0].mxu0
      %v2536 = vadd.f32 0.0, %v2535
      %v2537 = vpop.f32.mrb[0].mxu0
      %v2538 = vpop.f32.mrb[0].mxu0
      %v2539 = vadd.f32 0.0, %v2538
      %v2540 = vpop.f32.mrb[0].mxu0
      %2541 = vmatprep.mubr.bf16.mxu0 0
      %2542 = vmatmul.mubr.bf16.gmra.mrb[0].mxu0 %v1512
      %v2543 = vpop.f32.mrb[0].mxu0
      %v2544 = vadd.f32 0.0, %v2543
      %v2545 = vpop.f32.mrb[0].mxu0
      %v2546 = vpop.f32.mrb[0].mxu0
      %v2547 = vadd.f32 0.0, %v2546
      %v2548 = vpop.f32.mrb[0].mxu0
      %2549 = vmatprep.mubr.bf16.mxu0 0
      %2550 = vmatmul.mubr.bf16.gmra.mrb[0].mxu0 %v2347
      %v2551 = vpop.f32.mrb[0].mxu0
      %v2552 = vadd.f32 0.0, %v2551
      %v2553 = vpop.f32.mrb[0].mxu0
      %v2554 = vpop.f32.mrb[0].mxu0
      %v2555 = vadd.f32 0.0, %v2554
      %v2556 = vpop.f32.mrb[0].mxu0
      %2557 = vdwg.mxu0
      %v2558 = vadd.f32 %v2288, %v2432
      %v2559 = vadd.f32 %v2289, %v2435
      %v2560 = vadd.f32 %v2290, %v2440
      %v2561 = vadd.f32 %v2291, %v2443
      %v2562 = vadd.f32 %v2292, %v2448
      %v2563 = vadd.f32 %v2293, %v2451
      %v2564 = vadd.f32 %v2294, %v2456
      %v2565 = vadd.f32 %v2295, %v2459
      %v2566 = vadd.f32 %v2296, %v2464
      %v2567 = vadd.f32 %v2297, %v2467
      %v2568 = vadd.f32 %v2298, %v2472
      %v2569 = vadd.f32 %v2299, %v2475
      %v2570 = vadd.f32 %v2300, %v2480
      %v2571 = vadd.f32 %v2301, %v2483
      %v2572 = vadd.f32 %v2302, %v2488
      %v2573 = vadd.f32 %v2303, %v2491
      %v2574 = vadd.f32 %v2304, %v2496
      %v2575 = vadd.f32 %v2305, %v2499
      %v2576 = vadd.f32 %v2306, %v2504
      %v2577 = vadd.f32 %v2307, %v2507
      %v2578 = vadd.f32 %v2308, %v2512
      %v2579 = vadd.f32 %v2309, %v2515
      %v2580 = vadd.f32 %v2310, %v2520
      %v2581 = vadd.f32 %v2311, %v2523
      %v2582 = vadd.f32 %v2312, %v2528
      %v2583 = vadd.f32 %v2313, %v2531
      %v2584 = vadd.f32 %v2314, %v2536
      %v2585 = vadd.f32 %v2315, %v2539
      %v2586 = vadd.f32 %v2316, %v2544
      %v2587 = vadd.f32 %v2317, %v2547
      %v2588 = vadd.f32 %v2318, %v2552
      %v2589 = vadd.f32 %v2319, %v2555
      %s2590 = scalar_lea.vmem %s1, 384
      %v2591 = vld [vmem:[%s2590] sm:$0xf]
      %v2592 = vld [vmem:[%s2590 + $0x4] sm:$0xf]
      %v2593 = vld [vmem:[%s2590 + $0x8] sm:$0xf]
      %v2594 = vld [vmem:[%s2590 + $0xc] sm:$0xf]
      %v2595 = vld [vmem:[%s2590 + $0x10] sm:$0xf]
      %v2596 = vld [vmem:[%s2590 + $0x14] sm:$0xf]
      %v2597 = vld [vmem:[%s2590 + $0x18] sm:$0xf]
      %v2598 = vld [vmem:[%s2590 + $0x1c] sm:$0xf]
      %v2599 = vld [vmem:[%s2590 + $0x20] sm:$0xf]
      %v2600 = vld [vmem:[%s2590 + $0x24] sm:$0xf]
      %v2601 = vld [vmem:[%s2590 + $0x28] sm:$0xf]
      %v2602 = vld [vmem:[%s2590 + $0x2c] sm:$0xf]
      %v2603 = vld [vmem:[%s2590 + $0x30] sm:$0xf]
      %v2604 = vld [vmem:[%s2590 + $0x34] sm:$0xf]
      %v2605 = vld [vmem:[%s2590 + $0x38] sm:$0xf]
      %v2606 = vld [vmem:[%s2590 + $0x3c] sm:$0xf]
      %v2609 = vunpack.c.l.b16 %v316
      %v2610 = vunpack.c.l.b16 %v317
      %v2611 = vpack.c.b16 %v2610, %v2609
      %v2629 = vunpack.c.l.b16 %v2591
      %v2630 = vunpack.c.l.b16 %v2592
      %v2631 = vunpack.c.l.b16 %v2593
      %v2632 = vunpack.c.l.b16 %v2594
      %v2633 = vunpack.c.l.b16 %v2595
      %v2634 = vunpack.c.l.b16 %v2596
      %v2635 = vunpack.c.l.b16 %v2597
      %v2636 = vunpack.c.l.b16 %v2598
      %v2637 = vunpack.c.l.b16 %v2599
      %v2638 = vunpack.c.l.b16 %v2600
      %v2639 = vunpack.c.l.b16 %v2601
      %v2640 = vunpack.c.l.b16 %v2602
      %v2641 = vunpack.c.l.b16 %v2603
      %v2642 = vunpack.c.l.b16 %v2604
      %v2643 = vunpack.c.l.b16 %v2605
      %v2644 = vunpack.c.l.b16 %v2606
      %v2645 = vpack.c.b16 %v2630, %v2629
      %v2646 = vpack.c.b16 %v2632, %v2631
      %v2647 = vpack.c.b16 %v2634, %v2633
      %v2648 = vpack.c.b16 %v2636, %v2635
      %v2649 = vpack.c.b16 %v2638, %v2637
      %v2650 = vpack.c.b16 %v2640, %v2639
      %v2651 = vpack.c.b16 %v2642, %v2641
      %v2652 = vpack.c.b16 %v2644, %v2643
      %2661 = vmatprep.subr.bf16.mxu0 0
      %2662 = vmatpush1.bf16.msra.mxu0 %v2645
      %2663 = vmatprep.subr.bf16.mxu0 0
      %2664 = vmatpush1.bf16.msra.mxu0 %v2646
      %2665 = vmatprep.subr.bf16.mxu0 0
      %2666 = vmatpush1.bf16.msra.mxu0 %v2647
      %2667 = vmatprep.subr.bf16.mxu0 0
      %2668 = vmatpush1.bf16.msra.mxu0 %v2648
      %2669 = vmatprep.subr.bf16.mxu0 0
      %2670 = vmatpush1.bf16.msra.mxu0 %v2649
      %2671 = vmatprep.subr.bf16.mxu0 0
      %2672 = vmatpush1.bf16.msra.mxu0 %v2650
      %2673 = vmatprep.subr.bf16.mxu0 0
      %2674 = vmatpush1.bf16.msra.mxu0 %v2651
      %2675 = vmatprep.subr.bf16.mxu0 0
      %2676 = vmatpush1.bf16.msra.mxu0 %v2652
      %2677 = vmatprep.subr.bf16.mxu0 0
      %2678 = vmatpush1.bf16.msra.mxu0 0
      %2679 = vmatprep.subr.bf16.mxu0 0
      %2680 = vmatpush1.bf16.msra.mxu0 0
      %2681 = vmatprep.subr.bf16.mxu0 0
      %2682 = vmatpush1.bf16.msra.mxu0 0
      %2683 = vmatprep.subr.bf16.mxu0 0
      %2684 = vmatpush1.bf16.msra.mxu0 0
      %2685 = vmatprep.subr.bf16.mxu0 0
      %2686 = vmatpush1.bf16.msra.mxu0 0
      %2687 = vmatprep.subr.bf16.mxu0 0
      %2688 = vmatpush1.bf16.msra.mxu0 0
      %2689 = vmatprep.subr.bf16.mxu0 0
      %2690 = vmatpush1.bf16.msra.mxu0 0
      %2691 = vmatprep.subr.bf16.mxu0 0
      %2692 = vmatpush1.bf16.msra.mxu0 0
      %2693 = vmatprep.mubr.bf16.mxu0 0
      %2694 = vmatmul.mubr.bf16.gmra.mrb[0].mxu0 %v1078
      %v2695 = vpop.f32.mrb[0].mxu0
      %v2696 = vadd.f32 0.0, %v2695
      %v2697 = vpop.f32.mrb[0].mxu0
      %v2698 = vpop.f32.mrb[0].mxu0
      %v2699 = vadd.f32 0.0, %v2698
      %v2700 = vpop.f32.mrb[0].mxu0
      %2701 = vmatprep.mubr.bf16.mxu0 0
      %2702 = vmatmul.mubr.bf16.gmra.mrb[0].mxu0 %v1079
      %v2703 = vpop.f32.mrb[0].mxu0
      %v2704 = vadd.f32 0.0, %v2703
      %v2705 = vpop.f32.mrb[0].mxu0
      %v2706 = vpop.f32.mrb[0].mxu0
      %v2707 = vadd.f32 0.0, %v2706
      %v2708 = vpop.f32.mrb[0].mxu0
      %2709 = vmatprep.mubr.bf16.mxu0 0
      %2710 = vmatmul.mubr.bf16.gmra.mrb[0].mxu0 %v1080
      %v2711 = vpop.f32.mrb[0].mxu0
      %v2712 = vadd.f32 0.0, %v2711
      %v2713 = vpop.f32.mrb[0].mxu0
      %v2714 = vpop.f32.mrb[0].mxu0
      %v2715 = vadd.f32 0.0, %v2714
      %v2716 = vpop.f32.mrb[0].mxu0
      %2717 = vmatprep.mubr.bf16.mxu0 0
      %2718 = vmatmul.mubr.bf16.gmra.mrb[0].mxu0 %v1081
      %v2719 = vpop.f32.mrb[0].mxu0
      %v2720 = vadd.f32 0.0, %v2719
      %v2721 = vpop.f32.mrb[0].mxu0
      %v2722 = vpop.f32.mrb[0].mxu0
      %v2723 = vadd.f32 0.0, %v2722
      %v2724 = vpop.f32.mrb[0].mxu0
      %2725 = vmatprep.mubr.bf16.mxu0 0
      %2726 = vmatmul.mubr.bf16.gmra.mrb[0].mxu0 %v1082
      %v2727 = vpop.f32.mrb[0].mxu0
      %v2728 = vadd.f32 0.0, %v2727
      %v2729 = vpop.f32.mrb[0].mxu0
      %v2730 = vpop.f32.mrb[0].mxu0
      %v2731 = vadd.f32 0.0, %v2730
      %v2732 = vpop.f32.mrb[0].mxu0
      %2733 = vmatprep.mubr.bf16.mxu0 0
      %2734 = vmatmul.mubr.bf16.gmra.mrb[0].mxu0 %v1083
      %v2735 = vpop.f32.mrb[0].mxu0
      %v2736 = vadd.f32 0.0, %v2735
      %v2737 = vpop.f32.mrb[0].mxu0
      %v2738 = vpop.f32.mrb[0].mxu0
      %v2739 = vadd.f32 0.0, %v2738
      %v2740 = vpop.f32.mrb[0].mxu0
      %2741 = vmatprep.mubr.bf16.mxu0 0
      %2742 = vmatmul.mubr.bf16.gmra.mrb[0].mxu0 %v1084
      %v2743 = vpop.f32.mrb[0].mxu0
      %v2744 = vadd.f32 0.0, %v2743
      %v2745 = vpop.f32.mrb[0].mxu0
      %v2746 = vpop.f32.mrb[0].mxu0
      %v2747 = vadd.f32 0.0, %v2746
      %v2748 = vpop.f32.mrb[0].mxu0
      %2749 = vmatprep.mubr.bf16.mxu0 0
      %2750 = vmatmul.mubr.bf16.gmra.mrb[0].mxu0 %v1085
      %v2751 = vpop.f32.mrb[0].mxu0
      %v2752 = vadd.f32 0.0, %v2751
      %v2753 = vpop.f32.mrb[0].mxu0
      %v2754 = vpop.f32.mrb[0].mxu0
      %v2755 = vadd.f32 0.0, %v2754
      %v2756 = vpop.f32.mrb[0].mxu0
      %2757 = vmatprep.mubr.bf16.mxu0 0
      %2758 = vmatmul.mubr.bf16.gmra.mrb[0].mxu0 %v1086
      %v2759 = vpop.f32.mrb[0].mxu0
      %v2760 = vadd.f32 0.0, %v2759
      %v2761 = vpop.f32.mrb[0].mxu0
      %v2762 = vpop.f32.mrb[0].mxu0
      %v2763 = vadd.f32 0.0, %v2762
      %v2764 = vpop.f32.mrb[0].mxu0
      %2765 = vmatprep.mubr.bf16.mxu0 0
      %2766 = vmatmul.mubr.bf16.gmra.mrb[0].mxu0 %v1087
      %v2767 = vpop.f32.mrb[0].mxu0
      %v2768 = vadd.f32 0.0, %v2767
      %v2769 = vpop.f32.mrb[0].mxu0
      %v2770 = vpop.f32.mrb[0].mxu0
      %v2771 = vadd.f32 0.0, %v2770
      %v2772 = vpop.f32.mrb[0].mxu0
      %2773 = vmatprep.mubr.bf16.mxu0 0
      %2774 = vmatmul.mubr.bf16.gmra.mrb[0].mxu0 %v1088
      %v2775 = vpop.f32.mrb[0].mxu0
      %v2776 = vadd.f32 0.0, %v2775
      %v2777 = vpop.f32.mrb[0].mxu0
      %v2778 = vpop.f32.mrb[0].mxu0
      %v2779 = vadd.f32 0.0, %v2778
      %v2780 = vpop.f32.mrb[0].mxu0
      %2781 = vmatprep.mubr.bf16.mxu0 0
      %2782 = vmatmul.mubr.bf16.gmra.mrb[0].mxu0 %v1089
      %v2783 = vpop.f32.mrb[0].mxu0
      %v2784 = vadd.f32 0.0, %v2783
      %v2785 = vpop.f32.mrb[0].mxu0
      %v2786 = vpop.f32.mrb[0].mxu0
      %v2787 = vadd.f32 0.0, %v2786
      %v2788 = vpop.f32.mrb[0].mxu0
      %2789 = vmatprep.mubr.bf16.mxu0 0
      %2790 = vmatmul.mubr.bf16.gmra.mrb[0].mxu0 %v1090
      %v2791 = vpop.f32.mrb[0].mxu0
      %v2792 = vadd.f32 0.0, %v2791
      %v2793 = vpop.f32.mrb[0].mxu0
      %v2794 = vpop.f32.mrb[0].mxu0
      %v2795 = vadd.f32 0.0, %v2794
      %v2796 = vpop.f32.mrb[0].mxu0
      %2797 = vmatprep.mubr.bf16.mxu0 0
      %2798 = vmatmul.mubr.bf16.gmra.mrb[0].mxu0 %v1091
      %v2799 = vpop.f32.mrb[0].mxu0
      %v2800 = vadd.f32 0.0, %v2799
      %v2801 = vpop.f32.mrb[0].mxu0
      %v2802 = vpop.f32.mrb[0].mxu0
      %v2803 = vadd.f32 0.0, %v2802
      %v2804 = vpop.f32.mrb[0].mxu0
      %2805 = vmatprep.mubr.bf16.mxu0 0
      %2806 = vmatmul.mubr.bf16.gmra.mrb[0].mxu0 %v1791
      %v2807 = vpop.f32.mrb[0].mxu0
      %v2808 = vadd.f32 0.0, %v2807
      %v2809 = vpop.f32.mrb[0].mxu0
      %v2810 = vpop.f32.mrb[0].mxu0
      %v2811 = vadd.f32 0.0, %v2810
      %v2812 = vpop.f32.mrb[0].mxu0
      %2813 = vmatprep.mubr.bf16.mxu0 0
      %2814 = vmatmul.mubr.bf16.gmra.mrb[0].mxu0 %v2611
      %v2815 = vpop.f32.mrb[0].mxu0
      %v2816 = vadd.f32 0.0, %v2815
      %v2817 = vpop.f32.mrb[0].mxu0
      %v2818 = vpop.f32.mrb[0].mxu0
      %v2819 = vadd.f32 0.0, %v2818
      %v2820 = vpop.f32.mrb[0].mxu0
      %2821 = vdwg.mxu0
      %v2822 = vadd.f32 %v2558, %v2696
      %v2823 = vadd.f32 %v2559, %v2699
      %v2824 = vadd.f32 %v2560, %v2704
      %v2825 = vadd.f32 %v2561, %v2707
      %v2826 = vadd.f32 %v2562, %v2712
      %v2827 = vadd.f32 %v2563, %v2715
      %v2828 = vadd.f32 %v2564, %v2720
      %v2829 = vadd.f32 %v2565, %v2723
      %v2830 = vadd.f32 %v2566, %v2728
      %v2831 = vadd.f32 %v2567, %v2731
      %v2832 = vadd.f32 %v2568, %v2736
      %v2833 = vadd.f32 %v2569, %v2739
      %v2834 = vadd.f32 %v2570, %v2744
      %v2835 = vadd.f32 %v2571, %v2747
      %v2836 = vadd.f32 %v2572, %v2752
      %v2837 = vadd.f32 %v2573, %v2755
      %v2838 = vadd.f32 %v2574, %v2760
      %v2839 = vadd.f32 %v2575, %v2763
      %v2840 = vadd.f32 %v2576, %v2768
      %v2841 = vadd.f32 %v2577, %v2771
      %v2842 = vadd.f32 %v2578, %v2776
      %v2843 = vadd.f32 %v2579, %v2779
      %v2844 = vadd.f32 %v2580, %v2784
      %v2845 = vadd.f32 %v2581, %v2787
      %v2846 = vadd.f32 %v2582, %v2792
      %v2847 = vadd.f32 %v2583, %v2795
      %v2848 = vadd.f32 %v2584, %v2800
      %v2849 = vadd.f32 %v2585, %v2803
      %v2850 = vadd.f32 %v2586, %v2808
      %v2851 = vadd.f32 %v2587, %v2811
      %v2852 = vadd.f32 %v2588, %v2816
      %v2853 = vadd.f32 %v2589, %v2819
      %v2855 = vshrl.u32 %v316, 16
      %v2857 = vrot.slane %v2855, 4
      %v2858 = vshll.u32 %v316, 16
      %v2860 = vrot.slane %v2858, 5
      %v2861 = vor.u32 %v2857, %v2860
      %v2862 = vrot.slane %v2861, 4
      %v2864 = vshll.u32 %v317, 16
      %v2866 = vrot.slane %v2864, 5
      %v2867 = vsel %vm337, %v2862, %v2866
      %v2868 = vshrl.u32 %v317, 16
      %v2870 = vrot.slane %v2868, 4
      %v2871 = vor.u32 %v2870, %v2866
      %v2872 = vrot.slane %v2871, 4
      %v2874 = vshll.u32 %v318, 16
      %v2876 = vrot.slane %v2874, 5
      %v2877 = vsel %vm337, %v2872, %v2876
      %s2878 = scalar_lea.vmem %s1, 448
      %v2879 = vld [vmem:[%s2878] sm:$0xf]
      %v2880 = vld [vmem:[%s2878 + $0x4] sm:$0xf]
      %v2881 = vld [vmem:[%s2878 + $0x8] sm:$0xf]
      %v2882 = vld [vmem:[%s2878 + $0xc] sm:$0xf]
      %v2883 = vld [vmem:[%s2878 + $0x10] sm:$0xf]
      %v2884 = vld [vmem:[%s2878 + $0x14] sm:$0xf]
      %v2885 = vld [vmem:[%s2878 + $0x18] sm:$0xf]
      %v2886 = vld [vmem:[%s2878 + $0x1c] sm:$0xf]
      %v2887 = vld [vmem:[%s2878 + $0x20] sm:$0xf]
      %v2888 = vld [vmem:[%s2878 + $0x24] sm:$0xf]
      %v2889 = vld [vmem:[%s2878 + $0x28] sm:$0xf]
      %v2890 = vld [vmem:[%s2878 + $0x2c] sm:$0xf]
      %v2891 = vld [vmem:[%s2878 + $0x30] sm:$0xf]
      %v2892 = vld [vmem:[%s2878 + $0x34] sm:$0xf]
      %v2893 = vld [vmem:[%s2878 + $0x38] sm:$0xf]
      %v2894 = vld [vmem:[%s2878 + $0x3c] sm:$0xf]
      %v2895 = vunpack.c.l.b16 %v2867
      %v2896 = vunpack.c.l.b16 %v2877
      %v2897 = vpack.c.b16 %v2896, %v2895
      %v2915 = vunpack.c.l.b16 %v2879
      %v2916 = vunpack.c.l.b16 %v2880
      %v2917 = vunpack.c.l.b16 %v2881
      %v2918 = vunpack.c.l.b16 %v2882
      %v2919 = vunpack.c.l.b16 %v2883
      %v2920 = vunpack.c.l.b16 %v2884
      %v2921 = vunpack.c.l.b16 %v2885
      %v2922 = vunpack.c.l.b16 %v2886
      %v2923 = vunpack.c.l.b16 %v2887
      %v2924 = vunpack.c.l.b16 %v2888
      %v2925 = vunpack.c.l.b16 %v2889
      %v2926 = vunpack.c.l.b16 %v2890
      %v2927 = vunpack.c.l.b16 %v2891
      %v2928 = vunpack.c.l.b16 %v2892
      %v2929 = vunpack.c.l.b16 %v2893
      %v2930 = vunpack.c.l.b16 %v2894
      %v2931 = vpack.c.b16 %v2916, %v2915
      %v2932 = vpack.c.b16 %v2918, %v2917
      %v2933 = vpack.c.b16 %v2920, %v2919
      %v2934 = vpack.c.b16 %v2922, %v2921
      %v2935 = vpack.c.b16 %v2924, %v2923
      %v2936 = vpack.c.b16 %v2926, %v2925
      %v2937 = vpack.c.b16 %v2928, %v2927
      %v2938 = vpack.c.b16 %v2930, %v2929
      %2947 = vmatprep.subr.bf16.mxu0 0
      %2948 = vmatpush1.bf16.msra.mxu0 %v2931
      %2949 = vmatprep.subr.bf16.mxu0 0
      %2950 = vmatpush1.bf16.msra.mxu0 %v2932
      %2951 = vmatprep.subr.bf16.mxu0 0
      %2952 = vmatpush1.bf16.msra.mxu0 %v2933
      %2953 = vmatprep.subr.bf16.mxu0 0
      %2954 = vmatpush1.bf16.msra.mxu0 %v2934
      %2955 = vmatprep.subr.bf16.mxu0 0
      %2956 = vmatpush1.bf16.msra.mxu0 %v2935
      %2957 = vmatprep.subr.bf16.mxu0 0
      %2958 = vmatpush1.bf16.msra.mxu0 %v2936
      %2959 = vmatprep.subr.bf16.mxu0 0
      %2960 = vmatpush1.bf16.msra.mxu0 %v2937
      %2961 = vmatprep.subr.bf16.mxu0 0
      %2962 = vmatpush1.bf16.msra.mxu0 %v2938
      %2963 = vmatprep.subr.bf16.mxu0 0
      %2964 = vmatpush1.bf16.msra.mxu0 0
      %2965 = vmatprep.subr.bf16.mxu0 0
      %2966 = vmatpush1.bf16.msra.mxu0 0
      %2967 = vmatprep.subr.bf16.mxu0 0
      %2968 = vmatpush1.bf16.msra.mxu0 0
      %2969 = vmatprep.subr.bf16.mxu0 0
      %2970 = vmatpush1.bf16.msra.mxu0 0
      %2971 = vmatprep.subr.bf16.mxu0 0
      %2972 = vmatpush1.bf16.msra.mxu0 0
      %2973 = vmatprep.subr.bf16.mxu0 0
      %2974 = vmatpush1.bf16.msra.mxu0 0
      %2975 = vmatprep.subr.bf16.mxu0 0
      %2976 = vmatpush1.bf16.msra.mxu0 0
      %2977 = vmatprep.subr.bf16.mxu0 0
      %2978 = vmatpush1.bf16.msra.mxu0 0
      %2979 = vmatprep.mubr.bf16.mxu0 0
      %2980 = vmatmul.mubr.bf16.gmra.mrb[0].mxu0 %v773
      %v2981 = vpop.f32.mrb[0].mxu0
      %v2982 = vadd.f32 0.0, %v2981
      %v2983 = vpop.f32.mrb[0].mxu0
      %v2984 = vpop.f32.mrb[0].mxu0
      %v2985 = vadd.f32 0.0, %v2984
      %v2986 = vpop.f32.mrb[0].mxu0
      %2987 = vmatprep.mubr.bf16.mxu0 0
      %2988 = vmatmul.mubr.bf16.gmra.mrb[0].mxu0 %v774
      %v2989 = vpop.f32.mrb[0].mxu0
      %v2990 = vadd.f32 0.0, %v2989
      %v2991 = vpop.f32.mrb[0].mxu0
      %v2992 = vpop.f32.mrb[0].mxu0
      %v2993 = vadd.f32 0.0, %v2992
      %v2994 = vpop.f32.mrb[0].mxu0
      %2995 = vmatprep.mubr.bf16.mxu0 0
      %2996 = vmatmul.mubr.bf16.gmra.mrb[0].mxu0 %v775
      %v2997 = vpop.f32.mrb[0].mxu0
      %v2998 = vadd.f32 0.0, %v2997
      %v2999 = vpop.f32.mrb[0].mxu0
      %v3000 = vpop.f32.mrb[0].mxu0
      %v3001 = vadd.f32 0.0, %v3000
      %v3002 = vpop.f32.mrb[0].mxu0
      %3003 = vmatprep.mubr.bf16.mxu0 0
      %3004 = vmatmul.mubr.bf16.gmra.mrb[0].mxu0 %v776
      %v3005 = vpop.f32.mrb[0].mxu0
      %v3006 = vadd.f32 0.0, %v3005
      %v3007 = vpop.f32.mrb[0].mxu0
      %v3008 = vpop.f32.mrb[0].mxu0
      %v3009 = vadd.f32 0.0, %v3008
      %v3010 = vpop.f32.mrb[0].mxu0
      %3011 = vmatprep.mubr.bf16.mxu0 0
      %3012 = vmatmul.mubr.bf16.gmra.mrb[0].mxu0 %v777
      %v3013 = vpop.f32.mrb[0].mxu0
      %v3014 = vadd.f32 0.0, %v3013
      %v3015 = vpop.f32.mrb[0].mxu0
      %v3016 = vpop.f32.mrb[0].mxu0
      %v3017 = vadd.f32 0.0, %v3016
      %v3018 = vpop.f32.mrb[0].mxu0
      %3019 = vmatprep.mubr.bf16.mxu0 0
      %3020 = vmatmul.mubr.bf16.gmra.mrb[0].mxu0 %v778
      %v3021 = vpop.f32.mrb[0].mxu0
      %v3022 = vadd.f32 0.0, %v3021
      %v3023 = vpop.f32.mrb[0].mxu0
      %v3024 = vpop.f32.mrb[0].mxu0
      %v3025 = vadd.f32 0.0, %v3024
      %v3026 = vpop.f32.mrb[0].mxu0
      %3027 = vmatprep.mubr.bf16.mxu0 0
      %3028 = vmatmul.mubr.bf16.gmra.mrb[0].mxu0 %v779
      %v3029 = vpop.f32.mrb[0].mxu0
      %v3030 = vadd.f32 0.0, %v3029
      %v3031 = vpop.f32.mrb[0].mxu0
      %v3032 = vpop.f32.mrb[0].mxu0
      %v3033 = vadd.f32 0.0, %v3032
      %v3034 = vpop.f32.mrb[0].mxu0
      %3035 = vmatprep.mubr.bf16.mxu0 0
      %3036 = vmatmul.mubr.bf16.gmra.mrb[0].mxu0 %v780
      %v3037 = vpop.f32.mrb[0].mxu0
      %v3038 = vadd.f32 0.0, %v3037
      %v3039 = vpop.f32.mrb[0].mxu0
      %v3040 = vpop.f32.mrb[0].mxu0
      %v3041 = vadd.f32 0.0, %v3040
      %v3042 = vpop.f32.mrb[0].mxu0
      %3043 = vmatprep.mubr.bf16.mxu0 0
      %3044 = vmatmul.mubr.bf16.gmra.mrb[0].mxu0 %v781
      %v3045 = vpop.f32.mrb[0].mxu0
      %v3046 = vadd.f32 0.0, %v3045
      %v3047 = vpop.f32.mrb[0].mxu0
      %v3048 = vpop.f32.mrb[0].mxu0
      %v3049 = vadd.f32 0.0, %v3048
      %v3050 = vpop.f32.mrb[0].mxu0
      %3051 = vmatprep.mubr.bf16.mxu0 0
      %3052 = vmatmul.mubr.bf16.gmra.mrb[0].mxu0 %v782
      %v3053 = vpop.f32.mrb[0].mxu0
      %v3054 = vadd.f32 0.0, %v3053
      %v3055 = vpop.f32.mrb[0].mxu0
      %v3056 = vpop.f32.mrb[0].mxu0
      %v3057 = vadd.f32 0.0, %v3056
      %v3058 = vpop.f32.mrb[0].mxu0
      %3059 = vmatprep.mubr.bf16.mxu0 0
      %3060 = vmatmul.mubr.bf16.gmra.mrb[0].mxu0 %v783
      %v3061 = vpop.f32.mrb[0].mxu0
      %v3062 = vadd.f32 0.0, %v3061
      %v3063 = vpop.f32.mrb[0].mxu0
      %v3064 = vpop.f32.mrb[0].mxu0
      %v3065 = vadd.f32 0.0, %v3064
      %v3066 = vpop.f32.mrb[0].mxu0
      %3067 = vmatprep.mubr.bf16.mxu0 0
      %3068 = vmatmul.mubr.bf16.gmra.mrb[0].mxu0 %v784
      %v3069 = vpop.f32.mrb[0].mxu0
      %v3070 = vadd.f32 0.0, %v3069
      %v3071 = vpop.f32.mrb[0].mxu0
      %v3072 = vpop.f32.mrb[0].mxu0
      %v3073 = vadd.f32 0.0, %v3072
      %v3074 = vpop.f32.mrb[0].mxu0
      %3075 = vmatprep.mubr.bf16.mxu0 0
      %3076 = vmatmul.mubr.bf16.gmra.mrb[0].mxu0 %v785
      %v3077 = vpop.f32.mrb[0].mxu0
      %v3078 = vadd.f32 0.0, %v3077
      %v3079 = vpop.f32.mrb[0].mxu0
      %v3080 = vpop.f32.mrb[0].mxu0
      %v3081 = vadd.f32 0.0, %v3080
      %v3082 = vpop.f32.mrb[0].mxu0
      %3083 = vmatprep.mubr.bf16.mxu0 0
      %3084 = vmatmul.mubr.bf16.gmra.mrb[0].mxu0 %v786
      %v3085 = vpop.f32.mrb[0].mxu0
      %v3086 = vadd.f32 0.0, %v3085
      %v3087 = vpop.f32.mrb[0].mxu0
      %v3088 = vpop.f32.mrb[0].mxu0
      %v3089 = vadd.f32 0.0, %v3088
      %v3090 = vpop.f32.mrb[0].mxu0
      %3091 = vmatprep.mubr.bf16.mxu0 0
      %3092 = vmatmul.mubr.bf16.gmra.mrb[0].mxu0 %v2077
      %v3093 = vpop.f32.mrb[0].mxu0
      %v3094 = vadd.f32 0.0, %v3093
      %v3095 = vpop.f32.mrb[0].mxu0
      %v3096 = vpop.f32.mrb[0].mxu0
      %v3097 = vadd.f32 0.0, %v3096
      %v3098 = vpop.f32.mrb[0].mxu0
      %3099 = vmatprep.mubr.bf16.mxu0 0
      %3100 = vmatmul.mubr.bf16.gmra.mrb[0].mxu0 %v2897
      %v3101 = vpop.f32.mrb[0].mxu0
      %v3102 = vadd.f32 0.0, %v3101
      %v3103 = vpop.f32.mrb[0].mxu0
      %v3104 = vpop.f32.mrb[0].mxu0
      %v3105 = vadd.f32 0.0, %v3104
      %v3106 = vpop.f32.mrb[0].mxu0
      %3107 = vdwg.mxu0
      %v3108 = vadd.f32 %v2822, %v2982
      %v3109 = vadd.f32 %v2823, %v2985
      %v3110 = vadd.f32 %v2824, %v2990
      %v3111 = vadd.f32 %v2825, %v2993
      %v3112 = vadd.f32 %v2826, %v2998
      %v3113 = vadd.f32 %v2827, %v3001
      %v3114 = vadd.f32 %v2828, %v3006
      %v3115 = vadd.f32 %v2829, %v3009
      %v3116 = vadd.f32 %v2830, %v3014
      %v3117 = vadd.f32 %v2831, %v3017
      %v3118 = vadd.f32 %v2832, %v3022
      %v3119 = vadd.f32 %v2833, %v3025
      %v3120 = vadd.f32 %v2834, %v3030
      %v3121 = vadd.f32 %v2835, %v3033
      %v3122 = vadd.f32 %v2836, %v3038
      %v3123 = vadd.f32 %v2837, %v3041
      %v3124 = vadd.f32 %v2838, %v3046
      %v3125 = vadd.f32 %v2839, %v3049
      %v3126 = vadd.f32 %v2840, %v3054
      %v3127 = vadd.f32 %v2841, %v3057
      %v3128 = vadd.f32 %v2842, %v3062
      %v3129 = vadd.f32 %v2843, %v3065
      %v3130 = vadd.f32 %v2844, %v3070
      %v3131 = vadd.f32 %v2845, %v3073
      %v3132 = vadd.f32 %v2846, %v3078
      %v3133 = vadd.f32 %v2847, %v3081
      %v3134 = vadd.f32 %v2848, %v3086
      %v3135 = vadd.f32 %v2849, %v3089
      %v3136 = vadd.f32 %v2850, %v3094
      %v3137 = vadd.f32 %v2851, %v3097
      %v3138 = vadd.f32 %v2852, %v3102
      %v3139 = vadd.f32 %v2853, %v3105
      %v3141 = vrot.slane %v316, 5
      %v3142 = vrot.slane %v3141, 4
      %v3143 = vrot.slane %v317, 5
      %v3144 = vsel %vm1335, %v3142, %v3143
      %v3145 = vrot.slane %v3143, 4
      %v3146 = vrot.slane %v318, 5
      %v3147 = vsel %vm1335, %v3145, %v3146
      %s3148 = scalar_lea.vmem %s1, 512
      %v3149 = vld [vmem:[%s3148] sm:$0xf]
      %v3150 = vld [vmem:[%s3148 + $0x4] sm:$0xf]
      %v3151 = vld [vmem:[%s3148 + $0x8] sm:$0xf]
      %v3152 = vld [vmem:[%s3148 + $0xc] sm:$0xf]
      %v3153 = vld [vmem:[%s3148 + $0x10] sm:$0xf]
      %v3154 = vld [vmem:[%s3148 + $0x14] sm:$0xf]
      %v3155 = vld [vmem:[%s3148 + $0x18] sm:$0xf]
      %v3156 = vld [vmem:[%s3148 + $0x1c] sm:$0xf]
      %v3157 = vld [vmem:[%s3148 + $0x20] sm:$0xf]
      %v3158 = vld [vmem:[%s3148 + $0x24] sm:$0xf]
      %v3159 = vld [vmem:[%s3148 + $0x28] sm:$0xf]
      %v3160 = vld [vmem:[%s3148 + $0x2c] sm:$0xf]
      %v3161 = vld [vmem:[%s3148 + $0x30] sm:$0xf]
      %v3162 = vld [vmem:[%s3148 + $0x34] sm:$0xf]
      %v3163 = vld [vmem:[%s3148 + $0x38] sm:$0xf]
      %v3164 = vld [vmem:[%s3148 + $0x3c] sm:$0xf]
      %v3165 = vunpack.c.l.b16 %v3144
      %v3166 = vunpack.c.l.b16 %v3147
      %v3167 = vpack.c.b16 %v3166, %v3165
      %v3185 = vunpack.c.l.b16 %v3149
      %v3186 = vunpack.c.l.b16 %v3150
      %v3187 = vunpack.c.l.b16 %v3151
      %v3188 = vunpack.c.l.b16 %v3152
      %v3189 = vunpack.c.l.b16 %v3153
      %v3190 = vunpack.c.l.b16 %v3154
      %v3191 = vunpack.c.l.b16 %v3155
      %v3192 = vunpack.c.l.b16 %v3156
      %v3193 = vunpack.c.l.b16 %v3157
      %v3194 = vunpack.c.l.b16 %v3158
      %v3195 = vunpack.c.l.b16 %v3159
      %v3196 = vunpack.c.l.b16 %v3160
      %v3197 = vunpack.c.l.b16 %v3161
      %v3198 = vunpack.c.l.b16 %v3162
      %v3199 = vunpack.c.l.b16 %v3163
      %v3200 = vunpack.c.l.b16 %v3164
      %v3201 = vpack.c.b16 %v3186, %v3185
      %v3202 = vpack.c.b16 %v3188, %v3187
      %v3203 = vpack.c.b16 %v3190, %v3189
      %v3204 = vpack.c.b16 %v3192, %v3191
      %v3205 = vpack.c.b16 %v3194, %v3193
      %v3206 = vpack.c.b16 %v3196, %v3195
      %v3207 = vpack.c.b16 %v3198, %v3197
      %v3208 = vpack.c.b16 %v3200, %v3199
      %3217 = vmatprep.subr.bf16.mxu0 0
      %3218 = vmatpush1.bf16.msra.mxu0 %v3201
      %3219 = vmatprep.subr.bf16.mxu0 0
      %3220 = vmatpush1.bf16.msra.mxu0 %v3202
      %3221 = vmatprep.subr.bf16.mxu0 0
      %3222 = vmatpush1.bf16.msra.mxu0 %v3203
      %3223 = vmatprep.subr.bf16.mxu0 0
      %3224 = vmatpush1.bf16.msra.mxu0 %v3204
      %3225 = vmatprep.subr.bf16.mxu0 0
      %3226 = vmatpush1.bf16.msra.mxu0 %v3205
      %3227 = vmatprep.subr.bf16.mxu0 0
      %3228 = vmatpush1.bf16.msra.mxu0 %v3206
      %3229 = vmatprep.subr.bf16.mxu0 0
      %3230 = vmatpush1.bf16.msra.mxu0 %v3207
      %3231 = vmatprep.subr.bf16.mxu0 0
      %3232 = vmatpush1.bf16.msra.mxu0 %v3208
      %3233 = vmatprep.subr.bf16.mxu0 0
      %3234 = vmatpush1.bf16.msra.mxu0 0
      %3235 = vmatprep.subr.bf16.mxu0 0
      %3236 = vmatpush1.bf16.msra.mxu0 0
      %3237 = vmatprep.subr.bf16.mxu0 0
      %3238 = vmatpush1.bf16.msra.mxu0 0
      %3239 = vmatprep.subr.bf16.mxu0 0
      %3240 = vmatpush1.bf16.msra.mxu0 0
      %3241 = vmatprep.subr.bf16.mxu0 0
      %3242 = vmatpush1.bf16.msra.mxu0 0
      %3243 = vmatprep.subr.bf16.mxu0 0
      %3244 = vmatpush1.bf16.msra.mxu0 0
      %3245 = vmatprep.subr.bf16.mxu0 0
      %3246 = vmatpush1.bf16.msra.mxu0 0
      %3247 = vmatprep.subr.bf16.mxu0 0
      %3248 = vmatpush1.bf16.msra.mxu0 0
      %3249 = vmatprep.mubr.bf16.mxu0 0
      %3250 = vmatmul.mubr.bf16.gmra.mrb[0].mxu0 %v1499
      %v3251 = vpop.f32.mrb[0].mxu0
      %v3252 = vadd.f32 0.0, %v3251
      %v3253 = vpop.f32.mrb[0].mxu0
      %v3254 = vpop.f32.mrb[0].mxu0
      %v3255 = vadd.f32 0.0, %v3254
      %v3256 = vpop.f32.mrb[0].mxu0
      %3257 = vmatprep.mubr.bf16.mxu0 0
      %3258 = vmatmul.mubr.bf16.gmra.mrb[0].mxu0 %v1500
      %v3259 = vpop.f32.mrb[0].mxu0
      %v3260 = vadd.f32 0.0, %v3259
      %v3261 = vpop.f32.mrb[0].mxu0
      %v3262 = vpop.f32.mrb[0].mxu0
      %v3263 = vadd.f32 0.0, %v3262
      %v3264 = vpop.f32.mrb[0].mxu0
      %3265 = vmatprep.mubr.bf16.mxu0 0
      %3266 = vmatmul.mubr.bf16.gmra.mrb[0].mxu0 %v1501
      %v3267 = vpop.f32.mrb[0].mxu0
      %v3268 = vadd.f32 0.0, %v3267
      %v3269 = vpop.f32.mrb[0].mxu0
      %v3270 = vpop.f32.mrb[0].mxu0
      %v3271 = vadd.f32 0.0, %v3270
      %v3272 = vpop.f32.mrb[0].mxu0
      %3273 = vmatprep.mubr.bf16.mxu0 0
      %3274 = vmatmul.mubr.bf16.gmra.mrb[0].mxu0 %v1502
      %v3275 = vpop.f32.mrb[0].mxu0
      %v3276 = vadd.f32 0.0, %v3275
      %v3277 = vpop.f32.mrb[0].mxu0
      %v3278 = vpop.f32.mrb[0].mxu0
      %v3279 = vadd.f32 0.0, %v3278
      %v3280 = vpop.f32.mrb[0].mxu0
      %3281 = vmatprep.mubr.bf16.mxu0 0
      %3282 = vmatmul.mubr.bf16.gmra.mrb[0].mxu0 %v1503
      %v3283 = vpop.f32.mrb[0].mxu0
      %v3284 = vadd.f32 0.0, %v3283
      %v3285 = vpop.f32.mrb[0].mxu0
      %v3286 = vpop.f32.mrb[0].mxu0
      %v3287 = vadd.f32 0.0, %v3286
      %v3288 = vpop.f32.mrb[0].mxu0
      %3289 = vmatprep.mubr.bf16.mxu0 0
      %3290 = vmatmul.mubr.bf16.gmra.mrb[0].mxu0 %v1504
      %v3291 = vpop.f32.mrb[0].mxu0
      %v3292 = vadd.f32 0.0, %v3291
      %v3293 = vpop.f32.mrb[0].mxu0
      %v3294 = vpop.f32.mrb[0].mxu0
      %v3295 = vadd.f32 0.0, %v3294
      %v3296 = vpop.f32.mrb[0].mxu0
      %3297 = vmatprep.mubr.bf16.mxu0 0
      %3298 = vmatmul.mubr.bf16.gmra.mrb[0].mxu0 %v1505
      %v3299 = vpop.f32.mrb[0].mxu0
      %v3300 = vadd.f32 0.0, %v3299
      %v3301 = vpop.f32.mrb[0].mxu0
      %v3302 = vpop.f32.mrb[0].mxu0
      %v3303 = vadd.f32 0.0, %v3302
      %v3304 = vpop.f32.mrb[0].mxu0
      %3305 = vmatprep.mubr.bf16.mxu0 0
      %3306 = vmatmul.mubr.bf16.gmra.mrb[0].mxu0 %v1506
      %v3307 = vpop.f32.mrb[0].mxu0
      %v3308 = vadd.f32 0.0, %v3307
      %v3309 = vpop.f32.mrb[0].mxu0
      %v3310 = vpop.f32.mrb[0].mxu0
      %v3311 = vadd.f32 0.0, %v3310
      %v3312 = vpop.f32.mrb[0].mxu0
      %3313 = vmatprep.mubr.bf16.mxu0 0
      %3314 = vmatmul.mubr.bf16.gmra.mrb[0].mxu0 %v1507
      %v3315 = vpop.f32.mrb[0].mxu0
      %v3316 = vadd.f32 0.0, %v3315
      %v3317 = vpop.f32.mrb[0].mxu0
      %v3318 = vpop.f32.mrb[0].mxu0
      %v3319 = vadd.f32 0.0, %v3318
      %v3320 = vpop.f32.mrb[0].mxu0
      %3321 = vmatprep.mubr.bf16.mxu0 0
      %3322 = vmatmul.mubr.bf16.gmra.mrb[0].mxu0 %v1508
      %v3323 = vpop.f32.mrb[0].mxu0
      %v3324 = vadd.f32 0.0, %v3323
      %v3325 = vpop.f32.mrb[0].mxu0
      %v3326 = vpop.f32.mrb[0].mxu0
      %v3327 = vadd.f32 0.0, %v3326
      %v3328 = vpop.f32.mrb[0].mxu0
      %3329 = vmatprep.mubr.bf16.mxu0 0
      %3330 = vmatmul.mubr.bf16.gmra.mrb[0].mxu0 %v1509
      %v3331 = vpop.f32.mrb[0].mxu0
      %v3332 = vadd.f32 0.0, %v3331
      %v3333 = vpop.f32.mrb[0].mxu0
      %v3334 = vpop.f32.mrb[0].mxu0
      %v3335 = vadd.f32 0.0, %v3334
      %v3336 = vpop.f32.mrb[0].mxu0
      %3337 = vmatprep.mubr.bf16.mxu0 0
      %3338 = vmatmul.mubr.bf16.gmra.mrb[0].mxu0 %v1510
      %v3339 = vpop.f32.mrb[0].mxu0
      %v3340 = vadd.f32 0.0, %v3339
      %v3341 = vpop.f32.mrb[0].mxu0
      %v3342 = vpop.f32.mrb[0].mxu0
      %v3343 = vadd.f32 0.0, %v3342
      %v3344 = vpop.f32.mrb[0].mxu0
      %3345 = vmatprep.mubr.bf16.mxu0 0
      %3346 = vmatmul.mubr.bf16.gmra.mrb[0].mxu0 %v1511
      %v3347 = vpop.f32.mrb[0].mxu0
      %v3348 = vadd.f32 0.0, %v3347
      %v3349 = vpop.f32.mrb[0].mxu0
      %v3350 = vpop.f32.mrb[0].mxu0
      %v3351 = vadd.f32 0.0, %v3350
      %v3352 = vpop.f32.mrb[0].mxu0
      %3353 = vmatprep.mubr.bf16.mxu0 0
      %3354 = vmatmul.mubr.bf16.gmra.mrb[0].mxu0 %v1512
      %v3355 = vpop.f32.mrb[0].mxu0
      %v3356 = vadd.f32 0.0, %v3355
      %v3357 = vpop.f32.mrb[0].mxu0
      %v3358 = vpop.f32.mrb[0].mxu0
      %v3359 = vadd.f32 0.0, %v3358
      %v3360 = vpop.f32.mrb[0].mxu0
      %3361 = vmatprep.mubr.bf16.mxu0 0
      %3362 = vmatmul.mubr.bf16.gmra.mrb[0].mxu0 %v2347
      %v3363 = vpop.f32.mrb[0].mxu0
      %v3364 = vadd.f32 0.0, %v3363
      %v3365 = vpop.f32.mrb[0].mxu0
      %v3366 = vpop.f32.mrb[0].mxu0
      %v3367 = vadd.f32 0.0, %v3366
      %v3368 = vpop.f32.mrb[0].mxu0
      %3369 = vmatprep.mubr.bf16.mxu0 0
      %3370 = vmatmul.mubr.bf16.gmra.mrb[0].mxu0 %v3167
      %v3371 = vpop.f32.mrb[0].mxu0
      %v3372 = vadd.f32 0.0, %v3371
      %v3373 = vpop.f32.mrb[0].mxu0
      %v3374 = vpop.f32.mrb[0].mxu0
      %v3375 = vadd.f32 0.0, %v3374
      %v3376 = vpop.f32.mrb[0].mxu0
      %3377 = vdwg.mxu0
      %v3378 = vadd.f32 %v3108, %v3252
      %v3379 = vadd.f32 %v3109, %v3255
      %v3380 = vadd.f32 %v3110, %v3260
      %v3381 = vadd.f32 %v3111, %v3263
      %v3382 = vadd.f32 %v3112, %v3268
      %v3383 = vadd.f32 %v3113, %v3271
      %v3384 = vadd.f32 %v3114, %v3276
      %v3385 = vadd.f32 %v3115, %v3279
      %v3386 = vadd.f32 %v3116, %v3284
      %v3387 = vadd.f32 %v3117, %v3287
      %v3388 = vadd.f32 %v3118, %v3292
      %v3389 = vadd.f32 %v3119, %v3295
      %v3390 = vadd.f32 %v3120, %v3300
      %v3391 = vadd.f32 %v3121, %v3303
      %v3392 = vadd.f32 %v3122, %v3308
      %v3393 = vadd.f32 %v3123, %v3311
      %v3394 = vadd.f32 %v3124, %v3316
      %v3395 = vadd.f32 %v3125, %v3319
      %v3396 = vadd.f32 %v3126, %v3324
      %v3397 = vadd.f32 %v3127, %v3327
      %v3398 = vadd.f32 %v3128, %v3332
      %v3399 = vadd.f32 %v3129, %v3335
      %v3400 = vadd.f32 %v3130, %v3340
      %v3401 = vadd.f32 %v3131, %v3343
      %v3402 = vadd.f32 %v3132, %v3348
      %v3403 = vadd.f32 %v3133, %v3351
      %v3404 = vadd.f32 %v3134, %v3356
      %v3405 = vadd.f32 %v3135, %v3359
      %v3406 = vadd.f32 %v3136, %v3364
      %v3407 = vadd.f32 %v3137, %v3367
      %v3408 = vadd.f32 %v3138, %v3372
      %v3409 = vadd.f32 %v3139, %v3375
      %v3410 = vpack.c.bf16 %v3379, %v3378
      %v3411 = vpack.c.bf16 %v3381, %v3380
      %v3412 = vpack.c.bf16 %v3383, %v3382
      %v3413 = vpack.c.bf16 %v3385, %v3384
      %v3414 = vpack.c.bf16 %v3387, %v3386
      %v3415 = vpack.c.bf16 %v3389, %v3388
      %v3416 = vpack.c.bf16 %v3391, %v3390
      %v3417 = vpack.c.bf16 %v3393, %v3392
      %v3418 = vpack.c.bf16 %v3395, %v3394
      %v3419 = vpack.c.bf16 %v3397, %v3396
      %v3420 = vpack.c.bf16 %v3399, %v3398
      %v3421 = vpack.c.bf16 %v3401, %v3400
      %v3422 = vpack.c.bf16 %v3403, %v3402
      %v3423 = vpack.c.bf16 %v3405, %v3404
      %v3424 = vpack.c.bf16 %v3407, %v3406
      %v3425 = vpack.c.bf16 %v3409, %v3408
      %v3442 = vunpack.c.l.b16 %v3410
      %v3443 = vunpack.c.h.b16 %v3410
      %v3444 = vunpack.c.l.b16 %v3411
      %v3445 = vunpack.c.h.b16 %v3411
      %v3446 = vunpack.c.l.b16 %v3412
      %v3447 = vunpack.c.h.b16 %v3412
      %v3448 = vunpack.c.l.b16 %v3413
      %v3449 = vunpack.c.h.b16 %v3413
      %v3450 = vunpack.c.l.b16 %v3414
      %v3451 = vunpack.c.h.b16 %v3414
      %v3452 = vunpack.c.l.b16 %v3415
      %v3453 = vunpack.c.h.b16 %v3415
      %v3454 = vunpack.c.l.b16 %v3416
      %v3455 = vunpack.c.h.b16 %v3416
      %v3456 = vunpack.c.l.b16 %v3417
      %v3457 = vunpack.c.h.b16 %v3417
      %v3458 = vunpack.c.l.b16 %v3418
      %v3459 = vunpack.c.h.b16 %v3418
      %v3460 = vunpack.c.l.b16 %v3419
      %v3461 = vunpack.c.h.b16 %v3419
      %v3462 = vunpack.c.l.b16 %v3420
      %v3463 = vunpack.c.h.b16 %v3420
      %v3464 = vunpack.c.l.b16 %v3421
      %v3465 = vunpack.c.h.b16 %v3421
      %v3466 = vunpack.c.l.b16 %v3422
      %v3467 = vunpack.c.h.b16 %v3422
      %v3468 = vunpack.c.l.b16 %v3423
      %v3469 = vunpack.c.h.b16 %v3423
      %v3470 = vunpack.c.l.b16 %v3424
      %v3471 = vunpack.c.h.b16 %v3424
      %v3472 = vunpack.c.l.b16 %v3425
      %v3473 = vunpack.c.h.b16 %v3425
      %v3474 = vpack.c.b16 %v3442, %v3442
      %v3475 = vpack.c.b16 %v3443, %v3443
      %v3476 = vpack.c.b16 %v3444, %v3444
      %v3477 = vpack.c.b16 %v3445, %v3445
      %v3478 = vpack.c.b16 %v3446, %v3446
      %v3479 = vpack.c.b16 %v3447, %v3447
      %v3480 = vpack.c.b16 %v3448, %v3448
      %v3481 = vpack.c.b16 %v3449, %v3449
      %v3482 = vpack.c.b16 %v3450, %v3450
      %v3483 = vpack.c.b16 %v3451, %v3451
      %v3484 = vpack.c.b16 %v3452, %v3452
      %v3485 = vpack.c.b16 %v3453, %v3453
      %v3486 = vpack.c.b16 %v3454, %v3454
      %v3487 = vpack.c.b16 %v3455, %v3455
      %v3488 = vpack.c.b16 %v3456, %v3456
      %v3489 = vpack.c.b16 %v3457, %v3457
      %v3490 = vpack.c.b16 %v3458, %v3458
      %v3491 = vpack.c.b16 %v3459, %v3459
      %v3492 = vpack.c.b16 %v3460, %v3460
      %v3493 = vpack.c.b16 %v3461, %v3461
      %v3494 = vpack.c.b16 %v3462, %v3462
      %v3495 = vpack.c.b16 %v3463, %v3463
      %v3496 = vpack.c.b16 %v3464, %v3464
      %v3497 = vpack.c.b16 %v3465, %v3465
      %v3498 = vpack.c.b16 %v3466, %v3466
      %v3499 = vpack.c.b16 %v3467, %v3467
      %v3500 = vpack.c.b16 %v3468, %v3468
      %v3501 = vpack.c.b16 %v3469, %v3469
      %v3502 = vpack.c.b16 %v3470, %v3470
      %v3503 = vpack.c.b16 %v3471, %v3471
      %v3504 = vpack.c.b16 %v3472, %v3472
      %v3505 = vpack.c.b16 %v3473, %v3473
      %3538 = vst [vmem:[%s244] sm:$0xf] %v3474
      %3539 = vst [vmem:[%s244 + $0x4] sm:$0xf] %v3475
      %3540 = vst [vmem:[%s244 + $0x8] sm:$0xf] %v3476
      %3541 = vst [vmem:[%s244 + $0xc] sm:$0xf] %v3477
      %3542 = vst [vmem:[%s244 + $0x10] sm:$0xf] %v3478
      %3543 = vst [vmem:[%s244 + $0x14] sm:$0xf] %v3479
      %3544 = vst [vmem:[%s244 + $0x18] sm:$0xf] %v3480
      %3545 = vst [vmem:[%s244 + $0x1c] sm:$0xf] %v3481
      %3546 = vst [vmem:[%s244 + $0x20] sm:$0xf] %v3482
      %3547 = vst [vmem:[%s244 + $0x24] sm:$0xf] %v3483
      %3548 = vst [vmem:[%s244 + $0x28] sm:$0xf] %v3484
      %3549 = vst [vmem:[%s244 + $0x2c] sm:$0xf] %v3485
      %3550 = vst [vmem:[%s244 + $0x30] sm:$0xf] %v3486
      %3551 = vst [vmem:[%s244 + $0x34] sm:$0xf] %v3487
      %3552 = vst [vmem:[%s244 + $0x38] sm:$0xf] %v3488
      %3553 = vst [vmem:[%s244 + $0x3c] sm:$0xf] %v3489
      %3554 = vst [vmem:[%s244 + $0x40] sm:$0xf] %v3490
      %3555 = vst [vmem:[%s244 + $0x44] sm:$0xf] %v3491
      %3556 = vst [vmem:[%s244 + $0x48] sm:$0xf] %v3492
      %3557 = vst [vmem:[%s244 + $0x4c] sm:$0xf] %v3493
      %3558 = vst [vmem:[%s244 + $0x50] sm:$0xf] %v3494
      %3559 = vst [vmem:[%s244 + $0x54] sm:$0xf] %v3495
      %3560 = vst [vmem:[%s244 + $0x58] sm:$0xf] %v3496
      %3561 = vst [vmem:[%s244 + $0x5c] sm:$0xf] %v3497
      %3562 = vst [vmem:[%s244 + $0x60] sm:$0xf] %v3498
      %3563 = vst [vmem:[%s244 + $0x64] sm:$0xf] %v3499
      %3564 = vst [vmem:[%s244 + $0x68] sm:$0xf] %v3500
      %3565 = vst [vmem:[%s244 + $0x6c] sm:$0xf] %v3501
      %3566 = vst [vmem:[%s244 + $0x70] sm:$0xf] %v3502
      %3567 = vst [vmem:[%s244 + $0x74] sm:$0xf] %v3503
      %3568 = vst [vmem:[%s244 + $0x78] sm:$0xf] %v3504
      %3569 = vst [vmem:[%s244 + $0x7c] sm:$0xf] %v3505
      %v3570 = vadd.f32 %v3378, %v3379
      %v3571 = vadd.f32 %v3570, %v3380
      %v3572 = vadd.f32 %v3571, %v3381
      %v3573 = vadd.f32 %v3572, %v3382
      %v3574 = vadd.f32 %v3573, %v3383
      %v3575 = vadd.f32 %v3574, %v3384
      %v3576 = vadd.f32 %v3575, %v3385
      %v3577 = vadd.f32 %v3576, %v3386
      %v3578 = vadd.f32 %v3577, %v3387
      %v3579 = vadd.f32 %v3578, %v3388
      %v3580 = vadd.f32 %v3579, %v3389
      %v3581 = vadd.f32 %v3580, %v3390
      %v3582 = vadd.f32 %v3581, %v3391
      %v3583 = vadd.f32 %v3582, %v3392
      %v3584 = vadd.f32 %v3583, %v3393
      %v3585 = vadd.f32 %v3584, %v3394
      %v3586 = vadd.f32 %v3585, %v3395
      %v3587 = vadd.f32 %v3586, %v3396
      %v3588 = vadd.f32 %v3587, %v3397
      %v3589 = vadd.f32 %v3588, %v3398
      %v3590 = vadd.f32 %v3589, %v3399
      %v3591 = vadd.f32 %v3590, %v3400
      %v3592 = vadd.f32 %v3591, %v3401
      %v3593 = vadd.f32 %v3592, %v3402
      %v3594 = vadd.f32 %v3593, %v3403
      %v3595 = vadd.f32 %v3594, %v3404
      %v3596 = vadd.f32 %v3595, %v3405
      %v3597 = vadd.f32 %v3596, %v3406
      %v3598 = vadd.f32 %v3597, %v3407
      %v3599 = vadd.f32 %v3598, %v3408
      %v3600 = vadd.f32 %v3599, %v3409
      %v3601 = vrot.slane %v3600, 4
      %v3602 = vadd.f32 %v3600, %v3601
      %v3603 = vrot.slane %v3602, 2
      %v3604 = vadd.f32 %v3602, %v3603
      %v3605 = vrot.slane %v3604, 1
      %v3606 = vadd.f32 %v3604, %v3605
      %v3607 = vmul.f32 %v3378, %v3378
      %v3608 = vmul.f32 %v3379, %v3379
      %v3609 = vmul.f32 %v3380, %v3380
      %v3610 = vmul.f32 %v3381, %v3381
      %v3611 = vmul.f32 %v3382, %v3382
      %v3612 = vmul.f32 %v3383, %v3383
      %v3613 = vmul.f32 %v3384, %v3384
      %v3614 = vmul.f32 %v3385, %v3385
      %v3615 = vmul.f32 %v3386, %v3386
      %v3616 = vmul.f32 %v3387, %v3387
      %v3617 = vmul.f32 %v3388, %v3388
      %v3618 = vmul.f32 %v3389, %v3389
      %v3619 = vmul.f32 %v3390, %v3390
      %v3620 = vmul.f32 %v3391, %v3391
      %v3621 = vmul.f32 %v3392, %v3392
      %v3622 = vmul.f32 %v3393, %v3393
      %v3623 = vmul.f32 %v3394, %v3394
      %v3624 = vmul.f32 %v3395, %v3395
      %v3625 = vmul.f32 %v3396, %v3396
      %v3626 = vmul.f32 %v3397, %v3397
      %v3627 = vmul.f32 %v3398, %v3398
      %v3628 = vmul.f32 %v3399, %v3399
      %v3629 = vmul.f32 %v3400, %v3400
      %v3630 = vmul.f32 %v3401, %v3401
      %v3631 = vmul.f32 %v3402, %v3402
      %v3632 = vmul.f32 %v3403, %v3403
      %v3633 = vmul.f32 %v3404, %v3404
      %v3634 = vmul.f32 %v3405, %v3405
      %v3635 = vmul.f32 %v3406, %v3406
      %v3636 = vmul.f32 %v3407, %v3407
      %v3637 = vmul.f32 %v3408, %v3408
      %v3638 = vmul.f32 %v3409, %v3409
      %v3639 = vadd.f32 %v3607, %v3608
      %v3640 = vadd.f32 %v3639, %v3609
      %v3641 = vadd.f32 %v3640, %v3610
      %v3642 = vadd.f32 %v3641, %v3611
      %v3643 = vadd.f32 %v3642, %v3612
      %v3644 = vadd.f32 %v3643, %v3613
      %v3645 = vadd.f32 %v3644, %v3614
      %v3646 = vadd.f32 %v3645, %v3615
      %v3647 = vadd.f32 %v3646, %v3616
      %v3648 = vadd.f32 %v3647, %v3617
      %v3649 = vadd.f32 %v3648, %v3618
      %v3650 = vadd.f32 %v3649, %v3619
      %v3651 = vadd.f32 %v3650, %v3620
      %v3652 = vadd.f32 %v3651, %v3621
      %v3653 = vadd.f32 %v3652, %v3622
      %v3654 = vadd.f32 %v3653, %v3623
      %v3655 = vadd.f32 %v3654, %v3624
      %v3656 = vadd.f32 %v3655, %v3625
      %v3657 = vadd.f32 %v3656, %v3626
      %v3658 = vadd.f32 %v3657, %v3627
      %v3659 = vadd.f32 %v3658, %v3628
      %v3660 = vadd.f32 %v3659, %v3629
      %v3661 = vadd.f32 %v3660, %v3630
      %v3662 = vadd.f32 %v3661, %v3631
      %v3663 = vadd.f32 %v3662, %v3632
      %v3664 = vadd.f32 %v3663, %v3633
      %v3665 = vadd.f32 %v3664, %v3634
      %v3666 = vadd.f32 %v3665, %v3635
      %v3667 = vadd.f32 %v3666, %v3636
      %v3668 = vadd.f32 %v3667, %v3637
      %v3669 = vadd.f32 %v3668, %v3638
      %v3670 = vrot.slane %v3669, 4
      %v3671 = vadd.f32 %v3669, %v3670
      %v3672 = vrot.slane %v3671, 2
      %v3673 = vadd.f32 %v3671, %v3672
      %v3674 = vrot.slane %v3673, 1
      %v3675 = vadd.f32 %v3673, %v3674
      %3676 = vst [vmem:[%s252] sm:$0xff] %v3606
      %3677 = vst [vmem:[%s259] sm:$0xff] %v3675
      %s3678 = smul.u32 16, %s21
      %p3679 = scmp.lt.s32.totalorder %s20, 1
      %s3680 = scalar_select %p3679, %s20, 1
      %p3681 = scmp.lt.s32.totalorder %s3678, 15
      %s3682 = scalar_select %p3681, %s3678, 15
      %s3683 = smul.addr %s3682, 2
      %s3684 = smul.addr %s3680, 32
      %s3685 = sadd.s32 %s3683, %s3684
      %s3686 = smul.addr %s3685, 4
      %s3687 = scalar_lea.vmem %s2, %s3686
      %p3688 = scmp.lt.s32.totalorder %s20, 1
      %s3689 = scalar_select %p3688, %s20, 1
      %p3690 = scmp.lt.s32.totalorder %s21, 0
      %s3691 = scalar_select %p3690, %s21, 0
      %s3692 = sadd.s32 %s3691, %s3689
      %s3693 = smul.addr %s3692, 8
      %s3694 = scalar_lea.vmem %s3, %s3693
      %p3695 = scmp.lt.s32.totalorder %s20, 1
      %s3696 = scalar_select %p3695, %s20, 1
      %p3697 = scmp.lt.s32.totalorder %s21, 0
      %s3698 = scalar_select %p3697, %s21, 0
      %s3699 = sadd.s32 %s3698, %s3696
      %s3700 = smul.addr %s3699, 8
      %s3701 = scalar_lea.vmem %s4, %s3700
      // Predicated region
      $region29: #{resnet_block_forward.4} parent=27 // pred_check
        %p3702 = pneg %p95
      $region30: #{resnet_block_forward.4} parent=27 // pred_check_branch
        %3704 = sbr.rel (%p3702) target = $region32
      $region31: #{resnet_block_forward.4} parent=27 // pred_region
        %s3705 = smul.u32 16, %s21
      $region32: #{resnet_block_forward.4} parent=27 // pred_fallthru
        _
      // Predicated region
      $region33: #{resnet_block_forward.4} parent=27 // pred_check
        %p3706 = pneg %p123
      $region34: #{resnet_block_forward.4} parent=27 // pred_check_branch
        %3708 = sbr.rel (%p3706) target = $region36
      $region35: #{resnet_block_forward.4} parent=27 // pred_region
        _
      $region36: #{resnet_block_forward.4} parent=27 // pred_fallthru
        _
      // Predicated region
      $region37: #{resnet_block_forward.4} parent=27 // pred_check
        %p3709 = pneg %p151
      $region38: #{resnet_block_forward.4} parent=27 // pred_check_branch
        %3711 = sbr.rel (%p3709) target = $region40
      $region39: #{resnet_block_forward.4} parent=27 // pred_region
        _
      $region40: #{resnet_block_forward.4} parent=27 // pred_fallthru
        _
    $region28: #{resnet_block_forward.4} parent=5 // pred_fallthru
      _
    %p3712 = scmp.le.s32.totalorder 2, %s11
    // Predicated region
    $region41: #{resnet_block_forward.4} parent=5 // pred_check
      %p3713 = pneg %p3712
    $region42: #{resnet_block_forward.4} parent=5 // pred_check_branch
      %3715 = sbr.rel (%p3713) target = $region44
    $region43: #{resnet_block_forward.4} parent=5 // pred_region
      %s3716 = ssub.s32 %s11, 2
      // Predicated region
      $region45: #{resnet_block_forward.4} parent=43 // pred_check
        %p3717 = pneg %p101
      $region46: #{resnet_block_forward.4} parent=43 // pred_check_branch
        %3719 = sbr.rel (%p3717) target = $region48
      $region47: #{resnet_block_forward.4} parent=43 // pred_region
        %s3720 = smul.u32 16, %s23
        %p3721 = scmp.lt.s32.totalorder %s22, 1
        %s3722 = scalar_select %p3721, %s22, 1
        %p3723 = scmp.lt.s32.totalorder %s3720, 15
        %s3724 = scalar_select %p3723, %s3720, 15
        %s3725 = smul.addr %s3724, 2
        %s3726 = smul.addr %s3722, 32
        %s3727 = sadd.s32 %s3725, %s3726
        %s3728 = smul.addr %s3727, 4
        %s3729 = scalar_lea.vmem %s2, %s3728
      $region48: #{resnet_block_forward.4} parent=43 // pred_fallthru
        _
      // Predicated region
      $region49: #{resnet_block_forward.4} parent=43 // pred_check
        %p3730 = pneg %p129
      $region50: #{resnet_block_forward.4} parent=43 // pred_check_branch
        %3732 = sbr.rel (%p3730) target = $region52
      $region51: #{resnet_block_forward.4} parent=43 // pred_region
        %p3733 = scmp.lt.s32.totalorder %s22, 1
        %s3734 = scalar_select %p3733, %s22, 1
        %p3735 = scmp.lt.s32.totalorder %s23, 0
        %s3736 = scalar_select %p3735, %s23, 0
        %s3737 = sadd.s32 %s3736, %s3734
        %s3738 = smul.addr %s3737, 8
        %s3739 = scalar_lea.vmem %s3, %s3738
      $region52: #{resnet_block_forward.4} parent=43 // pred_fallthru
        _
      // Predicated region
      $region53: #{resnet_block_forward.4} parent=43 // pred_check
        %p3740 = pneg %p157
      $region54: #{resnet_block_forward.4} parent=43 // pred_check_branch
        %3742 = sbr.rel (%p3740) target = $region56
      $region55: #{resnet_block_forward.4} parent=43 // pred_region
        %p3743 = scmp.lt.s32.totalorder %s22, 1
        %s3744 = scalar_select %p3743, %s22, 1
        %p3745 = scmp.lt.s32.totalorder %s23, 0
        %s3746 = scalar_select %p3745, %s23, 0
        %s3747 = sadd.s32 %s3746, %s3744
        %s3748 = smul.addr %s3747, 8
        %s3749 = scalar_lea.vmem %s4, %s3748
      $region56: #{resnet_block_forward.4} parent=43 // pred_fallthru
        _
    $region44: #{resnet_block_forward.4} parent=5 // pred_fallthru
      _
  $region6: #{resnet_block_forward.4} parent=0 // loop_footer
    %s15 = sadd.s32 1, %s11
  $region7: #{resnet_block_forward.4} parent=0 // loop_footer_branch
    %10 = sbr.rel target = $region3
  $region8: #{resnet_block_forward.4} parent=0 // loop_exit
    _

</llo_original>
